<compile_context>
chip_gen: v7x
topology: tpu7x:2x2x1
jax: 0.10.0
libtpu: 0.0.40
codegen_flags: <defaults>
</compile_context>

<pallas_src>
import functools

import numpy as np
import jax
import jax.numpy as jnp
from jax import lax
from jax.experimental import pallas as pl
from jax.experimental.pallas import tpu as pltpu

BN_EPS = 1e-5
LANE = 128   # padded channel / output width (lane-dense vregs, unmasked stores)


def _im2col_conv3x3(x, cin, w_mat, shift):
    """3x3 valid conv + folded-BN shift + ReLU as a single MXU matmul.

    x:      [N, Hi, Wi, Cpad] f32 (only the first `cin` channels are real)
    w_mat:  [9*cin, LANE] f32  (BN scale folded in, Cout zero-padded to LANE)
    shift:  [1, LANE]     f32  (folded BN shift, zero in padded lanes)
    returns [N, Ho, Wo, LANE] f32
    """
    N, Hi, Wi, _ = x.shape
    Ho, Wo = Hi - 2, Wi - 2
    # im2col: 9 shifted taps concatenated along the channel (lane) dim.
    # Lane index = (dy*3 + dx)*cin + c, matching the weight matrix layout.
    taps = [x[:, dy:dy + Ho, dx:dx + Wo, :cin]
            for dy in range(3) for dx in range(3)]
    patches = jnp.concatenate(taps, axis=-1)                 # [N,Ho,Wo,9*cin]
    pm = patches.reshape(N * Ho * Wo, 9 * cin)               # M = N*Ho*Wo
    y = jnp.dot(pm, w_mat, preferred_element_type=jnp.float32)   # [M, LANE]
    y = jnp.maximum(y + shift, 0.0)                          # lane-dense epilogue
    return y.reshape(N, Ho, Wo, LANE)


def dqn_kernel(p1_ref, w1_ref, b1_ref, w2_ref, b2_ref, w3_ref, b3_ref,
               wh_ref, bh_ref, out_ref, *, N, Ho1, Wo1):
    # conv1: patches prebuilt in the wrapper (Cin == 1 -> layout plumbing only),
    # so layer 1 is a single [N*Ho1*Wo1, 9] @ [9, 128] matmul + shift + ReLU.
    y1 = jnp.dot(p1_ref[...], w1_ref[...], preferred_element_type=jnp.float32)
    y1 = jnp.maximum(y1 + b1_ref[...], 0.0)
    x = y1.reshape(N, Ho1, Wo1, LANE)                        # [N,10,10,128]

    x = _im2col_conv3x3(x, 12, w2_ref[...], b2_ref[...])     # [N, 8, 8,128]
    x = _im2col_conv3x3(x, 24, w3_ref[...], b3_ref[...])     # [N, 6, 6,128]

    # Linear head: single (N, Ho*Wo*LANE) @ (Ho*Wo*LANE, LANE) contraction.
    Nn, Ho, Wo, C = x.shape
    flat = x.reshape(Nn, Ho * Wo * C)                        # [N, 4608]
    out_ref[...] = (jnp.dot(flat, wh_ref[...],
                            preferred_element_type=jnp.float32) + bh_ref[...])


def dqn_forward(x_nchw, kp):
    """x_nchw: [N,1,H,W] float32 (PyTorch layout). Returns [N, outputs]."""
    N, _, H, W = x_nchw.shape
    Ho1, Wo1 = H - 2, W - 2
    # Cin == 1: conv1 im2col in the wrapper is a pure gather/reshape
    # (lane index = tap id = dy*3 + dx), no arithmetic hoisted.
    x = x_nchw.reshape(N, H, W).astype(jnp.float32)
    taps = [x[:, dy:dy + Ho1, dx:dx + Wo1]
            for dy in range(3) for dx in range(3)]
    p1 = jnp.stack(taps, axis=-1).reshape(N * Ho1 * Wo1, 9)  # [N*100, 9]

    args = (p1, kp["w1"], kp["b1"], kp["w2"], kp["b2"],
            kp["w3"], kp["b3"], kp["wh"], kp["bh"])
    vmem = pl.BlockSpec(memory_space=pltpu.MemorySpace.VMEM)
    kern = functools.partial(dqn_kernel, N=N, Ho1=Ho1, Wo1=Wo1)
    # TODO(synk): for large batches, tile N with a grid + BlockSpecs and
    #             dimension_semantics=("parallel",) so the second TensorCore
    #             and HBM->VMEM pipelining are used; N=2 fits one invocation.
    out_pad = pl.pallas_call(
        kern,
        out_shape=jax.ShapeDtypeStruct((N, LANE), jnp.float32),
        in_specs=[vmem] * len(args),
        out_specs=vmem,
    )(*args)
    return out_pad[:, :kp["outputs"]]


def _conv2d_size_out(size, kernel_size=3, stride=1):
    return (size - (kernel_size - 1) - 1) // stride + 1


def make_params(key, h, w, outputs):
    """Deterministic synthetic parameters (PyTorch layout) + folded kernel params."""
    hc = _conv2d_size_out(_conv2d_size_out(_conv2d_size_out(h)))
    wc = _conv2d_size_out(_conv2d_size_out(_conv2d_size_out(w)))
    lin_in = hc * wc * 24

    ks = jax.random.split(key, 20)

    def nrm(k, shape, s=0.1):
        return jax.random.normal(k, shape, jnp.float32) * s

    def pos(k, shape):
        return jax.random.uniform(k, shape, jnp.float32, 0.5, 1.5)

    # PyTorch-layout params (conv: OIHW, head: [outputs, lin_in])
    tp = dict(
        w1=nrm(ks[0], (12, 1, 3, 3)),
        g1=pos(ks[1], (12,)), be1=nrm(ks[2], (12,)),
        m1=nrm(ks[3], (12,)), v1=pos(ks[4], (12,)),
        w2=nrm(ks[5], (24, 12, 3, 3)),
        g2=pos(ks[6], (24,)), be2=nrm(ks[7], (24,)),
        m2=nrm(ks[8], (24,)), v2=pos(ks[9], (24,)),
        w3=nrm(ks[10], (24, 24, 3, 3)),
        g3=pos(ks[11], (24,)), be3=nrm(ks[12], (24,)),
        m3=nrm(ks[13], (24,)), v3=pos(ks[14], (24,)),
        hw=nrm(ks[15], (outputs, lin_in)),
        hb=nrm(ks[16], (outputs,)),
    )

    def pad_last(a, target=LANE):
        return jnp.pad(a, [(0, 0)] * (a.ndim - 1) + [(0, target - a.shape[-1])])

    def conv_mat(w_oihw, g, b, m, v):
        # Fold BN (eval mode) into the conv weight + per-channel shift,
        # build the im2col weight matrix [9*Cin, LANE] (Cout zero-padded).
        scale = g / jnp.sqrt(v + BN_EPS)                      # [Cout]
        shift = b - m * scale                                 # [Cout]
        w_hwio = jnp.transpose(w_oihw, (2, 3, 1, 0))          # [3,3,Cin,Cout]
        w_fold = w_hwio * scale                               # scale folded
        cin = w_hwio.shape[2]
        w_mat = pad_last(w_fold.reshape(9 * cin, -1))         # [9*Cin, LANE]
        return w_mat, pad_last(shift.reshape(1, -1))          # [1, LANE]

    w1, b1 = conv_mat(tp["w1"], tp["g1"], tp["be1"], tp["m1"], tp["v1"])
    w2, b2 = conv_mat(tp["w2"], tp["g2"], tp["be2"], tp["m2"], tp["v2"])
    w3, b3 = conv_mat(tp["w3"], tp["g3"], tp["be3"], tp["m3"], tp["v3"])

    # Head weight [outputs, 24*hc*wc] (PyTorch NCHW flatten: idx = c*hc*wc + y*wc + x)
    #   -> [hc, wc, Cpad(128), outputs_pad(128)] -> [hc*wc*LANE, LANE]
    # so the kernel's lane-dense NHWC flatten ((y*wc + x)*LANE + c) matches exactly.
    wh4 = jnp.transpose(tp["hw"].reshape(outputs, 24, hc, wc), (2, 3, 1, 0))
    wh4 = jnp.pad(wh4, ((0, 0), (0, 0), (0, LANE - 24), (0, 0)))
    wh = pad_last(wh4.reshape(hc * wc * LANE, outputs))
    bh = pad_last(tp["hb"].reshape(1, outputs))

    kp = dict(w1=w1, b1=b1, w2=w2, b2=b2, w3=w3, b3=b3, wh=wh, bh=bh,
              outputs=outputs)
    return tp, kp


def reference_nchw(x_nchw, tp):
    """Pure-JAX NCHW reference mirroring the PyTorch forward (eval-mode BN)."""
    def conv(x, w_oihw):
        return lax.conv_general_dilated(
            x, w_oihw, (1, 1), "VALID",
            dimension_numbers=("NCHW", "OIHW", "NCHW"))

    def bn(x, g, b, m, v):
        s = g / jnp.sqrt(v + BN_EPS)
        return x * s[None, :, None, None] + (b - m * s)[None, :, None, None]

    x = jax.nn.relu(bn(conv(x_nchw, tp["w1"]), tp["g1"], tp["be1"], tp["m1"], tp["v1"]))
    x = jax.nn.relu(bn(conv(x, tp["w2"]), tp["g2"], tp["be2"], tp["m2"], tp["v2"]))
    x = jax.nn.relu(bn(conv(x, tp["w3"]), tp["g3"], tp["be3"], tp["m3"], tp["v3"]))
    flat = x.reshape(x.shape[0], -1)
    return flat @ tp["hw"].T + tp["hb"]


if __name__ == "__main__":
    N, H, W, OUTPUTS = 2, 12, 12, 4        # DQN(h=12, w=12, outputs=4)
    key = jax.random.PRNGKey(0)
    kx, kparam = jax.random.split(key)
    x = jax.random.normal(kx, (N, 1, H, W), jnp.float32)   # PyTorch NCHW input

    tp, kp = make_params(kparam, H, W, OUTPUTS)

    out = jax.block_until_ready(dqn_forward(x, kp))
    ref = reference_nchw(x, tp)

    assert out.shape == (N, OUTPUTS), out.shape
    assert np.allclose(np.asarray(out), np.asarray(ref), atol=1e-4, rtol=1e-4), (
        "max abs err", float(np.max(np.abs(np.asarray(out) - np.asarray(ref)))))
    print("KERNEL_OK")
</pallas_src>

<mosaic_0001>
module attributes {stable_mosaic.version = 11 : i64} {
  func.func @dqn_kernel(%arg0: memref<200x9xf32, #tpu.memory_space<vmem>>, %arg1: memref<9x128xf32, #tpu.memory_space<vmem>>, %arg2: memref<1x128xf32, #tpu.memory_space<vmem>>, %arg3: memref<108x128xf32, #tpu.memory_space<vmem>>, %arg4: memref<1x128xf32, #tpu.memory_space<vmem>>, %arg5: memref<216x128xf32, #tpu.memory_space<vmem>>, %arg6: memref<1x128xf32, #tpu.memory_space<vmem>>, %arg7: memref<4608x128xf32, #tpu.memory_space<vmem>>, %arg8: memref<1x128xf32, #tpu.memory_space<vmem>>, %arg9: memref<2x128xf32, #tpu.memory_space<vmem>>) attributes {dimension_semantics = [], scalar_prefetch = 0 : i64, scratch_operands = 0 : i64, tpu.core_type = #tpu.core_type<tc>} {
    %c0 = arith.constant 0 : index
    %c0_0 = arith.constant 0 : index
    %0 = vector.load %arg0[%c0, %c0_0] : memref<200x9xf32, #tpu.memory_space<vmem>>, vector<200x9xf32>
    %c0_1 = arith.constant 0 : index
    %c0_2 = arith.constant 0 : index
    %1 = vector.load %arg1[%c0_1, %c0_2] : memref<9x128xf32, #tpu.memory_space<vmem>>, vector<9x128xf32>
    %cst = arith.constant dense<0.000000e+00> : vector<200x128xf32>
    %2 = tpu.matmul %0, %1, %cst {dimension_numbers = #tpu.dot_dimension_numbers<[1], [0], [0], [1], [0, 0, 1, 1], [], []>} : vector<200x9xf32>, vector<9x128xf32>, vector<200x128xf32> -> vector<200x128xf32>
    %c0_3 = arith.constant 0 : index
    %c0_4 = arith.constant 0 : index
    %3 = vector.load %arg2[%c0_3, %c0_4] : memref<1x128xf32, #tpu.memory_space<vmem>>, vector<1x128xf32>
    %4 = vector.broadcast %3 : vector<1x128xf32> to vector<200x128xf32>
    %5 = arith.addf %2, %4 : vector<200x128xf32>
    %cst_5 = arith.constant 0.000000e+00 : f32
    %6 = vector.broadcast %cst_5 : f32 to vector<200x128xf32>
    %7 = arith.maximumf %5, %6 : vector<200x128xf32>
    %8 = vector.shape_cast %7 : vector<200x128xf32> to vector<2x10x10x128xf32>
    %c0_6 = arith.constant 0 : index
    %c0_7 = arith.constant 0 : index
    %9 = vector.load %arg3[%c0_6, %c0_7] : memref<108x128xf32, #tpu.memory_space<vmem>>, vector<108x128xf32>
    %c0_8 = arith.constant 0 : index
    %c0_9 = arith.constant 0 : index
    %10 = vector.load %arg4[%c0_8, %c0_9] : memref<1x128xf32, #tpu.memory_space<vmem>>, vector<1x128xf32>
    %11 = vector.extract_strided_slice %8 {offsets = [0, 0, 0, 0], sizes = [2, 8, 8, 12], strides = [1, 1, 1, 1]} : vector<2x10x10x128xf32> to vector<2x8x8x12xf32>
    %12 = vector.extract_strided_slice %8 {offsets = [0, 0, 1, 0], sizes = [2, 8, 8, 12], strides = [1, 1, 1, 1]} : vector<2x10x10x128xf32> to vector<2x8x8x12xf32>
    %13 = vector.extract_strided_slice %8 {offsets = [0, 0, 2, 0], sizes = [2, 8, 8, 12], strides = [1, 1, 1, 1]} : vector<2x10x10x128xf32> to vector<2x8x8x12xf32>
    %14 = vector.extract_strided_slice %8 {offsets = [0, 1, 0, 0], sizes = [2, 8, 8, 12], strides = [1, 1, 1, 1]} : vector<2x10x10x128xf32> to vector<2x8x8x12xf32>
    %15 = vector.extract_strided_slice %8 {offsets = [0, 1, 1, 0], sizes = [2, 8, 8, 12], strides = [1, 1, 1, 1]} : vector<2x10x10x128xf32> to vector<2x8x8x12xf32>
    %16 = vector.extract_strided_slice %8 {offsets = [0, 1, 2, 0], sizes = [2, 8, 8, 12], strides = [1, 1, 1, 1]} : vector<2x10x10x128xf32> to vector<2x8x8x12xf32>
    %17 = vector.extract_strided_slice %8 {offsets = [0, 2, 0, 0], sizes = [2, 8, 8, 12], strides = [1, 1, 1, 1]} : vector<2x10x10x128xf32> to vector<2x8x8x12xf32>
    %18 = vector.extract_strided_slice %8 {offsets = [0, 2, 1, 0], sizes = [2, 8, 8, 12], strides = [1, 1, 1, 1]} : vector<2x10x10x128xf32> to vector<2x8x8x12xf32>
    %19 = vector.extract_strided_slice %8 {offsets = [0, 2, 2, 0], sizes = [2, 8, 8, 12], strides = [1, 1, 1, 1]} : vector<2x10x10x128xf32> to vector<2x8x8x12xf32>
    %20 = tpu.concatenate %11, %12, %13, %14, %15, %16, %17, %18, %19 in 3 : vector<2x8x8x12xf32>, vector<2x8x8x12xf32>, vector<2x8x8x12xf32>, vector<2x8x8x12xf32>, vector<2x8x8x12xf32>, vector<2x8x8x12xf32>, vector<2x8x8x12xf32>, vector<2x8x8x12xf32>, vector<2x8x8x12xf32> -> vector<2x8x8x108xf32>
    %21 = vector.shape_cast %20 : vector<2x8x8x108xf32> to vector<128x108xf32>
    %cst_10 = arith.constant dense<0.000000e+00> : vector<128x128xf32>
    %22 = tpu.matmul %21, %9, %cst_10 {dimension_numbers = #tpu.dot_dimension_numbers<[1], [0], [0], [1], [0, 0, 1, 1], [], []>} : vector<128x108xf32>, vector<108x128xf32>, vector<128x128xf32> -> vector<128x128xf32>
    %23 = vector.broadcast %10 : vector<1x128xf32> to vector<128x128xf32>
    %24 = arith.addf %22, %23 : vector<128x128xf32>
    %cst_11 = arith.constant 0.000000e+00 : f32
    %25 = vector.broadcast %cst_11 : f32 to vector<128x128xf32>
    %26 = arith.maximumf %24, %25 : vector<128x128xf32>
    %27 = vector.shape_cast %26 : vector<128x128xf32> to vector<2x8x8x128xf32>
    %c0_12 = arith.constant 0 : index
    %c0_13 = arith.constant 0 : index
    %28 = vector.load %arg5[%c0_12, %c0_13] : memref<216x128xf32, #tpu.memory_space<vmem>>, vector<216x128xf32>
    %c0_14 = arith.constant 0 : index
    %c0_15 = arith.constant 0 : index
    %29 = vector.load %arg6[%c0_14, %c0_15] : memref<1x128xf32, #tpu.memory_space<vmem>>, vector<1x128xf32>
    %30 = vector.extract_strided_slice %27 {offsets = [0, 0, 0, 0], sizes = [2, 6, 6, 24], strides = [1, 1, 1, 1]} : vector<2x8x8x128xf32> to vector<2x6x6x24xf32>
    %31 = vector.extract_strided_slice %27 {offsets = [0, 0, 1, 0], sizes = [2, 6, 6, 24], strides = [1, 1, 1, 1]} : vector<2x8x8x128xf32> to vector<2x6x6x24xf32>
    %32 = vector.extract_strided_slice %27 {offsets = [0, 0, 2, 0], sizes = [2, 6, 6, 24], strides = [1, 1, 1, 1]} : vector<2x8x8x128xf32> to vector<2x6x6x24xf32>
    %33 = vector.extract_strided_slice %27 {offsets = [0, 1, 0, 0], sizes = [2, 6, 6, 24], strides = [1, 1, 1, 1]} : vector<2x8x8x128xf32> to vector<2x6x6x24xf32>
    %34 = vector.extract_strided_slice %27 {offsets = [0, 1, 1, 0], sizes = [2, 6, 6, 24], strides = [1, 1, 1, 1]} : vector<2x8x8x128xf32> to vector<2x6x6x24xf32>
    %35 = vector.extract_strided_slice %27 {offsets = [0, 1, 2, 0], sizes = [2, 6, 6, 24], strides = [1, 1, 1, 1]} : vector<2x8x8x128xf32> to vector<2x6x6x24xf32>
    %36 = vector.extract_strided_slice %27 {offsets = [0, 2, 0, 0], sizes = [2, 6, 6, 24], strides = [1, 1, 1, 1]} : vector<2x8x8x128xf32> to vector<2x6x6x24xf32>
    %37 = vector.extract_strided_slice %27 {offsets = [0, 2, 1, 0], sizes = [2, 6, 6, 24], strides = [1, 1, 1, 1]} : vector<2x8x8x128xf32> to vector<2x6x6x24xf32>
    %38 = vector.extract_strided_slice %27 {offsets = [0, 2, 2, 0], sizes = [2, 6, 6, 24], strides = [1, 1, 1, 1]} : vector<2x8x8x128xf32> to vector<2x6x6x24xf32>
    %39 = tpu.concatenate %30, %31, %32, %33, %34, %35, %36, %37, %38 in 3 : vector<2x6x6x24xf32>, vector<2x6x6x24xf32>, vector<2x6x6x24xf32>, vector<2x6x6x24xf32>, vector<2x6x6x24xf32>, vector<2x6x6x24xf32>, vector<2x6x6x24xf32>, vector<2x6x6x24xf32>, vector<2x6x6x24xf32> -> vector<2x6x6x216xf32>
    %40 = vector.shape_cast %39 : vector<2x6x6x216xf32> to vector<72x216xf32>
    %cst_16 = arith.constant dense<0.000000e+00> : vector<72x128xf32>
    %41 = tpu.matmul %40, %28, %cst_16 {dimension_numbers = #tpu.dot_dimension_numbers<[1], [0], [0], [1], [0, 0, 1, 1], [], []>} : vector<72x216xf32>, vector<216x128xf32>, vector<72x128xf32> -> vector<72x128xf32>
    %42 = vector.broadcast %29 : vector<1x128xf32> to vector<72x128xf32>
    %43 = arith.addf %41, %42 : vector<72x128xf32>
    %cst_17 = arith.constant 0.000000e+00 : f32
    %44 = vector.broadcast %cst_17 : f32 to vector<72x128xf32>
    %45 = arith.maximumf %43, %44 : vector<72x128xf32>
    %46 = vector.shape_cast %45 : vector<72x128xf32> to vector<2x6x6x128xf32>
    %47 = vector.shape_cast %46 : vector<2x6x6x128xf32> to vector<2x4608xf32>
    %c0_18 = arith.constant 0 : index
    %c0_19 = arith.constant 0 : index
    %48 = vector.load %arg7[%c0_18, %c0_19] : memref<4608x128xf32, #tpu.memory_space<vmem>>, vector<4608x128xf32>
    %cst_20 = arith.constant dense<0.000000e+00> : vector<2x128xf32>
    %49 = tpu.matmul %47, %48, %cst_20 {dimension_numbers = #tpu.dot_dimension_numbers<[1], [0], [0], [1], [0, 0, 1, 1], [], []>} : vector<2x4608xf32>, vector<4608x128xf32>, vector<2x128xf32> -> vector<2x128xf32>
    %c0_21 = arith.constant 0 : index
    %c0_22 = arith.constant 0 : index
    %50 = vector.load %arg8[%c0_21, %c0_22] : memref<1x128xf32, #tpu.memory_space<vmem>>, vector<1x128xf32>
    %51 = vector.broadcast %50 : vector<1x128xf32> to vector<2x128xf32>
    %52 = arith.addf %49, %51 : vector<2x128xf32>
    %c0_23 = arith.constant 0 : index
    %c0_24 = arith.constant 0 : index
    %53 = vector.load %arg9[%c0_23, %c0_24] : memref<2x128xf32, #tpu.memory_space<vmem>>, vector<2x128xf32>
    tpu.vector_store %arg9[%c0_23, %c0_24], %52 {strides = array<i32>} : memref<2x128xf32, #tpu.memory_space<vmem>>, vector<2x128xf32>,
    return
  }
}

</mosaic_0001>

<llo_original>
// kernel: tpu_custom_call.1
$region0: #{tpu_custom_call.1}
  #allocation0 [shape = 'u32[]', space=smem, size = 0x4, offset = 0x4, fixed_abs, tag = 'smem constant byte address 0x4 - core index']
  #allocation1 [shape = 'u32[144,128]{1,0:T(1,128)}', space=vmem, size = 0x12000, scoped, tag = 'internal scratch']
  %s0 = inlined_call_operand.vmem [shape: f32[200,9], index: 0, kind: input, shape index: {}]
  %s1 = inlined_call_operand.hbm [shape: f32[9,128], index: 1, kind: input, shape index: {}]
  %s2 = inlined_call_operand.hbm [shape: f32[1,128], index: 2, kind: input, shape index: {}]
  %s3 = inlined_call_operand.hbm [shape: f32[108,128], index: 3, kind: input, shape index: {}]
  %s4 = inlined_call_operand.hbm [shape: f32[1,128], index: 4, kind: input, shape index: {}]
  %s5 = inlined_call_operand.hbm [shape: f32[216,128], index: 5, kind: input, shape index: {}]
  %s6 = inlined_call_operand.hbm [shape: f32[1,128], index: 6, kind: input, shape index: {}]
  %s7 = inlined_call_operand.hbm [shape: f32[4608,128], index: 7, kind: input, shape index: {}]
  %s8 = inlined_call_operand.hbm [shape: f32[1,128], index: 8, kind: input, shape index: {}]
  %s9 = inlined_call_operand.hbm [shape: f32[2,128], index: 9, kind: output, shape index: {}]
  %s10 = sld [smem:[#allocation0]]
  $region78: #{tpu_custom_call.1} parent=0
    _
  %s12 = ssub.s32 1, %s10
  %s13 = scalar_select 0, %s12, %s10
  $region1: #{tpu_custom_call.1} parent=0
    #allocation2 [shape = 'u8[8192]{0}', space=vmem, size = 0x2000, scoped, tag = 'input window, operand 1, single buffered']
    #allocation3 [shape = 's32[1]{0}', space=sflag, size = 0x4, scoped, tag = 'scoped memory for tpu_custom_call.1']
    #allocation4 [shape = 's32[1]{0}', space=sflag, size = 0x4, scoped, tag = 'scoped memory for tpu_custom_call.1']
    #allocation5 [shape = 'u8[512]{0}', space=vmem, size = 0x400, scoped, tag = 'input window, operand 2, single buffered']
    #allocation6 [shape = 's32[1]{0}', space=sflag, size = 0x4, scoped, tag = 'scoped memory for tpu_custom_call.1']
    #allocation7 [shape = 'u8[57344]{0}', space=vmem, size = 0xe000, scoped, tag = 'input window, operand 3, single buffered']
    #allocation8 [shape = 'u8[512]{0}', space=vmem, size = 0x400, scoped, tag = 'input window, operand 4, single buffered']
    #allocation9 [shape = 's32[1]{0}', space=sflag, size = 0x4, scoped, tag = 'scoped memory for tpu_custom_call.1']
    #allocation10 [shape = 'u8[110592]{0}', space=vmem, size = 0x1b000, scoped, tag = 'input window, operand 5, single buffered']
    #allocation11 [shape = 'u8[512]{0}', space=vmem, size = 0x400, scoped, tag = 'input window, operand 6, single buffered']
    #allocation12 [shape = 's32[1]{0}', space=sflag, size = 0x4, scoped, tag = 'scoped memory for tpu_custom_call.1']
    #allocation13 [shape = 'u8[2359296]{0}', space=vmem, size = 0x240000, scoped, tag = 'input window, operand 7, single buffered']
    #allocation14 [shape = 'u8[512]{0}', space=vmem, size = 0x400, scoped, tag = 'input window, operand 8, single buffered']
    #allocation15 [shape = 's32[1]{0}', space=sflag, size = 0x4, scoped, tag = 'scoped memory for tpu_custom_call.1']
    #allocation16 [shape = 'u8[1024]{0}', space=vmem, size = 0x400, scoped, tag = 'output window, operand 0, single buffered']
    %14 = vsyncpa [#allocation3], 0
    %15 = vsyncpa [#allocation6], 0
    %16 = vsyncpa [#allocation9], 0
    %17 = vsyncpa [#allocation12], 0
    %18 = vsyncpa [#allocation15], 0
    %19 = vsyncpa [#allocation4], 0
    // Predicated region
    $region2: #{tpu_custom_call.1} parent=1 // pred_check
      _
    $region3: #{tpu_custom_call.1} parent=1 // pred_check_branch
      %21 = sbr.rel (0) target = $region5
    $region4: #{tpu_custom_call.1} parent=1 // pred_region
      _
    $region5: #{tpu_custom_call.1} parent=1 // pred_fallthru
      _
    // Predicated region
    $region6: #{tpu_custom_call.1} parent=1 // pred_check
      _
    $region7: #{tpu_custom_call.1} parent=1 // pred_check_branch
      %23 = sbr.rel (0) target = $region9
    $region8: #{tpu_custom_call.1} parent=1 // pred_region
      %s25 = ssub.s32 256, 256
      %26 = vsyncadd [#allocation3], %s25
      %s27 = sshll.u32 [#allocation2], 4
      %s28 = int_to_ptr.vmem [resolvable:$true] %s27
      %33 = dma.hbm_to_vmem [thread:$0]  %s1, 256, %s28, [#allocation3], 128, 128, 8
    $region9: #{tpu_custom_call.1} parent=1 // pred_fallthru
      _
    // Predicated region
    $region10: #{tpu_custom_call.1} parent=1 // pred_check
      _
    $region11: #{tpu_custom_call.1} parent=1 // pred_check_branch
      %35 = sbr.rel (0) target = $region13
    $region12: #{tpu_custom_call.1} parent=1 // pred_region
      %s37 = ssub.s32 16, 16
      %38 = vsyncadd [#allocation6], %s37
      %s40 = sshll.u32 [#allocation5], 4
      %s41 = int_to_ptr.vmem [resolvable:$true] %s40
      %43 = dma.hbm_to_vmem [thread:$0]  %s2, 16, %s41, [#allocation6]
    $region13: #{tpu_custom_call.1} parent=1 // pred_fallthru
      _
    // Predicated region
    $region14: #{tpu_custom_call.1} parent=1 // pred_check
      _
    $region15: #{tpu_custom_call.1} parent=1 // pred_check_branch
      %45 = sbr.rel (0) target = $region17
    $region16: #{tpu_custom_call.1} parent=1 // pred_region
      %s47 = ssub.s32 1792, 1792
      %48 = vsyncadd [#allocation6], %s47
      %s49 = sshll.u32 [#allocation7], 4
      %s50 = int_to_ptr.vmem [resolvable:$true] %s49
      %55 = dma.hbm_to_vmem [thread:$0]  %s3, 1792, %s50, [#allocation6], 128, 128, 8
    $region17: #{tpu_custom_call.1} parent=1 // pred_fallthru
      _
    // Predicated region
    $region18: #{tpu_custom_call.1} parent=1 // pred_check
      _
    $region19: #{tpu_custom_call.1} parent=1 // pred_check_branch
      %57 = sbr.rel (0) target = $region21
    $region20: #{tpu_custom_call.1} parent=1 // pred_region
      %s59 = ssub.s32 16, 16
      %60 = vsyncadd [#allocation9], %s59
      %s62 = sshll.u32 [#allocation8], 4
      %s63 = int_to_ptr.vmem [resolvable:$true] %s62
      %65 = dma.hbm_to_vmem [thread:$0]  %s4, 16, %s63, [#allocation9]
    $region21: #{tpu_custom_call.1} parent=1 // pred_fallthru
      _
    // Predicated region
    $region22: #{tpu_custom_call.1} parent=1 // pred_check
      _
    $region23: #{tpu_custom_call.1} parent=1 // pred_check_branch
      %67 = sbr.rel (0) target = $region25
    $region24: #{tpu_custom_call.1} parent=1 // pred_region
      %s69 = ssub.s32 3456, 3456
      %70 = vsyncadd [#allocation9], %s69
      %s71 = sshll.u32 [#allocation10], 4
      %s72 = int_to_ptr.vmem [resolvable:$true] %s71
      %77 = dma.hbm_to_vmem [thread:$0]  %s5, 3456, %s72, [#allocation9], 128, 128, 8
    $region25: #{tpu_custom_call.1} parent=1 // pred_fallthru
      _
    // Predicated region
    $region26: #{tpu_custom_call.1} parent=1 // pred_check
      _
    $region27: #{tpu_custom_call.1} parent=1 // pred_check_branch
      %79 = sbr.rel (0) target = $region29
    $region28: #{tpu_custom_call.1} parent=1 // pred_region
      %s81 = ssub.s32 16, 16
      %82 = vsyncadd [#allocation12], %s81
      %s84 = sshll.u32 [#allocation11], 4
      %s85 = int_to_ptr.vmem [resolvable:$true] %s84
      %87 = dma.hbm_to_vmem [thread:$0]  %s6, 16, %s85, [#allocation12]
    $region29: #{tpu_custom_call.1} parent=1 // pred_fallthru
      _
    // Predicated region
    $region30: #{tpu_custom_call.1} parent=1 // pred_check
      _
    $region31: #{tpu_custom_call.1} parent=1 // pred_check_branch
      %89 = sbr.rel (0) target = $region33
    $region32: #{tpu_custom_call.1} parent=1 // pred_region
      %s91 = ssub.s32 73728, 73728
      %92 = vsyncadd [#allocation12], %s91
      %s93 = sshll.u32 [#allocation13], 4
      %s94 = int_to_ptr.vmem [resolvable:$true] %s93
      %99 = dma.hbm_to_vmem [thread:$0]  %s7, 73728, %s94, [#allocation12], 128, 128, 8
    $region33: #{tpu_custom_call.1} parent=1 // pred_fallthru
      _
    // Predicated region
    $region34: #{tpu_custom_call.1} parent=1 // pred_check
      _
    $region35: #{tpu_custom_call.1} parent=1 // pred_check_branch
      %101 = sbr.rel (0) target = $region37
    $region36: #{tpu_custom_call.1} parent=1 // pred_region
      %s103 = ssub.s32 16, 16
      %104 = vsyncadd [#allocation15], %s103
      %s106 = sshll.u32 [#allocation14], 4
      %s107 = int_to_ptr.vmem [resolvable:$true] %s106
      %109 = dma.hbm_to_vmem [thread:$0]  %s8, 16, %s107, [#allocation15]
    $region37: #{tpu_custom_call.1} parent=1 // pred_fallthru
      _
    // Predicated region
    $region38: #{tpu_custom_call.1} parent=1 // pred_check
      _
    $region39: #{tpu_custom_call.1} parent=1 // pred_check_branch
      %111 = sbr.rel (0) target = $region41
    $region40: #{tpu_custom_call.1} parent=1 // pred_region
      %112 = dma.done [#allocation3], 256
    $region41: #{tpu_custom_call.1} parent=1 // pred_fallthru
      _
    // Predicated region
    $region42: #{tpu_custom_call.1} parent=1 // pred_check
      _
    $region43: #{tpu_custom_call.1} parent=1 // pred_check_branch
      %114 = sbr.rel (0) target = $region45
    $region44: #{tpu_custom_call.1} parent=1 // pred_region
      %115 = dma.done [#allocation6], 16
    $region45: #{tpu_custom_call.1} parent=1 // pred_fallthru
      _
    // Predicated region
    $region46: #{tpu_custom_call.1} parent=1 // pred_check
      _
    $region47: #{tpu_custom_call.1} parent=1 // pred_check_branch
      %117 = sbr.rel (0) target = $region49
    $region48: #{tpu_custom_call.1} parent=1 // pred_region
      %118 = dma.done [#allocation6], 1792
    $region49: #{tpu_custom_call.1} parent=1 // pred_fallthru
      _
    // Predicated region
    $region50: #{tpu_custom_call.1} parent=1 // pred_check
      _
    $region51: #{tpu_custom_call.1} parent=1 // pred_check_branch
      %120 = sbr.rel (0) target = $region53
    $region52: #{tpu_custom_call.1} parent=1 // pred_region
      %121 = dma.done [#allocation9], 16
    $region53: #{tpu_custom_call.1} parent=1 // pred_fallthru
      _
    // Predicated region
    $region54: #{tpu_custom_call.1} parent=1 // pred_check
      _
    $region55: #{tpu_custom_call.1} parent=1 // pred_check_branch
      %123 = sbr.rel (0) target = $region57
    $region56: #{tpu_custom_call.1} parent=1 // pred_region
      %124 = dma.done [#allocation9], 3456
    $region57: #{tpu_custom_call.1} parent=1 // pred_fallthru
      _
    // Predicated region
    $region58: #{tpu_custom_call.1} parent=1 // pred_check
      _
    $region59: #{tpu_custom_call.1} parent=1 // pred_check_branch
      %126 = sbr.rel (0) target = $region61
    $region60: #{tpu_custom_call.1} parent=1 // pred_region
      %127 = dma.done [#allocation12], 16
    $region61: #{tpu_custom_call.1} parent=1 // pred_fallthru
      _
    // Predicated region
    $region62: #{tpu_custom_call.1} parent=1 // pred_check
      _
    $region63: #{tpu_custom_call.1} parent=1 // pred_check_branch
      %129 = sbr.rel (0) target = $region65
    $region64: #{tpu_custom_call.1} parent=1 // pred_region
      %130 = dma.done [#allocation12], 73728
    $region65: #{tpu_custom_call.1} parent=1 // pred_fallthru
      _
    // Predicated region
    $region66: #{tpu_custom_call.1} parent=1 // pred_check
      _
    $region67: #{tpu_custom_call.1} parent=1 // pred_check_branch
      %132 = sbr.rel (0) target = $region69
    $region68: #{tpu_custom_call.1} parent=1 // pred_region
      %133 = dma.done [#allocation15], 16
    $region69: #{tpu_custom_call.1} parent=1 // pred_fallthru
      _
    %v134 = vld [vmem:[%s0] sm:$0xff]
    %v135 = vld [vmem:[%s0 + $0x8] sm:$0xff]
    %v136 = vld [vmem:[%s0 + $0x10] sm:$0xff]
    %v137 = vld [vmem:[%s0 + $0x18] sm:$0xff]
    %v138 = vld [vmem:[%s0 + $0x20] sm:$0xff]
    %v139 = vld [vmem:[%s0 + $0x28] sm:$0xff]
    %v140 = vld [vmem:[%s0 + $0x30] sm:$0xff]
    %v141 = vld [vmem:[%s0 + $0x38] sm:$0xff]
    %v142 = vld [vmem:[%s0 + $0x40] sm:$0xff]
    %v143 = vld [vmem:[%s0 + $0x48] sm:$0xff]
    %v144 = vld [vmem:[%s0 + $0x50] sm:$0xff]
    %v145 = vld [vmem:[%s0 + $0x58] sm:$0xff]
    %v146 = vld [vmem:[%s0 + $0x60] sm:$0xff]
    %v147 = vld [vmem:[%s0 + $0x68] sm:$0xff]
    %v148 = vld [vmem:[%s0 + $0x70] sm:$0xff]
    %v149 = vld [vmem:[%s0 + $0x78] sm:$0xff]
    %v150 = vld [vmem:[%s0 + $0x80] sm:$0xff]
    %v151 = vld [vmem:[%s0 + $0x88] sm:$0xff]
    %v152 = vld [vmem:[%s0 + $0x90] sm:$0xff]
    %v153 = vld [vmem:[%s0 + $0x98] sm:$0xff]
    %v154 = vld [vmem:[%s0 + $0xa0] sm:$0xff]
    %v155 = vld [vmem:[%s0 + $0xa8] sm:$0xff]
    %v156 = vld [vmem:[%s0 + $0xb0] sm:$0xff]
    %v157 = vld [vmem:[%s0 + $0xb8] sm:$0xff]
    %v158 = vld [vmem:[%s0 + $0xc0] sm:$0xff]
    %v159 = vld [vmem:[#allocation2] sm:$0xff]
    %v160 = vld [vmem:[#allocation2 + $0x8] sm:$0x1]
    %v161 = vld [vmem:[#allocation5] sm:$0x1]
    %v163 = vlaneseq
    %v164 = vshrl.u32 %v163, 7
    %v165 = vsub.s32 0, %v164
    %v166 = vrot.slane %v161, %v165
    %vm168 = vcmask 72704
    %v170 = vsel %vm168, %v134, 0
    %v173 = vsel %vm168, %v135, 0
    %v176 = vsel %vm168, %v136, 0
    %v179 = vsel %vm168, %v137, 0
    %v182 = vsel %vm168, %v138, 0
    %v185 = vsel %vm168, %v139, 0
    %v188 = vsel %vm168, %v140, 0
    %v191 = vsel %vm168, %v141, 0
    %v194 = vsel %vm168, %v142, 0
    %v197 = vsel %vm168, %v143, 0
    %v200 = vsel %vm168, %v144, 0
    %v203 = vsel %vm168, %v145, 0
    %v206 = vsel %vm168, %v146, 0
    %v209 = vsel %vm168, %v147, 0
    %v212 = vsel %vm168, %v148, 0
    %v215 = vsel %vm168, %v149, 0
    %v218 = vsel %vm168, %v150, 0
    %v221 = vsel %vm168, %v151, 0
    %v224 = vsel %vm168, %v152, 0
    %v227 = vsel %vm168, %v153, 0
    %v230 = vsel %vm168, %v154, 0
    %v233 = vsel %vm168, %v155, 0
    %v236 = vsel %vm168, %v156, 0
    %v239 = vsel %vm168, %v157, 0
    %v242 = vsel %vm168, %v158, 0
    %vm244 = vcmask 1040384
    %v246 = vsel %vm244, %v160, 0
    %248 = vmatprep.subr.mxu0 0.0
    %249 = vmatpush1.msra.mxu0 %v159
    %250 = vmatprep.subr.mxu0 0.0
    %251 = vmatpush1.msra.mxu0 %v246
    %252 = vmatprep.subr.mxu0 0.0
    %253 = vmatpush1.msra.mxu0 0.0
    %254 = vmatprep.subr.mxu0 0.0
    %255 = vmatpush1.msra.mxu0 0.0
    %256 = vmatprep.subr.mxu0 0.0
    %257 = vmatpush1.msra.mxu0 0.0
    %258 = vmatprep.subr.mxu0 0.0
    %259 = vmatpush1.msra.mxu0 0.0
    %260 = vmatprep.subr.mxu0 0.0
    %261 = vmatpush1.msra.mxu0 0.0
    %262 = vmatprep.subr.mxu0 0.0
    %263 = vmatpush1.msra.mxu0 0.0
    %264 = vmatprep.subr.mxu0 0.0
    %265 = vmatpush1.msra.mxu0 0.0
    %266 = vmatprep.subr.mxu0 0.0
    %267 = vmatpush1.msra.mxu0 0.0
    %268 = vmatprep.subr.mxu0 0.0
    %269 = vmatpush1.msra.mxu0 0.0
    %270 = vmatprep.subr.mxu0 0.0
    %271 = vmatpush1.msra.mxu0 0.0
    %272 = vmatprep.subr.mxu0 0.0
    %273 = vmatpush1.msra.mxu0 0.0
    %274 = vmatprep.subr.mxu0 0.0
    %275 = vmatpush1.msra.mxu0 0.0
    %276 = vmatprep.subr.mxu0 0.0
    %277 = vmatpush1.msra.mxu0 0.0
    %278 = vmatprep.subr.mxu0 0.0
    %279 = vmatpush1.msra.mxu0 0.0
    %280 = vmatprep.subr.mxu0 0.0
    %281 = vmatpush1.msra.mxu0 0.0
    %282 = vmatprep.subr.mxu0 0.0
    %283 = vmatpush1.msra.mxu0 0.0
    %284 = vmatprep.subr.mxu0 0.0
    %285 = vmatpush1.msra.mxu0 0.0
    %286 = vmatprep.subr.mxu0 0.0
    %287 = vmatpush1.msra.mxu0 0.0
    %288 = vmatprep.subr.mxu0 0.0
    %289 = vmatpush1.msra.mxu0 0.0
    %290 = vmatprep.subr.mxu0 0.0
    %291 = vmatpush1.msra.mxu0 0.0
    %292 = vmatprep.subr.mxu0 0.0
    %293 = vmatpush1.msra.mxu0 0.0
    %294 = vmatprep.subr.mxu0 0.0
    %295 = vmatpush1.msra.mxu0 0.0
    %296 = vmatprep.subr.mxu0 0.0
    %297 = vmatpush1.msra.mxu0 0.0
    %298 = vmatprep.subr.mxu0 0.0
    %299 = vmatpush1.msra.mxu0 0.0
    %300 = vmatprep.subr.mxu0 0.0
    %301 = vmatpush1.msra.mxu0 0.0
    %302 = vmatprep.subr.mxu0 0.0
    %303 = vmatpush1.msra.mxu0 0.0
    %304 = vmatprep.subr.mxu0 0.0
    %305 = vmatpush1.msra.mxu0 0.0
    %306 = vmatprep.subr.mxu0 0.0
    %307 = vmatpush1.msra.mxu0 0.0
    %308 = vmatprep.subr.mxu0 0.0
    %309 = vmatpush1.msra.mxu0 0.0
    %310 = vmatprep.subr.mxu0 0.0
    %311 = vmatpush1.msra.mxu0 0.0
    %312 = vmatprep.mubr.f32.mxu0 0.0
    %313 = vmatmul.mubr.f32.gmra.mrb[0].mxu0 %v170
    %v314 = vpop.f32.mrb[0].mxu0
    %v315 = vadd.f32 %v166, %v314
    %v316 = vpop.f32.mrb[0].mxu0
    %317 = vmatprep.mubr.f32.mxu0 0.0
    %318 = vmatmul.mubr.f32.gmra.mrb[0].mxu0 %v173
    %v319 = vpop.f32.mrb[0].mxu0
    %v320 = vadd.f32 %v166, %v319
    %v321 = vpop.f32.mrb[0].mxu0
    %322 = vmatprep.mubr.f32.mxu0 0.0
    %323 = vmatmul.mubr.f32.gmra.mrb[0].mxu0 %v176
    %v324 = vpop.f32.mrb[0].mxu0
    %v325 = vadd.f32 %v166, %v324
    %v326 = vpop.f32.mrb[0].mxu0
    %327 = vmatprep.mubr.f32.mxu0 0.0
    %328 = vmatmul.mubr.f32.gmra.mrb[0].mxu0 %v179
    %v329 = vpop.f32.mrb[0].mxu0
    %v330 = vadd.f32 %v166, %v329
    %v331 = vpop.f32.mrb[0].mxu0
    %332 = vmatprep.mubr.f32.mxu0 0.0
    %333 = vmatmul.mubr.f32.gmra.mrb[0].mxu0 %v182
    %v334 = vpop.f32.mrb[0].mxu0
    %v335 = vadd.f32 %v166, %v334
    %v336 = vpop.f32.mrb[0].mxu0
    %337 = vmatprep.mubr.f32.mxu0 0.0
    %338 = vmatmul.mubr.f32.gmra.mrb[0].mxu0 %v185
    %v339 = vpop.f32.mrb[0].mxu0
    %v340 = vadd.f32 %v166, %v339
    %v341 = vpop.f32.mrb[0].mxu0
    %342 = vmatprep.mubr.f32.mxu0 0.0
    %343 = vmatmul.mubr.f32.gmra.mrb[0].mxu0 %v188
    %v344 = vpop.f32.mrb[0].mxu0
    %v345 = vadd.f32 %v166, %v344
    %v346 = vpop.f32.mrb[0].mxu0
    %347 = vmatprep.mubr.f32.mxu0 0.0
    %348 = vmatmul.mubr.f32.gmra.mrb[0].mxu0 %v191
    %v349 = vpop.f32.mrb[0].mxu0
    %v350 = vadd.f32 %v166, %v349
    %v351 = vpop.f32.mrb[0].mxu0
    %352 = vmatprep.mubr.f32.mxu0 0.0
    %353 = vmatmul.mubr.f32.gmra.mrb[0].mxu0 %v194
    %v354 = vpop.f32.mrb[0].mxu0
    %v355 = vadd.f32 %v166, %v354
    %v356 = vpop.f32.mrb[0].mxu0
    %357 = vmatprep.mubr.f32.mxu0 0.0
    %358 = vmatmul.mubr.f32.gmra.mrb[0].mxu0 %v197
    %v359 = vpop.f32.mrb[0].mxu0
    %v360 = vadd.f32 %v166, %v359
    %v361 = vpop.f32.mrb[0].mxu0
    %362 = vmatprep.mubr.f32.mxu0 0.0
    %363 = vmatmul.mubr.f32.gmra.mrb[0].mxu0 %v200
    %v364 = vpop.f32.mrb[0].mxu0
    %v365 = vadd.f32 %v166, %v364
    %v366 = vpop.f32.mrb[0].mxu0
    %367 = vmatprep.mubr.f32.mxu0 0.0
    %368 = vmatmul.mubr.f32.gmra.mrb[0].mxu0 %v203
    %v369 = vpop.f32.mrb[0].mxu0
    %v370 = vadd.f32 %v166, %v369
    %v371 = vpop.f32.mrb[0].mxu0
    %372 = vmatprep.mubr.f32.mxu0 0.0
    %373 = vmatmul.mubr.f32.gmra.mrb[0].mxu0 %v206
    %v374 = vpop.f32.mrb[0].mxu0
    %v375 = vadd.f32 %v166, %v374
    %v376 = vpop.f32.mrb[0].mxu0
    %377 = vmatprep.mubr.f32.mxu0 0.0
    %378 = vmatmul.mubr.f32.gmra.mrb[0].mxu0 %v209
    %v379 = vpop.f32.mrb[0].mxu0
    %v380 = vadd.f32 %v166, %v379
    %v381 = vpop.f32.mrb[0].mxu0
    %382 = vmatprep.mubr.f32.mxu0 0.0
    %383 = vmatmul.mubr.f32.gmra.mrb[0].mxu0 %v212
    %v384 = vpop.f32.mrb[0].mxu0
    %v385 = vadd.f32 %v166, %v384
    %v386 = vpop.f32.mrb[0].mxu0
    %387 = vmatprep.mubr.f32.mxu0 0.0
    %388 = vmatmul.mubr.f32.gmra.mrb[0].mxu0 %v215
    %v389 = vpop.f32.mrb[0].mxu0
    %v390 = vadd.f32 %v166, %v389
    %v391 = vpop.f32.mrb[0].mxu0
    %392 = vmatprep.mubr.f32.mxu0 0.0
    %393 = vmatmul.mubr.f32.gmra.mrb[0].mxu0 %v218
    %v394 = vpop.f32.mrb[0].mxu0
    %v395 = vadd.f32 %v166, %v394
    %v396 = vpop.f32.mrb[0].mxu0
    %397 = vmatprep.mubr.f32.mxu0 0.0
    %398 = vmatmul.mubr.f32.gmra.mrb[0].mxu0 %v221
    %v399 = vpop.f32.mrb[0].mxu0
    %v400 = vadd.f32 %v166, %v399
    %v401 = vpop.f32.mrb[0].mxu0
    %402 = vmatprep.mubr.f32.mxu0 0.0
    %403 = vmatmul.mubr.f32.gmra.mrb[0].mxu0 %v224
    %v404 = vpop.f32.mrb[0].mxu0
    %v405 = vadd.f32 %v166, %v404
    %v406 = vpop.f32.mrb[0].mxu0
    %407 = vmatprep.mubr.f32.mxu0 0.0
    %408 = vmatmul.mubr.f32.gmra.mrb[0].mxu0 %v227
    %v409 = vpop.f32.mrb[0].mxu0
    %v410 = vadd.f32 %v166, %v409
    %v411 = vpop.f32.mrb[0].mxu0
    %412 = vmatprep.mubr.f32.mxu0 0.0
    %413 = vmatmul.mubr.f32.gmra.mrb[0].mxu0 %v230
    %v414 = vpop.f32.mrb[0].mxu0
    %v415 = vadd.f32 %v166, %v414
    %v416 = vpop.f32.mrb[0].mxu0
    %417 = vmatprep.mubr.f32.mxu0 0.0
    %418 = vmatmul.mubr.f32.gmra.mrb[0].mxu0 %v233
    %v419 = vpop.f32.mrb[0].mxu0
    %v420 = vadd.f32 %v166, %v419
    %v421 = vpop.f32.mrb[0].mxu0
    %422 = vmatprep.mubr.f32.mxu0 0.0
    %423 = vmatmul.mubr.f32.gmra.mrb[0].mxu0 %v236
    %v424 = vpop.f32.mrb[0].mxu0
    %v425 = vadd.f32 %v166, %v424
    %v426 = vpop.f32.mrb[0].mxu0
    %427 = vmatprep.mubr.f32.mxu0 0.0
    %428 = vmatmul.mubr.f32.gmra.mrb[0].mxu0 %v239
    %v429 = vpop.f32.mrb[0].mxu0
    %v430 = vadd.f32 %v166, %v429
    %v431 = vpop.f32.mrb[0].mxu0
    %432 = vmatprep.mubr.f32.mxu0 0.0
    %433 = vmatmul.mubr.f32.gmra.mrb[0].mxu0 %v242
    %v434 = vpop.f32.mrb[0].mxu0
    %v435 = vadd.f32 %v166, %v434
    %v436 = vpop.f32.mrb[0].mxu0
    %437 = vdwg.mxu0
    %v438 = vmax.f32 %v315, 0.0
    %v439 = vmax.f32 %v320, 0.0
    %v440 = vmax.f32 %v325, 0.0
    %v441 = vmax.f32 %v330, 0.0
    %v442 = vmax.f32 %v335, 0.0
    %v443 = vmax.f32 %v340, 0.0
    %v444 = vmax.f32 %v345, 0.0
    %v445 = vmax.f32 %v350, 0.0
    %v446 = vmax.f32 %v355, 0.0
    %v447 = vmax.f32 %v360, 0.0
    %v448 = vmax.f32 %v365, 0.0
    %v449 = vmax.f32 %v370, 0.0
    %v450 = vmax.f32 %v375, 0.0
    %v451 = vmax.f32 %v380, 0.0
    %v452 = vmax.f32 %v385, 0.0
    %v453 = vmax.f32 %v390, 0.0
    %v454 = vmax.f32 %v395, 0.0
    %v455 = vmax.f32 %v400, 0.0
    %v456 = vmax.f32 %v405, 0.0
    %v457 = vmax.f32 %v410, 0.0
    %v458 = vmax.f32 %v415, 0.0
    %v459 = vmax.f32 %v420, 0.0
    %v460 = vmax.f32 %v425, 0.0
    %v461 = vmax.f32 %v430, 0.0
    %v462 = vmax.f32 %v435, 0.0
    %v488 = vcombine.high %v438, %v438
    %v490 = vunpack.c.l.s4 1983009808
    %v491 = vunpack.c.0.s8 %v490
    %v492 = vlaneseq
    %v493 = vshrl.u32 %v492, 7
    %v494 = vsub.s32 %v491, %v493
    %v495 = vrot.slane %v438, %v494
    %v497 = vunpack.c.l.s4 1983009808
    %v498 = vunpack.c.0.s8 %v497
    %v499 = vlaneseq
    %v500 = vshrl.u32 %v499, 7
    %v501 = vsub.s32 %v498, %v500
    %v502 = vrot.slane %v488, %v501
    %v503 = vcombine.high %v495, %v495
    %v504 = vcombine.high %v502, %v502
    %v505 = vcombine.high %v439, %v439
    %v507 = vunpack.c.l.s4 1983009808
    %v508 = vunpack.c.0.s8 %v507
    %v509 = vlaneseq
    %v510 = vshrl.u32 %v509, 7
    %v511 = vsub.s32 %v508, %v510
    %v512 = vrot.slane %v439, %v511
    %v514 = vunpack.c.l.s4 1983009808
    %v515 = vunpack.c.0.s8 %v514
    %v516 = vlaneseq
    %v517 = vshrl.u32 %v516, 7
    %v518 = vsub.s32 %v515, %v517
    %v519 = vrot.slane %v505, %v518
    %v520 = vcombine.high %v512, %v512
    %v521 = vcombine.high %v519, %v519
    %v522 = vcombine.high %v440, %v440
    %v524 = vunpack.c.l.s4 1983009808
    %v525 = vunpack.c.0.s8 %v524
    %v526 = vlaneseq
    %v527 = vshrl.u32 %v526, 7
    %v528 = vsub.s32 %v525, %v527
    %v529 = vrot.slane %v440, %v528
    %v531 = vunpack.c.l.s4 1983009808
    %v532 = vunpack.c.0.s8 %v531
    %v533 = vlaneseq
    %v534 = vshrl.u32 %v533, 7
    %v535 = vsub.s32 %v532, %v534
    %v536 = vrot.slane %v522, %v535
    %v537 = vcombine.high %v529, %v529
    %v538 = vcombine.high %v536, %v536
    %v539 = vcombine.high %v441, %v441
    %v541 = vunpack.c.l.s4 1983009808
    %v542 = vunpack.c.0.s8 %v541
    %v543 = vlaneseq
    %v544 = vshrl.u32 %v543, 7
    %v545 = vsub.s32 %v542, %v544
    %v546 = vrot.slane %v441, %v545
    %v548 = vunpack.c.l.s4 1983009808
    %v549 = vunpack.c.0.s8 %v548
    %v550 = vlaneseq
    %v551 = vshrl.u32 %v550, 7
    %v552 = vsub.s32 %v549, %v551
    %v553 = vrot.slane %v539, %v552
    %v554 = vcombine.high %v546, %v546
    %v555 = vcombine.high %v553, %v553
    %v556 = vcombine.high %v442, %v442
    %v558 = vunpack.c.l.s4 1983009808
    %v559 = vunpack.c.0.s8 %v558
    %v560 = vlaneseq
    %v561 = vshrl.u32 %v560, 7
    %v562 = vsub.s32 %v559, %v561
    %v563 = vrot.slane %v442, %v562
    %v565 = vunpack.c.l.s4 1983009808
    %v566 = vunpack.c.0.s8 %v565
    %v567 = vlaneseq
    %v568 = vshrl.u32 %v567, 7
    %v569 = vsub.s32 %v566, %v568
    %v570 = vrot.slane %v556, %v569
    %v571 = vcombine.high %v563, %v563
    %v572 = vcombine.high %v570, %v570
    %v573 = vcombine.high %v443, %v443
    %v575 = vunpack.c.l.s4 1983009808
    %v576 = vunpack.c.0.s8 %v575
    %v577 = vlaneseq
    %v578 = vshrl.u32 %v577, 7
    %v579 = vsub.s32 %v576, %v578
    %v580 = vrot.slane %v443, %v579
    %v582 = vunpack.c.l.s4 1983009808
    %v583 = vunpack.c.0.s8 %v582
    %v584 = vlaneseq
    %v585 = vshrl.u32 %v584, 7
    %v586 = vsub.s32 %v583, %v585
    %v587 = vrot.slane %v573, %v586
    %v588 = vcombine.high %v580, %v580
    %v589 = vcombine.high %v587, %v587
    %v590 = vcombine.high %v444, %v444
    %v592 = vunpack.c.l.s4 1983009808
    %v593 = vunpack.c.0.s8 %v592
    %v594 = vlaneseq
    %v595 = vshrl.u32 %v594, 7
    %v596 = vsub.s32 %v593, %v595
    %v597 = vrot.slane %v444, %v596
    %v599 = vunpack.c.l.s4 1983009808
    %v600 = vunpack.c.0.s8 %v599
    %v601 = vlaneseq
    %v602 = vshrl.u32 %v601, 7
    %v603 = vsub.s32 %v600, %v602
    %v604 = vrot.slane %v590, %v603
    %v605 = vcombine.high %v597, %v597
    %v606 = vcombine.high %v604, %v604
    %v607 = vcombine.high %v445, %v445
    %v609 = vunpack.c.l.s4 1983009808
    %v610 = vunpack.c.0.s8 %v609
    %v611 = vlaneseq
    %v612 = vshrl.u32 %v611, 7
    %v613 = vsub.s32 %v610, %v612
    %v614 = vrot.slane %v445, %v613
    %v616 = vunpack.c.l.s4 1983009808
    %v617 = vunpack.c.0.s8 %v616
    %v618 = vlaneseq
    %v619 = vshrl.u32 %v618, 7
    %v620 = vsub.s32 %v617, %v619
    %v621 = vrot.slane %v607, %v620
    %v622 = vcombine.high %v614, %v614
    %v623 = vcombine.high %v621, %v621
    %v624 = vcombine.high %v446, %v446
    %v626 = vunpack.c.l.s4 1983009808
    %v627 = vunpack.c.0.s8 %v626
    %v628 = vlaneseq
    %v629 = vshrl.u32 %v628, 7
    %v630 = vsub.s32 %v627, %v629
    %v631 = vrot.slane %v446, %v630
    %v633 = vunpack.c.l.s4 1983009808
    %v634 = vunpack.c.0.s8 %v633
    %v635 = vlaneseq
    %v636 = vshrl.u32 %v635, 7
    %v637 = vsub.s32 %v634, %v636
    %v638 = vrot.slane %v624, %v637
    %v639 = vcombine.high %v631, %v631
    %v640 = vcombine.high %v638, %v638
    %v641 = vcombine.high %v447, %v447
    %v643 = vunpack.c.l.s4 1983009808
    %v644 = vunpack.c.0.s8 %v643
    %v645 = vlaneseq
    %v646 = vshrl.u32 %v645, 7
    %v647 = vsub.s32 %v644, %v646
    %v648 = vrot.slane %v447, %v647
    %v650 = vunpack.c.l.s4 1983009808
    %v651 = vunpack.c.0.s8 %v650
    %v652 = vlaneseq
    %v653 = vshrl.u32 %v652, 7
    %v654 = vsub.s32 %v651, %v653
    %v655 = vrot.slane %v641, %v654
    %v656 = vcombine.high %v648, %v648
    %v657 = vcombine.high %v655, %v655
    %v658 = vcombine.high %v448, %v448
    %v660 = vunpack.c.l.s4 1983009808
    %v661 = vunpack.c.0.s8 %v660
    %v662 = vlaneseq
    %v663 = vshrl.u32 %v662, 7
    %v664 = vsub.s32 %v661, %v663
    %v665 = vrot.slane %v448, %v664
    %v667 = vunpack.c.l.s4 1983009808
    %v668 = vunpack.c.0.s8 %v667
    %v669 = vlaneseq
    %v670 = vshrl.u32 %v669, 7
    %v671 = vsub.s32 %v668, %v670
    %v672 = vrot.slane %v658, %v671
    %v673 = vcombine.high %v665, %v665
    %v674 = vcombine.high %v672, %v672
    %v675 = vcombine.high %v449, %v449
    %v677 = vunpack.c.l.s4 1983009808
    %v678 = vunpack.c.0.s8 %v677
    %v679 = vlaneseq
    %v680 = vshrl.u32 %v679, 7
    %v681 = vsub.s32 %v678, %v680
    %v682 = vrot.slane %v449, %v681
    %v684 = vunpack.c.l.s4 1983009808
    %v685 = vunpack.c.0.s8 %v684
    %v686 = vlaneseq
    %v687 = vshrl.u32 %v686, 7
    %v688 = vsub.s32 %v685, %v687
    %v689 = vrot.slane %v675, %v688
    %v690 = vcombine.high %v682, %v682
    %v691 = vcombine.high %v689, %v689
    %v692 = vcombine.high %v450, %v450
    %v694 = vunpack.c.l.s4 1983009808
    %v695 = vunpack.c.0.s8 %v694
    %v696 = vlaneseq
    %v697 = vshrl.u32 %v696, 7
    %v698 = vsub.s32 %v695, %v697
    %v699 = vrot.slane %v450, %v698
    %v701 = vunpack.c.l.s4 1983009808
    %v702 = vunpack.c.0.s8 %v701
    %v703 = vlaneseq
    %v704 = vshrl.u32 %v703, 7
    %v705 = vsub.s32 %v702, %v704
    %v706 = vrot.slane %v692, %v705
    %v707 = vcombine.high %v699, %v699
    %v708 = vcombine.high %v706, %v706
    %v709 = vcombine.high %v451, %v451
    %v711 = vunpack.c.l.s4 1983009808
    %v712 = vunpack.c.0.s8 %v711
    %v713 = vlaneseq
    %v714 = vshrl.u32 %v713, 7
    %v715 = vsub.s32 %v712, %v714
    %v716 = vrot.slane %v451, %v715
    %v718 = vunpack.c.l.s4 1983009808
    %v719 = vunpack.c.0.s8 %v718
    %v720 = vlaneseq
    %v721 = vshrl.u32 %v720, 7
    %v722 = vsub.s32 %v719, %v721
    %v723 = vrot.slane %v709, %v722
    %v724 = vcombine.high %v716, %v716
    %v725 = vcombine.high %v723, %v723
    %v726 = vcombine.high %v452, %v452
    %v728 = vunpack.c.l.s4 1983009808
    %v729 = vunpack.c.0.s8 %v728
    %v730 = vlaneseq
    %v731 = vshrl.u32 %v730, 7
    %v732 = vsub.s32 %v729, %v731
    %v733 = vrot.slane %v452, %v732
    %v735 = vunpack.c.l.s4 1983009808
    %v736 = vunpack.c.0.s8 %v735
    %v737 = vlaneseq
    %v738 = vshrl.u32 %v737, 7
    %v739 = vsub.s32 %v736, %v738
    %v740 = vrot.slane %v726, %v739
    %v741 = vcombine.high %v733, %v733
    %v742 = vcombine.high %v740, %v740
    %v743 = vcombine.high %v453, %v453
    %v745 = vunpack.c.l.s4 1983009808
    %v746 = vunpack.c.0.s8 %v745
    %v747 = vlaneseq
    %v748 = vshrl.u32 %v747, 7
    %v749 = vsub.s32 %v746, %v748
    %v750 = vrot.slane %v453, %v749
    %v752 = vunpack.c.l.s4 1983009808
    %v753 = vunpack.c.0.s8 %v752
    %v754 = vlaneseq
    %v755 = vshrl.u32 %v754, 7
    %v756 = vsub.s32 %v753, %v755
    %v757 = vrot.slane %v743, %v756
    %v758 = vcombine.high %v750, %v750
    %v759 = vcombine.high %v757, %v757
    %v760 = vcombine.high %v454, %v454
    %v762 = vunpack.c.l.s4 1983009808
    %v763 = vunpack.c.0.s8 %v762
    %v764 = vlaneseq
    %v765 = vshrl.u32 %v764, 7
    %v766 = vsub.s32 %v763, %v765
    %v767 = vrot.slane %v454, %v766
    %v769 = vunpack.c.l.s4 1983009808
    %v770 = vunpack.c.0.s8 %v769
    %v771 = vlaneseq
    %v772 = vshrl.u32 %v771, 7
    %v773 = vsub.s32 %v770, %v772
    %v774 = vrot.slane %v760, %v773
    %v775 = vcombine.high %v767, %v767
    %v776 = vcombine.high %v774, %v774
    %v777 = vcombine.high %v455, %v455
    %v779 = vunpack.c.l.s4 1983009808
    %v780 = vunpack.c.0.s8 %v779
    %v781 = vlaneseq
    %v782 = vshrl.u32 %v781, 7
    %v783 = vsub.s32 %v780, %v782
    %v784 = vrot.slane %v455, %v783
    %v786 = vunpack.c.l.s4 1983009808
    %v787 = vunpack.c.0.s8 %v786
    %v788 = vlaneseq
    %v789 = vshrl.u32 %v788, 7
    %v790 = vsub.s32 %v787, %v789
    %v791 = vrot.slane %v777, %v790
    %v792 = vcombine.high %v784, %v784
    %v793 = vcombine.high %v791, %v791
    %v794 = vcombine.high %v456, %v456
    %v796 = vunpack.c.l.s4 1983009808
    %v797 = vunpack.c.0.s8 %v796
    %v798 = vlaneseq
    %v799 = vshrl.u32 %v798, 7
    %v800 = vsub.s32 %v797, %v799
    %v801 = vrot.slane %v456, %v800
    %v803 = vunpack.c.l.s4 1983009808
    %v804 = vunpack.c.0.s8 %v803
    %v805 = vlaneseq
    %v806 = vshrl.u32 %v805, 7
    %v807 = vsub.s32 %v804, %v806
    %v808 = vrot.slane %v794, %v807
    %v809 = vcombine.high %v801, %v801
    %v810 = vcombine.high %v808, %v808
    %v811 = vcombine.high %v457, %v457
    %v813 = vunpack.c.l.s4 1983009808
    %v814 = vunpack.c.0.s8 %v813
    %v815 = vlaneseq
    %v816 = vshrl.u32 %v815, 7
    %v817 = vsub.s32 %v814, %v816
    %v818 = vrot.slane %v457, %v817
    %v820 = vunpack.c.l.s4 1983009808
    %v821 = vunpack.c.0.s8 %v820
    %v822 = vlaneseq
    %v823 = vshrl.u32 %v822, 7
    %v824 = vsub.s32 %v821, %v823
    %v825 = vrot.slane %v811, %v824
    %v826 = vcombine.high %v818, %v818
    %v827 = vcombine.high %v825, %v825
    %v828 = vcombine.high %v458, %v458
    %v830 = vunpack.c.l.s4 1983009808
    %v831 = vunpack.c.0.s8 %v830
    %v832 = vlaneseq
    %v833 = vshrl.u32 %v832, 7
    %v834 = vsub.s32 %v831, %v833
    %v835 = vrot.slane %v458, %v834
    %v837 = vunpack.c.l.s4 1983009808
    %v838 = vunpack.c.0.s8 %v837
    %v839 = vlaneseq
    %v840 = vshrl.u32 %v839, 7
    %v841 = vsub.s32 %v838, %v840
    %v842 = vrot.slane %v828, %v841
    %v843 = vcombine.high %v835, %v835
    %v844 = vcombine.high %v842, %v842
    %v845 = vcombine.high %v459, %v459
    %v847 = vunpack.c.l.s4 1983009808
    %v848 = vunpack.c.0.s8 %v847
    %v849 = vlaneseq
    %v850 = vshrl.u32 %v849, 7
    %v851 = vsub.s32 %v848, %v850
    %v852 = vrot.slane %v459, %v851
    %v854 = vunpack.c.l.s4 1983009808
    %v855 = vunpack.c.0.s8 %v854
    %v856 = vlaneseq
    %v857 = vshrl.u32 %v856, 7
    %v858 = vsub.s32 %v855, %v857
    %v859 = vrot.slane %v845, %v858
    %v860 = vcombine.high %v852, %v852
    %v861 = vcombine.high %v859, %v859
    %v862 = vcombine.high %v460, %v460
    %v864 = vunpack.c.l.s4 1983009808
    %v865 = vunpack.c.0.s8 %v864
    %v866 = vlaneseq
    %v867 = vshrl.u32 %v866, 7
    %v868 = vsub.s32 %v865, %v867
    %v869 = vrot.slane %v460, %v868
    %v871 = vunpack.c.l.s4 1983009808
    %v872 = vunpack.c.0.s8 %v871
    %v873 = vlaneseq
    %v874 = vshrl.u32 %v873, 7
    %v875 = vsub.s32 %v872, %v874
    %v876 = vrot.slane %v862, %v875
    %v877 = vcombine.high %v869, %v869
    %v878 = vcombine.high %v876, %v876
    %v879 = vcombine.high %v461, %v461
    %v881 = vunpack.c.l.s4 1983009808
    %v882 = vunpack.c.0.s8 %v881
    %v883 = vlaneseq
    %v884 = vshrl.u32 %v883, 7
    %v885 = vsub.s32 %v882, %v884
    %v886 = vrot.slane %v461, %v885
    %v888 = vunpack.c.l.s4 1983009808
    %v889 = vunpack.c.0.s8 %v888
    %v890 = vlaneseq
    %v891 = vshrl.u32 %v890, 7
    %v892 = vsub.s32 %v889, %v891
    %v893 = vrot.slane %v879, %v892
    %v894 = vcombine.high %v886, %v886
    %v895 = vcombine.high %v893, %v893
    %v896 = vcombine.high %v462, %v462
    %v898 = vunpack.c.l.s4 1983009808
    %v899 = vunpack.c.0.s8 %v898
    %v900 = vlaneseq
    %v901 = vshrl.u32 %v900, 7
    %v902 = vsub.s32 %v899, %v901
    %v903 = vrot.slane %v462, %v902
    %v905 = vunpack.c.l.s4 1983009808
    %v906 = vunpack.c.0.s8 %v905
    %v907 = vlaneseq
    %v908 = vshrl.u32 %v907, 7
    %v909 = vsub.s32 %v906, %v908
    %v910 = vrot.slane %v896, %v909
    %v911 = vcombine.high %v903, %v903
    %v912 = vcombine.high %v910, %v910
    %v913 = vld [vmem:[#allocation7] sm:$0xff]
    %v914 = vld [vmem:[#allocation7 + $0x8] sm:$0xff]
    %v915 = vld [vmem:[#allocation7 + $0x10] sm:$0xff]
    %v916 = vld [vmem:[#allocation7 + $0x18] sm:$0xff]
    %v917 = vld [vmem:[#allocation7 + $0x20] sm:$0xff]
    %v918 = vld [vmem:[#allocation7 + $0x28] sm:$0xff]
    %v919 = vld [vmem:[#allocation7 + $0x30] sm:$0xff]
    %v920 = vld [vmem:[#allocation7 + $0x38] sm:$0xff]
    %v921 = vld [vmem:[#allocation7 + $0x40] sm:$0xff]
    %v922 = vld [vmem:[#allocation7 + $0x48] sm:$0xff]
    %v923 = vld [vmem:[#allocation7 + $0x50] sm:$0xff]
    %v924 = vld [vmem:[#allocation7 + $0x58] sm:$0xff]
    %v925 = vld [vmem:[#allocation7 + $0x60] sm:$0xff]
    %v926 = vld [vmem:[#allocation7 + $0x68] sm:$0xf]
    %v927 = vld [vmem:[#allocation8] sm:$0x1]
    %v928 = vcombine.low %v495, %v503
    %v929 = vcombine.low %v502, %v504
    %v931 = vunpack.c.l.s4 1983009808
    %v932 = vunpack.c.0.s8 %v931
    %v933 = vlaneseq
    %v934 = vshrl.u32 %v933, 7
    %v935 = vsub.s32 %v932, %v934
    %v936 = vrot.slane %v928, %v935
    %v938 = vunpack.c.l.s4 1983009808
    %v939 = vunpack.c.0.s8 %v938
    %v940 = vlaneseq
    %v941 = vshrl.u32 %v940, 7
    %v942 = vsub.s32 %v939, %v941
    %v943 = vrot.slane %v929, %v942
    %v944 = vcombine.low %v936, %v943
    %v945 = vcombine.low %v520, %v519
    %v946 = vcombine.low %v521, %v529
    %v948 = vunpack.c.l.s4 1983009808
    %v949 = vunpack.c.0.s8 %v948
    %v950 = vlaneseq
    %v951 = vshrl.u32 %v950, 7
    %v952 = vsub.s32 %v949, %v951
    %v953 = vrot.slane %v945, %v952
    %v955 = vunpack.c.l.s4 1983009808
    %v956 = vunpack.c.0.s8 %v955
    %v957 = vlaneseq
    %v958 = vshrl.u32 %v957, 7
    %v959 = vsub.s32 %v956, %v958
    %v960 = vrot.slane %v946, %v959
    %v961 = vcombine.low %v953, %v960
    %v962 = vcombine.low %v536, %v538
    %v963 = vcombine.low %v546, %v554
    %v965 = vunpack.c.l.s4 1983009808
    %v966 = vunpack.c.0.s8 %v965
    %v967 = vlaneseq
    %v968 = vshrl.u32 %v967, 7
    %v969 = vsub.s32 %v966, %v968
    %v970 = vrot.slane %v962, %v969
    %v972 = vunpack.c.l.s4 1983009808
    %v973 = vunpack.c.0.s8 %v972
    %v974 = vlaneseq
    %v975 = vshrl.u32 %v974, 7
    %v976 = vsub.s32 %v973, %v975
    %v977 = vrot.slane %v963, %v976
    %v978 = vcombine.low %v970, %v977
    %v979 = vcombine.low %v555, %v563
    %v980 = vcombine.low %v571, %v570
    %v982 = vunpack.c.l.s4 1983009808
    %v983 = vunpack.c.0.s8 %v982
    %v984 = vlaneseq
    %v985 = vshrl.u32 %v984, 7
    %v986 = vsub.s32 %v983, %v985
    %v987 = vrot.slane %v979, %v986
    %v989 = vunpack.c.l.s4 1983009808
    %v990 = vunpack.c.0.s8 %v989
    %v991 = vlaneseq
    %v992 = vshrl.u32 %v991, 7
    %v993 = vsub.s32 %v990, %v992
    %v994 = vrot.slane %v980, %v993
    %v995 = vcombine.low %v987, %v994
    %v996 = vcombine.low %v580, %v588
    %v997 = vcombine.low %v587, %v589
    %v999 = vunpack.c.l.s4 1983009808
    %v1000 = vunpack.c.0.s8 %v999
    %v1001 = vlaneseq
    %v1002 = vshrl.u32 %v1001, 7
    %v1003 = vsub.s32 %v1000, %v1002
    %v1004 = vrot.slane %v996, %v1003
    %v1006 = vunpack.c.l.s4 1983009808
    %v1007 = vunpack.c.0.s8 %v1006
    %v1008 = vlaneseq
    %v1009 = vshrl.u32 %v1008, 7
    %v1010 = vsub.s32 %v1007, %v1009
    %v1011 = vrot.slane %v997, %v1010
    %v1012 = vcombine.low %v1004, %v1011
    %v1013 = vcombine.low %v605, %v604
    %v1014 = vcombine.low %v606, %v614
    %v1016 = vunpack.c.l.s4 1983009808
    %v1017 = vunpack.c.0.s8 %v1016
    %v1018 = vlaneseq
    %v1019 = vshrl.u32 %v1018, 7
    %v1020 = vsub.s32 %v1017, %v1019
    %v1021 = vrot.slane %v1013, %v1020
    %v1023 = vunpack.c.l.s4 1983009808
    %v1024 = vunpack.c.0.s8 %v1023
    %v1025 = vlaneseq
    %v1026 = vshrl.u32 %v1025, 7
    %v1027 = vsub.s32 %v1024, %v1026
    %v1028 = vrot.slane %v1014, %v1027
    %v1029 = vcombine.low %v1021, %v1028
    %v1030 = vcombine.low %v621, %v623
    %v1031 = vcombine.low %v631, %v639
    %v1033 = vunpack.c.l.s4 1983009808
    %v1034 = vunpack.c.0.s8 %v1033
    %v1035 = vlaneseq
    %v1036 = vshrl.u32 %v1035, 7
    %v1037 = vsub.s32 %v1034, %v1036
    %v1038 = vrot.slane %v1030, %v1037
    %v1040 = vunpack.c.l.s4 1983009808
    %v1041 = vunpack.c.0.s8 %v1040
    %v1042 = vlaneseq
    %v1043 = vshrl.u32 %v1042, 7
    %v1044 = vsub.s32 %v1041, %v1043
    %v1045 = vrot.slane %v1031, %v1044
    %v1046 = vcombine.low %v1038, %v1045
    %v1047 = vcombine.low %v640, %v648
    %v1048 = vcombine.low %v656, %v655
    %v1050 = vunpack.c.l.s4 1983009808
    %v1051 = vunpack.c.0.s8 %v1050
    %v1052 = vlaneseq
    %v1053 = vshrl.u32 %v1052, 7
    %v1054 = vsub.s32 %v1051, %v1053
    %v1055 = vrot.slane %v1047, %v1054
    %v1057 = vunpack.c.l.s4 1983009808
    %v1058 = vunpack.c.0.s8 %v1057
    %v1059 = vlaneseq
    %v1060 = vshrl.u32 %v1059, 7
    %v1061 = vsub.s32 %v1058, %v1060
    %v1062 = vrot.slane %v1048, %v1061
    %v1063 = vcombine.low %v1055, %v1062
    %v1064 = vcombine.low %v706, %v708
    %v1065 = vcombine.low %v716, %v724
    %v1067 = vunpack.c.l.s4 1983009808
    %v1068 = vunpack.c.0.s8 %v1067
    %v1069 = vlaneseq
    %v1070 = vshrl.u32 %v1069, 7
    %v1071 = vsub.s32 %v1068, %v1070
    %v1072 = vrot.slane %v1064, %v1071
    %v1074 = vunpack.c.l.s4 1983009808
    %v1075 = vunpack.c.0.s8 %v1074
    %v1076 = vlaneseq
    %v1077 = vshrl.u32 %v1076, 7
    %v1078 = vsub.s32 %v1075, %v1077
    %v1079 = vrot.slane %v1065, %v1078
    %v1080 = vcombine.low %v1072, %v1079
    %v1081 = vcombine.low %v725, %v733
    %v1082 = vcombine.low %v741, %v740
    %v1084 = vunpack.c.l.s4 1983009808
    %v1085 = vunpack.c.0.s8 %v1084
    %v1086 = vlaneseq
    %v1087 = vshrl.u32 %v1086, 7
    %v1088 = vsub.s32 %v1085, %v1087
    %v1089 = vrot.slane %v1081, %v1088
    %v1091 = vunpack.c.l.s4 1983009808
    %v1092 = vunpack.c.0.s8 %v1091
    %v1093 = vlaneseq
    %v1094 = vshrl.u32 %v1093, 7
    %v1095 = vsub.s32 %v1092, %v1094
    %v1096 = vrot.slane %v1082, %v1095
    %v1097 = vcombine.low %v1089, %v1096
    %v1098 = vcombine.low %v750, %v758
    %v1099 = vcombine.low %v757, %v759
    %v1101 = vunpack.c.l.s4 1983009808
    %v1102 = vunpack.c.0.s8 %v1101
    %v1103 = vlaneseq
    %v1104 = vshrl.u32 %v1103, 7
    %v1105 = vsub.s32 %v1102, %v1104
    %v1106 = vrot.slane %v1098, %v1105
    %v1108 = vunpack.c.l.s4 1983009808
    %v1109 = vunpack.c.0.s8 %v1108
    %v1110 = vlaneseq
    %v1111 = vshrl.u32 %v1110, 7
    %v1112 = vsub.s32 %v1109, %v1111
    %v1113 = vrot.slane %v1099, %v1112
    %v1114 = vcombine.low %v1106, %v1113
    %v1115 = vcombine.low %v775, %v774
    %v1116 = vcombine.low %v776, %v784
    %v1118 = vunpack.c.l.s4 1983009808
    %v1119 = vunpack.c.0.s8 %v1118
    %v1120 = vlaneseq
    %v1121 = vshrl.u32 %v1120, 7
    %v1122 = vsub.s32 %v1119, %v1121
    %v1123 = vrot.slane %v1115, %v1122
    %v1125 = vunpack.c.l.s4 1983009808
    %v1126 = vunpack.c.0.s8 %v1125
    %v1127 = vlaneseq
    %v1128 = vshrl.u32 %v1127, 7
    %v1129 = vsub.s32 %v1126, %v1128
    %v1130 = vrot.slane %v1116, %v1129
    %v1131 = vcombine.low %v1123, %v1130
    %v1132 = vcombine.low %v791, %v793
    %v1133 = vcombine.low %v801, %v809
    %v1135 = vunpack.c.l.s4 1983009808
    %v1136 = vunpack.c.0.s8 %v1135
    %v1137 = vlaneseq
    %v1138 = vshrl.u32 %v1137, 7
    %v1139 = vsub.s32 %v1136, %v1138
    %v1140 = vrot.slane %v1132, %v1139
    %v1142 = vunpack.c.l.s4 1983009808
    %v1143 = vunpack.c.0.s8 %v1142
    %v1144 = vlaneseq
    %v1145 = vshrl.u32 %v1144, 7
    %v1146 = vsub.s32 %v1143, %v1145
    %v1147 = vrot.slane %v1133, %v1146
    %v1148 = vcombine.low %v1140, %v1147
    %v1149 = vcombine.low %v810, %v818
    %v1150 = vcombine.low %v826, %v825
    %v1152 = vunpack.c.l.s4 1983009808
    %v1153 = vunpack.c.0.s8 %v1152
    %v1154 = vlaneseq
    %v1155 = vshrl.u32 %v1154, 7
    %v1156 = vsub.s32 %v1153, %v1155
    %v1157 = vrot.slane %v1149, %v1156
    %v1159 = vunpack.c.l.s4 1983009808
    %v1160 = vunpack.c.0.s8 %v1159
    %v1161 = vlaneseq
    %v1162 = vshrl.u32 %v1161, 7
    %v1163 = vsub.s32 %v1160, %v1162
    %v1164 = vrot.slane %v1150, %v1163
    %v1165 = vcombine.low %v1157, %v1164
    %v1166 = vcombine.low %v835, %v843
    %v1167 = vcombine.low %v842, %v844
    %v1169 = vunpack.c.l.s4 1983009808
    %v1170 = vunpack.c.0.s8 %v1169
    %v1171 = vlaneseq
    %v1172 = vshrl.u32 %v1171, 7
    %v1173 = vsub.s32 %v1170, %v1172
    %v1174 = vrot.slane %v1166, %v1173
    %v1176 = vunpack.c.l.s4 1983009808
    %v1177 = vunpack.c.0.s8 %v1176
    %v1178 = vlaneseq
    %v1179 = vshrl.u32 %v1178, 7
    %v1180 = vsub.s32 %v1177, %v1179
    %v1181 = vrot.slane %v1167, %v1180
    %v1182 = vcombine.low %v1174, %v1181
    %v1183 = vcombine.low %v860, %v859
    %v1184 = vcombine.low %v861, %v869
    %v1186 = vunpack.c.l.s4 1983009808
    %v1187 = vunpack.c.0.s8 %v1186
    %v1188 = vlaneseq
    %v1189 = vshrl.u32 %v1188, 7
    %v1190 = vsub.s32 %v1187, %v1189
    %v1191 = vrot.slane %v1183, %v1190
    %v1193 = vunpack.c.l.s4 1983009808
    %v1194 = vunpack.c.0.s8 %v1193
    %v1195 = vlaneseq
    %v1196 = vshrl.u32 %v1195, 7
    %v1197 = vsub.s32 %v1194, %v1196
    %v1198 = vrot.slane %v1184, %v1197
    %v1199 = vcombine.low %v1191, %v1198
    %v1217 = vunpack.c.l.s4 1983009808
    %v1218 = vunpack.c.0.s8 %v1217
    %v1219 = vlaneseq
    %v1220 = vshrl.u32 %v1219, 7
    %v1221 = vsub.s32 %v1218, %v1220
    %v1222 = vrot.slane %v512, %v1221
    %v1224 = vunpack.c.l.s4 1983009808
    %v1225 = vunpack.c.0.s8 %v1224
    %v1226 = vlaneseq
    %v1227 = vshrl.u32 %v1226, 7
    %v1228 = vsub.s32 %v1225, %v1227
    %v1229 = vrot.slane %v537, %v1228
    %v1231 = vunpack.c.l.s4 1983009808
    %v1232 = vunpack.c.0.s8 %v1231
    %v1233 = vlaneseq
    %v1234 = vshrl.u32 %v1233, 7
    %v1235 = vsub.s32 %v1232, %v1234
    %v1236 = vrot.slane %v553, %v1235
    %v1238 = vunpack.c.l.s4 1983009808
    %v1239 = vunpack.c.0.s8 %v1238
    %v1240 = vlaneseq
    %v1241 = vshrl.u32 %v1240, 7
    %v1242 = vsub.s32 %v1239, %v1241
    %v1243 = vrot.slane %v572, %v1242
    %v1245 = vunpack.c.l.s4 1983009808
    %v1246 = vunpack.c.0.s8 %v1245
    %v1247 = vlaneseq
    %v1248 = vshrl.u32 %v1247, 7
    %v1249 = vsub.s32 %v1246, %v1248
    %v1250 = vrot.slane %v597, %v1249
    %v1252 = vunpack.c.l.s4 1983009808
    %v1253 = vunpack.c.0.s8 %v1252
    %v1254 = vlaneseq
    %v1255 = vshrl.u32 %v1254, 7
    %v1256 = vsub.s32 %v1253, %v1255
    %v1257 = vrot.slane %v622, %v1256
    %v1259 = vunpack.c.l.s4 1983009808
    %v1260 = vunpack.c.0.s8 %v1259
    %v1261 = vlaneseq
    %v1262 = vshrl.u32 %v1261, 7
    %v1263 = vsub.s32 %v1260, %v1262
    %v1264 = vrot.slane %v638, %v1263
    %v1266 = vunpack.c.l.s4 1983009808
    %v1267 = vunpack.c.0.s8 %v1266
    %v1268 = vlaneseq
    %v1269 = vshrl.u32 %v1268, 7
    %v1270 = vsub.s32 %v1267, %v1269
    %v1271 = vrot.slane %v657, %v1270
    %v1273 = vunpack.c.l.s4 1983009808
    %v1274 = vunpack.c.0.s8 %v1273
    %v1275 = vlaneseq
    %v1276 = vshrl.u32 %v1275, 7
    %v1277 = vsub.s32 %v1274, %v1276
    %v1278 = vrot.slane %v723, %v1277
    %v1280 = vunpack.c.l.s4 1983009808
    %v1281 = vunpack.c.0.s8 %v1280
    %v1282 = vlaneseq
    %v1283 = vshrl.u32 %v1282, 7
    %v1284 = vsub.s32 %v1281, %v1283
    %v1285 = vrot.slane %v742, %v1284
    %v1287 = vunpack.c.l.s4 1983009808
    %v1288 = vunpack.c.0.s8 %v1287
    %v1289 = vlaneseq
    %v1290 = vshrl.u32 %v1289, 7
    %v1291 = vsub.s32 %v1288, %v1290
    %v1292 = vrot.slane %v767, %v1291
    %v1294 = vunpack.c.l.s4 1983009808
    %v1295 = vunpack.c.0.s8 %v1294
    %v1296 = vlaneseq
    %v1297 = vshrl.u32 %v1296, 7
    %v1298 = vsub.s32 %v1295, %v1297
    %v1299 = vrot.slane %v792, %v1298
    %v1301 = vunpack.c.l.s4 1983009808
    %v1302 = vunpack.c.0.s8 %v1301
    %v1303 = vlaneseq
    %v1304 = vshrl.u32 %v1303, 7
    %v1305 = vsub.s32 %v1302, %v1304
    %v1306 = vrot.slane %v808, %v1305
    %v1308 = vunpack.c.l.s4 1983009808
    %v1309 = vunpack.c.0.s8 %v1308
    %v1310 = vlaneseq
    %v1311 = vshrl.u32 %v1310, 7
    %v1312 = vsub.s32 %v1309, %v1311
    %v1313 = vrot.slane %v827, %v1312
    %v1315 = vunpack.c.l.s4 1983009808
    %v1316 = vunpack.c.0.s8 %v1315
    %v1317 = vlaneseq
    %v1318 = vshrl.u32 %v1317, 7
    %v1319 = vsub.s32 %v1316, %v1318
    %v1320 = vrot.slane %v852, %v1319
    %v1322 = vunpack.c.l.s4 1983009808
    %v1323 = vunpack.c.0.s8 %v1322
    %v1324 = vlaneseq
    %v1325 = vshrl.u32 %v1324, 7
    %v1326 = vsub.s32 %v1323, %v1325
    %v1327 = vrot.slane %v877, %v1326
    %vm1328 = vcmask 1046528
    %v1329 = vrot.slane %v944, 1
    %v1330 = vrot.slane %v1222, 1
    %v1331 = vsel %vm1328, %v1329, %v1330
    %v1332 = vrot.slane %v961, 1
    %v1333 = vrot.slane %v1229, 1
    %v1334 = vsel %vm1328, %v1332, %v1333
    %v1335 = vrot.slane %v978, 1
    %v1336 = vrot.slane %v1236, 1
    %v1337 = vsel %vm1328, %v1335, %v1336
    %v1338 = vrot.slane %v995, 1
    %v1339 = vrot.slane %v1243, 1
    %v1340 = vsel %vm1328, %v1338, %v1339
    %v1341 = vrot.slane %v1012, 1
    %v1342 = vrot.slane %v1250, 1
    %v1343 = vsel %vm1328, %v1341, %v1342
    %v1344 = vrot.slane %v1029, 1
    %v1345 = vrot.slane %v1257, 1
    %v1346 = vsel %vm1328, %v1344, %v1345
    %v1347 = vrot.slane %v1046, 1
    %v1348 = vrot.slane %v1264, 1
    %v1349 = vsel %vm1328, %v1347, %v1348
    %v1350 = vrot.slane %v1063, 1
    %v1351 = vrot.slane %v1271, 1
    %v1352 = vsel %vm1328, %v1350, %v1351
    %v1353 = vrot.slane %v1080, 1
    %v1354 = vrot.slane %v1278, 1
    %v1355 = vsel %vm1328, %v1353, %v1354
    %v1356 = vrot.slane %v1097, 1
    %v1357 = vrot.slane %v1285, 1
    %v1358 = vsel %vm1328, %v1356, %v1357
    %v1359 = vrot.slane %v1114, 1
    %v1360 = vrot.slane %v1292, 1
    %v1361 = vsel %vm1328, %v1359, %v1360
    %v1362 = vrot.slane %v1131, 1
    %v1363 = vrot.slane %v1299, 1
    %v1364 = vsel %vm1328, %v1362, %v1363
    %v1365 = vrot.slane %v1148, 1
    %v1366 = vrot.slane %v1306, 1
    %v1367 = vsel %vm1328, %v1365, %v1366
    %v1368 = vrot.slane %v1165, 1
    %v1369 = vrot.slane %v1313, 1
    %v1370 = vsel %vm1328, %v1368, %v1369
    %v1371 = vrot.slane %v1182, 1
    %v1372 = vrot.slane %v1320, 1
    %v1373 = vsel %vm1328, %v1371, %v1372
    %v1374 = vrot.slane %v1199, 1
    %v1375 = vrot.slane %v1327, 1
    %v1376 = vsel %vm1328, %v1374, %v1375
    %1377 = vrot.lane.b32.xlu0 %v1331, 12
    %v1378 = vpop.permute.xlu0 %1377
    %1379 = vrot.lane.b32.xlu0 %v1334, 12
    %v1380 = vpop.permute.xlu0 %1379
    %1381 = vrot.lane.b32.xlu0 %v1337, 12
    %v1382 = vpop.permute.xlu0 %1381
    %1383 = vrot.lane.b32.xlu0 %v1340, 12
    %v1384 = vpop.permute.xlu0 %1383
    %1385 = vrot.lane.b32.xlu0 %v1343, 12
    %v1386 = vpop.permute.xlu0 %1385
    %1387 = vrot.lane.b32.xlu0 %v1346, 12
    %v1388 = vpop.permute.xlu0 %1387
    %1389 = vrot.lane.b32.xlu0 %v1349, 12
    %v1390 = vpop.permute.xlu0 %1389
    %1391 = vrot.lane.b32.xlu0 %v1352, 12
    %v1392 = vpop.permute.xlu0 %1391
    %1393 = vrot.lane.b32.xlu0 %v1355, 12
    %v1394 = vpop.permute.xlu0 %1393
    %1395 = vrot.lane.b32.xlu0 %v1358, 12
    %v1396 = vpop.permute.xlu0 %1395
    %1397 = vrot.lane.b32.xlu0 %v1361, 12
    %v1398 = vpop.permute.xlu0 %1397
    %1399 = vrot.lane.b32.xlu0 %v1364, 12
    %v1400 = vpop.permute.xlu0 %1399
    %1401 = vrot.lane.b32.xlu0 %v1367, 12
    %v1402 = vpop.permute.xlu0 %1401
    %1403 = vrot.lane.b32.xlu0 %v1370, 12
    %v1404 = vpop.permute.xlu0 %1403
    %1405 = vrot.lane.b32.xlu0 %v1373, 12
    %v1406 = vpop.permute.xlu0 %1405
    %1407 = vrot.lane.b32.xlu0 %v1376, 12
    %v1408 = vpop.permute.xlu0 %1407
    %v1425 = vcombine.low %v503, %v502
    %v1426 = vcombine.low %v504, %v512
    %v1428 = vunpack.c.l.s4 1983009808
    %v1429 = vunpack.c.0.s8 %v1428
    %v1430 = vlaneseq
    %v1431 = vshrl.u32 %v1430, 7
    %v1432 = vsub.s32 %v1429, %v1431
    %v1433 = vrot.slane %v1425, %v1432
    %v1435 = vunpack.c.l.s4 1983009808
    %v1436 = vunpack.c.0.s8 %v1435
    %v1437 = vlaneseq
    %v1438 = vshrl.u32 %v1437, 7
    %v1439 = vsub.s32 %v1436, %v1438
    %v1440 = vrot.slane %v1426, %v1439
    %v1441 = vcombine.low %v1433, %v1440
    %v1442 = vcombine.low %v519, %v521
    %v1443 = vcombine.low %v529, %v537
    %v1445 = vunpack.c.l.s4 1983009808
    %v1446 = vunpack.c.0.s8 %v1445
    %v1447 = vlaneseq
    %v1448 = vshrl.u32 %v1447, 7
    %v1449 = vsub.s32 %v1446, %v1448
    %v1450 = vrot.slane %v1442, %v1449
    %v1452 = vunpack.c.l.s4 1983009808
    %v1453 = vunpack.c.0.s8 %v1452
    %v1454 = vlaneseq
    %v1455 = vshrl.u32 %v1454, 7
    %v1456 = vsub.s32 %v1453, %v1455
    %v1457 = vrot.slane %v1443, %v1456
    %v1458 = vcombine.low %v1450, %v1457
    %v1459 = vcombine.low %v538, %v546
    %v1460 = vcombine.low %v554, %v553
    %v1462 = vunpack.c.l.s4 1983009808
    %v1463 = vunpack.c.0.s8 %v1462
    %v1464 = vlaneseq
    %v1465 = vshrl.u32 %v1464, 7
    %v1466 = vsub.s32 %v1463, %v1465
    %v1467 = vrot.slane %v1459, %v1466
    %v1469 = vunpack.c.l.s4 1983009808
    %v1470 = vunpack.c.0.s8 %v1469
    %v1471 = vlaneseq
    %v1472 = vshrl.u32 %v1471, 7
    %v1473 = vsub.s32 %v1470, %v1472
    %v1474 = vrot.slane %v1460, %v1473
    %v1475 = vcombine.low %v1467, %v1474
    %v1476 = vcombine.low %v563, %v571
    %v1477 = vcombine.low %v570, %v572
    %v1479 = vunpack.c.l.s4 1983009808
    %v1480 = vunpack.c.0.s8 %v1479
    %v1481 = vlaneseq
    %v1482 = vshrl.u32 %v1481, 7
    %v1483 = vsub.s32 %v1480, %v1482
    %v1484 = vrot.slane %v1476, %v1483
    %v1486 = vunpack.c.l.s4 1983009808
    %v1487 = vunpack.c.0.s8 %v1486
    %v1488 = vlaneseq
    %v1489 = vshrl.u32 %v1488, 7
    %v1490 = vsub.s32 %v1487, %v1489
    %v1491 = vrot.slane %v1477, %v1490
    %v1492 = vcombine.low %v1484, %v1491
    %v1493 = vcombine.low %v588, %v587
    %v1494 = vcombine.low %v589, %v597
    %v1496 = vunpack.c.l.s4 1983009808
    %v1497 = vunpack.c.0.s8 %v1496
    %v1498 = vlaneseq
    %v1499 = vshrl.u32 %v1498, 7
    %v1500 = vsub.s32 %v1497, %v1499
    %v1501 = vrot.slane %v1493, %v1500
    %v1503 = vunpack.c.l.s4 1983009808
    %v1504 = vunpack.c.0.s8 %v1503
    %v1505 = vlaneseq
    %v1506 = vshrl.u32 %v1505, 7
    %v1507 = vsub.s32 %v1504, %v1506
    %v1508 = vrot.slane %v1494, %v1507
    %v1509 = vcombine.low %v1501, %v1508
    %v1510 = vcombine.low %v604, %v606
    %v1511 = vcombine.low %v614, %v622
    %v1513 = vunpack.c.l.s4 1983009808
    %v1514 = vunpack.c.0.s8 %v1513
    %v1515 = vlaneseq
    %v1516 = vshrl.u32 %v1515, 7
    %v1517 = vsub.s32 %v1514, %v1516
    %v1518 = vrot.slane %v1510, %v1517
    %v1520 = vunpack.c.l.s4 1983009808
    %v1521 = vunpack.c.0.s8 %v1520
    %v1522 = vlaneseq
    %v1523 = vshrl.u32 %v1522, 7
    %v1524 = vsub.s32 %v1521, %v1523
    %v1525 = vrot.slane %v1511, %v1524
    %v1526 = vcombine.low %v1518, %v1525
    %v1527 = vcombine.low %v623, %v631
    %v1528 = vcombine.low %v639, %v638
    %v1530 = vunpack.c.l.s4 1983009808
    %v1531 = vunpack.c.0.s8 %v1530
    %v1532 = vlaneseq
    %v1533 = vshrl.u32 %v1532, 7
    %v1534 = vsub.s32 %v1531, %v1533
    %v1535 = vrot.slane %v1527, %v1534
    %v1537 = vunpack.c.l.s4 1983009808
    %v1538 = vunpack.c.0.s8 %v1537
    %v1539 = vlaneseq
    %v1540 = vshrl.u32 %v1539, 7
    %v1541 = vsub.s32 %v1538, %v1540
    %v1542 = vrot.slane %v1528, %v1541
    %v1543 = vcombine.low %v1535, %v1542
    %v1544 = vcombine.low %v648, %v656
    %v1545 = vcombine.low %v655, %v657
    %v1547 = vunpack.c.l.s4 1983009808
    %v1548 = vunpack.c.0.s8 %v1547
    %v1549 = vlaneseq
    %v1550 = vshrl.u32 %v1549, 7
    %v1551 = vsub.s32 %v1548, %v1550
    %v1552 = vrot.slane %v1544, %v1551
    %v1554 = vunpack.c.l.s4 1983009808
    %v1555 = vunpack.c.0.s8 %v1554
    %v1556 = vlaneseq
    %v1557 = vshrl.u32 %v1556, 7
    %v1558 = vsub.s32 %v1555, %v1557
    %v1559 = vrot.slane %v1545, %v1558
    %v1560 = vcombine.low %v1552, %v1559
    %v1561 = vcombine.low %v708, %v716
    %v1562 = vcombine.low %v724, %v723
    %v1564 = vunpack.c.l.s4 1983009808
    %v1565 = vunpack.c.0.s8 %v1564
    %v1566 = vlaneseq
    %v1567 = vshrl.u32 %v1566, 7
    %v1568 = vsub.s32 %v1565, %v1567
    %v1569 = vrot.slane %v1561, %v1568
    %v1571 = vunpack.c.l.s4 1983009808
    %v1572 = vunpack.c.0.s8 %v1571
    %v1573 = vlaneseq
    %v1574 = vshrl.u32 %v1573, 7
    %v1575 = vsub.s32 %v1572, %v1574
    %v1576 = vrot.slane %v1562, %v1575
    %v1577 = vcombine.low %v1569, %v1576
    %v1578 = vcombine.low %v733, %v741
    %v1579 = vcombine.low %v740, %v742
    %v1581 = vunpack.c.l.s4 1983009808
    %v1582 = vunpack.c.0.s8 %v1581
    %v1583 = vlaneseq
    %v1584 = vshrl.u32 %v1583, 7
    %v1585 = vsub.s32 %v1582, %v1584
    %v1586 = vrot.slane %v1578, %v1585
    %v1588 = vunpack.c.l.s4 1983009808
    %v1589 = vunpack.c.0.s8 %v1588
    %v1590 = vlaneseq
    %v1591 = vshrl.u32 %v1590, 7
    %v1592 = vsub.s32 %v1589, %v1591
    %v1593 = vrot.slane %v1579, %v1592
    %v1594 = vcombine.low %v1586, %v1593
    %v1595 = vcombine.low %v758, %v757
    %v1596 = vcombine.low %v759, %v767
    %v1598 = vunpack.c.l.s4 1983009808
    %v1599 = vunpack.c.0.s8 %v1598
    %v1600 = vlaneseq
    %v1601 = vshrl.u32 %v1600, 7
    %v1602 = vsub.s32 %v1599, %v1601
    %v1603 = vrot.slane %v1595, %v1602
    %v1605 = vunpack.c.l.s4 1983009808
    %v1606 = vunpack.c.0.s8 %v1605
    %v1607 = vlaneseq
    %v1608 = vshrl.u32 %v1607, 7
    %v1609 = vsub.s32 %v1606, %v1608
    %v1610 = vrot.slane %v1596, %v1609
    %v1611 = vcombine.low %v1603, %v1610
    %v1612 = vcombine.low %v774, %v776
    %v1613 = vcombine.low %v784, %v792
    %v1615 = vunpack.c.l.s4 1983009808
    %v1616 = vunpack.c.0.s8 %v1615
    %v1617 = vlaneseq
    %v1618 = vshrl.u32 %v1617, 7
    %v1619 = vsub.s32 %v1616, %v1618
    %v1620 = vrot.slane %v1612, %v1619
    %v1622 = vunpack.c.l.s4 1983009808
    %v1623 = vunpack.c.0.s8 %v1622
    %v1624 = vlaneseq
    %v1625 = vshrl.u32 %v1624, 7
    %v1626 = vsub.s32 %v1623, %v1625
    %v1627 = vrot.slane %v1613, %v1626
    %v1628 = vcombine.low %v1620, %v1627
    %v1629 = vcombine.low %v793, %v801
    %v1630 = vcombine.low %v809, %v808
    %v1632 = vunpack.c.l.s4 1983009808
    %v1633 = vunpack.c.0.s8 %v1632
    %v1634 = vlaneseq
    %v1635 = vshrl.u32 %v1634, 7
    %v1636 = vsub.s32 %v1633, %v1635
    %v1637 = vrot.slane %v1629, %v1636
    %v1639 = vunpack.c.l.s4 1983009808
    %v1640 = vunpack.c.0.s8 %v1639
    %v1641 = vlaneseq
    %v1642 = vshrl.u32 %v1641, 7
    %v1643 = vsub.s32 %v1640, %v1642
    %v1644 = vrot.slane %v1630, %v1643
    %v1645 = vcombine.low %v1637, %v1644
    %v1646 = vcombine.low %v818, %v826
    %v1647 = vcombine.low %v825, %v827
    %v1649 = vunpack.c.l.s4 1983009808
    %v1650 = vunpack.c.0.s8 %v1649
    %v1651 = vlaneseq
    %v1652 = vshrl.u32 %v1651, 7
    %v1653 = vsub.s32 %v1650, %v1652
    %v1654 = vrot.slane %v1646, %v1653
    %v1656 = vunpack.c.l.s4 1983009808
    %v1657 = vunpack.c.0.s8 %v1656
    %v1658 = vlaneseq
    %v1659 = vshrl.u32 %v1658, 7
    %v1660 = vsub.s32 %v1657, %v1659
    %v1661 = vrot.slane %v1647, %v1660
    %v1662 = vcombine.low %v1654, %v1661
    %v1663 = vcombine.low %v843, %v842
    %v1664 = vcombine.low %v844, %v852
    %v1666 = vunpack.c.l.s4 1983009808
    %v1667 = vunpack.c.0.s8 %v1666
    %v1668 = vlaneseq
    %v1669 = vshrl.u32 %v1668, 7
    %v1670 = vsub.s32 %v1667, %v1669
    %v1671 = vrot.slane %v1663, %v1670
    %v1673 = vunpack.c.l.s4 1983009808
    %v1674 = vunpack.c.0.s8 %v1673
    %v1675 = vlaneseq
    %v1676 = vshrl.u32 %v1675, 7
    %v1677 = vsub.s32 %v1674, %v1676
    %v1678 = vrot.slane %v1664, %v1677
    %v1679 = vcombine.low %v1671, %v1678
    %v1680 = vcombine.low %v859, %v861
    %v1681 = vcombine.low %v869, %v877
    %v1683 = vunpack.c.l.s4 1983009808
    %v1684 = vunpack.c.0.s8 %v1683
    %v1685 = vlaneseq
    %v1686 = vshrl.u32 %v1685, 7
    %v1687 = vsub.s32 %v1684, %v1686
    %v1688 = vrot.slane %v1680, %v1687
    %v1690 = vunpack.c.l.s4 1983009808
    %v1691 = vunpack.c.0.s8 %v1690
    %v1692 = vlaneseq
    %v1693 = vshrl.u32 %v1692, 7
    %v1694 = vsub.s32 %v1691, %v1693
    %v1695 = vrot.slane %v1681, %v1694
    %v1696 = vcombine.low %v1688, %v1695
    %1697 = vrot.lane.b32.xlu0 %v1441, 24
    %v1698 = vpop.permute.xlu0 %1697
    %1699 = vrot.lane.b32.xlu0 %v1458, 24
    %v1700 = vpop.permute.xlu0 %1699
    %1701 = vrot.lane.b32.xlu0 %v1475, 24
    %v1702 = vpop.permute.xlu0 %1701
    %1703 = vrot.lane.b32.xlu0 %v1492, 24
    %v1704 = vpop.permute.xlu0 %1703
    %1705 = vrot.lane.b32.xlu0 %v1509, 24
    %v1706 = vpop.permute.xlu0 %1705
    %1707 = vrot.lane.b32.xlu0 %v1526, 24
    %v1708 = vpop.permute.xlu0 %1707
    %1709 = vrot.lane.b32.xlu0 %v1543, 24
    %v1710 = vpop.permute.xlu0 %1709
    %1711 = vrot.lane.b32.xlu0 %v1560, 24
    %v1712 = vpop.permute.xlu0 %1711
    %1713 = vrot.lane.b32.xlu0 %v1577, 24
    %v1714 = vpop.permute.xlu0 %1713
    %1715 = vrot.lane.b32.xlu0 %v1594, 24
    %v1716 = vpop.permute.xlu0 %1715
    %1717 = vrot.lane.b32.xlu0 %v1611, 24
    %v1718 = vpop.permute.xlu0 %1717
    %1719 = vrot.lane.b32.xlu0 %v1628, 24
    %v1720 = vpop.permute.xlu0 %1719
    %1721 = vrot.lane.b32.xlu0 %v1645, 24
    %v1722 = vpop.permute.xlu0 %1721
    %1723 = vrot.lane.b32.xlu0 %v1662, 24
    %v1724 = vpop.permute.xlu0 %1723
    %1725 = vrot.lane.b32.xlu0 %v1679, 24
    %v1726 = vpop.permute.xlu0 %1725
    %1727 = vrot.lane.b32.xlu0 %v1696, 24
    %v1728 = vpop.permute.xlu0 %1727
    %v1745 = vcombine.low %v665, %v673
    %v1746 = vcombine.low %v672, %v674
    %v1748 = vunpack.c.l.s4 1983009808
    %v1749 = vunpack.c.0.s8 %v1748
    %v1750 = vlaneseq
    %v1751 = vshrl.u32 %v1750, 7
    %v1752 = vsub.s32 %v1749, %v1751
    %v1753 = vrot.slane %v1745, %v1752
    %v1755 = vunpack.c.l.s4 1983009808
    %v1756 = vunpack.c.0.s8 %v1755
    %v1757 = vlaneseq
    %v1758 = vshrl.u32 %v1757, 7
    %v1759 = vsub.s32 %v1756, %v1758
    %v1760 = vrot.slane %v1746, %v1759
    %v1761 = vcombine.low %v1753, %v1760
    %v1762 = vcombine.low %v876, %v878
    %v1763 = vcombine.low %v886, %v894
    %v1765 = vunpack.c.l.s4 1983009808
    %v1766 = vunpack.c.0.s8 %v1765
    %v1767 = vlaneseq
    %v1768 = vshrl.u32 %v1767, 7
    %v1769 = vsub.s32 %v1766, %v1768
    %v1770 = vrot.slane %v1762, %v1769
    %v1772 = vunpack.c.l.s4 1983009808
    %v1773 = vunpack.c.0.s8 %v1772
    %v1774 = vlaneseq
    %v1775 = vshrl.u32 %v1774, 7
    %v1776 = vsub.s32 %v1773, %v1775
    %v1777 = vrot.slane %v1763, %v1776
    %v1778 = vcombine.low %v1770, %v1777
    %1779 = vrot.lane.b32.xlu0 %v961, 36
    %v1780 = vpop.permute.xlu0 %1779
    %1781 = vrot.lane.b32.xlu0 %v978, 36
    %v1782 = vpop.permute.xlu0 %1781
    %1783 = vrot.lane.b32.xlu0 %v995, 36
    %v1784 = vpop.permute.xlu0 %1783
    %1785 = vrot.lane.b32.xlu0 %v1012, 36
    %v1786 = vpop.permute.xlu0 %1785
    %1787 = vrot.lane.b32.xlu0 %v1029, 36
    %v1788 = vpop.permute.xlu0 %1787
    %1789 = vrot.lane.b32.xlu0 %v1046, 36
    %v1790 = vpop.permute.xlu0 %1789
    %1791 = vrot.lane.b32.xlu0 %v1063, 36
    %v1792 = vpop.permute.xlu0 %1791
    %1793 = vrot.lane.b32.xlu0 %v1761, 36
    %v1794 = vpop.permute.xlu0 %1793
    %1795 = vrot.lane.b32.xlu0 %v1097, 36
    %v1796 = vpop.permute.xlu0 %1795
    %1797 = vrot.lane.b32.xlu0 %v1114, 36
    %v1798 = vpop.permute.xlu0 %1797
    %1799 = vrot.lane.b32.xlu0 %v1131, 36
    %v1800 = vpop.permute.xlu0 %1799
    %1801 = vrot.lane.b32.xlu0 %v1148, 36
    %v1802 = vpop.permute.xlu0 %1801
    %1803 = vrot.lane.b32.xlu0 %v1165, 36
    %v1804 = vpop.permute.xlu0 %1803
    %1805 = vrot.lane.b32.xlu0 %v1182, 36
    %v1806 = vpop.permute.xlu0 %1805
    %1807 = vrot.lane.b32.xlu0 %v1199, 36
    %v1808 = vpop.permute.xlu0 %1807
    %1809 = vrot.lane.b32.xlu0 %v1778, 36
    %v1810 = vpop.permute.xlu0 %1809
    %v1828 = vunpack.c.l.s4 1983009808
    %v1829 = vunpack.c.0.s8 %v1828
    %v1830 = vlaneseq
    %v1831 = vshrl.u32 %v1830, 7
    %v1832 = vsub.s32 %v1829, %v1831
    %v1833 = vrot.slane %v682, %v1832
    %v1835 = vunpack.c.l.s4 1983009808
    %v1836 = vunpack.c.0.s8 %v1835
    %v1837 = vlaneseq
    %v1838 = vshrl.u32 %v1837, 7
    %v1839 = vsub.s32 %v1836, %v1838
    %v1840 = vrot.slane %v893, %v1839
    %v1841 = vrot.slane %v1761, 1
    %v1842 = vrot.slane %v1833, 1
    %v1843 = vsel %vm1328, %v1841, %v1842
    %v1844 = vrot.slane %v1778, 1
    %v1845 = vrot.slane %v1840, 1
    %v1846 = vsel %vm1328, %v1844, %v1845
    %1847 = vrot.lane.b32.xlu0 %v1334, 48
    %v1848 = vpop.permute.xlu0 %1847
    %1849 = vrot.lane.b32.xlu0 %v1337, 48
    %v1850 = vpop.permute.xlu0 %1849
    %1851 = vrot.lane.b32.xlu0 %v1340, 48
    %v1852 = vpop.permute.xlu0 %1851
    %1853 = vrot.lane.b32.xlu0 %v1343, 48
    %v1854 = vpop.permute.xlu0 %1853
    %1855 = vrot.lane.b32.xlu0 %v1346, 48
    %v1856 = vpop.permute.xlu0 %1855
    %1857 = vrot.lane.b32.xlu0 %v1349, 48
    %v1858 = vpop.permute.xlu0 %1857
    %1859 = vrot.lane.b32.xlu0 %v1352, 48
    %v1860 = vpop.permute.xlu0 %1859
    %1861 = vrot.lane.b32.xlu0 %v1843, 48
    %v1862 = vpop.permute.xlu0 %1861
    %1863 = vrot.lane.b32.xlu0 %v1358, 48
    %v1864 = vpop.permute.xlu0 %1863
    %1865 = vrot.lane.b32.xlu0 %v1361, 48
    %v1866 = vpop.permute.xlu0 %1865
    %1867 = vrot.lane.b32.xlu0 %v1364, 48
    %v1868 = vpop.permute.xlu0 %1867
    %1869 = vrot.lane.b32.xlu0 %v1367, 48
    %v1870 = vpop.permute.xlu0 %1869
    %1871 = vrot.lane.b32.xlu0 %v1370, 48
    %v1872 = vpop.permute.xlu0 %1871
    %1873 = vrot.lane.b32.xlu0 %v1373, 48
    %v1874 = vpop.permute.xlu0 %1873
    %1875 = vrot.lane.b32.xlu0 %v1376, 48
    %v1876 = vpop.permute.xlu0 %1875
    %1877 = vrot.lane.b32.xlu0 %v1846, 48
    %v1878 = vpop.permute.xlu0 %1877
    %v1895 = vcombine.low %v673, %v672
    %v1896 = vcombine.low %v674, %v682
    %v1898 = vunpack.c.l.s4 1983009808
    %v1899 = vunpack.c.0.s8 %v1898
    %v1900 = vlaneseq
    %v1901 = vshrl.u32 %v1900, 7
    %v1902 = vsub.s32 %v1899, %v1901
    %v1903 = vrot.slane %v1895, %v1902
    %v1905 = vunpack.c.l.s4 1983009808
    %v1906 = vunpack.c.0.s8 %v1905
    %v1907 = vlaneseq
    %v1908 = vshrl.u32 %v1907, 7
    %v1909 = vsub.s32 %v1906, %v1908
    %v1910 = vrot.slane %v1896, %v1909
    %v1911 = vcombine.low %v1903, %v1910
    %v1912 = vcombine.low %v878, %v886
    %v1913 = vcombine.low %v894, %v893
    %v1915 = vunpack.c.l.s4 1983009808
    %v1916 = vunpack.c.0.s8 %v1915
    %v1917 = vlaneseq
    %v1918 = vshrl.u32 %v1917, 7
    %v1919 = vsub.s32 %v1916, %v1918
    %v1920 = vrot.slane %v1912, %v1919
    %v1922 = vunpack.c.l.s4 1983009808
    %v1923 = vunpack.c.0.s8 %v1922
    %v1924 = vlaneseq
    %v1925 = vshrl.u32 %v1924, 7
    %v1926 = vsub.s32 %v1923, %v1925
    %v1927 = vrot.slane %v1913, %v1926
    %v1928 = vcombine.low %v1920, %v1927
    %1929 = vrot.lane.b32.xlu0 %v1458, 60
    %v1930 = vpop.permute.xlu0 %1929
    %1931 = vrot.lane.b32.xlu0 %v1475, 60
    %v1932 = vpop.permute.xlu0 %1931
    %1933 = vrot.lane.b32.xlu0 %v1492, 60
    %v1934 = vpop.permute.xlu0 %1933
    %1935 = vrot.lane.b32.xlu0 %v1509, 60
    %v1936 = vpop.permute.xlu0 %1935
    %1937 = vrot.lane.b32.xlu0 %v1526, 60
    %v1938 = vpop.permute.xlu0 %1937
    %1939 = vrot.lane.b32.xlu0 %v1543, 60
    %v1940 = vpop.permute.xlu0 %1939
    %1941 = vrot.lane.b32.xlu0 %v1560, 60
    %v1942 = vpop.permute.xlu0 %1941
    %1943 = vrot.lane.b32.xlu0 %v1911, 60
    %v1944 = vpop.permute.xlu0 %1943
    %1945 = vrot.lane.b32.xlu0 %v1594, 60
    %v1946 = vpop.permute.xlu0 %1945
    %1947 = vrot.lane.b32.xlu0 %v1611, 60
    %v1948 = vpop.permute.xlu0 %1947
    %1949 = vrot.lane.b32.xlu0 %v1628, 60
    %v1950 = vpop.permute.xlu0 %1949
    %1951 = vrot.lane.b32.xlu0 %v1645, 60
    %v1952 = vpop.permute.xlu0 %1951
    %1953 = vrot.lane.b32.xlu0 %v1662, 60
    %v1954 = vpop.permute.xlu0 %1953
    %1955 = vrot.lane.b32.xlu0 %v1679, 60
    %v1956 = vpop.permute.xlu0 %1955
    %1957 = vrot.lane.b32.xlu0 %v1696, 60
    %v1958 = vpop.permute.xlu0 %1957
    %1959 = vrot.lane.b32.xlu0 %v1928, 60
    %v1960 = vpop.permute.xlu0 %1959
    %v1977 = vcombine.low %v690, %v689
    %v1978 = vcombine.low %v691, %v699
    %v1980 = vunpack.c.l.s4 1983009808
    %v1981 = vunpack.c.0.s8 %v1980
    %v1982 = vlaneseq
    %v1983 = vshrl.u32 %v1982, 7
    %v1984 = vsub.s32 %v1981, %v1983
    %v1985 = vrot.slane %v1977, %v1984
    %v1987 = vunpack.c.l.s4 1983009808
    %v1988 = vunpack.c.0.s8 %v1987
    %v1989 = vlaneseq
    %v1990 = vshrl.u32 %v1989, 7
    %v1991 = vsub.s32 %v1988, %v1990
    %v1992 = vrot.slane %v1978, %v1991
    %v1993 = vcombine.low %v1985, %v1992
    %v1994 = vcombine.low %v895, %v903
    %v1995 = vcombine.low %v911, %v910
    %v1997 = vunpack.c.l.s4 1983009808
    %v1998 = vunpack.c.0.s8 %v1997
    %v1999 = vlaneseq
    %v2000 = vshrl.u32 %v1999, 7
    %v2001 = vsub.s32 %v1998, %v2000
    %v2002 = vrot.slane %v1994, %v2001
    %v2004 = vunpack.c.l.s4 1983009808
    %v2005 = vunpack.c.0.s8 %v2004
    %v2006 = vlaneseq
    %v2007 = vshrl.u32 %v2006, 7
    %v2008 = vsub.s32 %v2005, %v2007
    %v2009 = vrot.slane %v1995, %v2008
    %v2010 = vcombine.low %v2002, %v2009
    %2011 = vrot.lane.b32.xlu0 %v978, 72
    %v2012 = vpop.permute.xlu0 %2011
    %2013 = vrot.lane.b32.xlu0 %v995, 72
    %v2014 = vpop.permute.xlu0 %2013
    %2015 = vrot.lane.b32.xlu0 %v1012, 72
    %v2016 = vpop.permute.xlu0 %2015
    %2017 = vrot.lane.b32.xlu0 %v1029, 72
    %v2018 = vpop.permute.xlu0 %2017
    %2019 = vrot.lane.b32.xlu0 %v1046, 72
    %v2020 = vpop.permute.xlu0 %2019
    %2021 = vrot.lane.b32.xlu0 %v1063, 72
    %v2022 = vpop.permute.xlu0 %2021
    %2023 = vrot.lane.b32.xlu0 %v1761, 72
    %v2024 = vpop.permute.xlu0 %2023
    %2025 = vrot.lane.b32.xlu0 %v1993, 72
    %v2026 = vpop.permute.xlu0 %2025
    %2027 = vrot.lane.b32.xlu0 %v1114, 72
    %v2028 = vpop.permute.xlu0 %2027
    %2029 = vrot.lane.b32.xlu0 %v1131, 72
    %v2030 = vpop.permute.xlu0 %2029
    %2031 = vrot.lane.b32.xlu0 %v1148, 72
    %v2032 = vpop.permute.xlu0 %2031
    %2033 = vrot.lane.b32.xlu0 %v1165, 72
    %v2034 = vpop.permute.xlu0 %2033
    %2035 = vrot.lane.b32.xlu0 %v1182, 72
    %v2036 = vpop.permute.xlu0 %2035
    %2037 = vrot.lane.b32.xlu0 %v1199, 72
    %v2038 = vpop.permute.xlu0 %2037
    %2039 = vrot.lane.b32.xlu0 %v1778, 72
    %v2040 = vpop.permute.xlu0 %2039
    %2041 = vrot.lane.b32.xlu0 %v2010, 72
    %v2042 = vpop.permute.xlu0 %2041
    %v2060 = vunpack.c.l.s4 1983009808
    %v2061 = vunpack.c.0.s8 %v2060
    %v2062 = vlaneseq
    %v2063 = vshrl.u32 %v2062, 7
    %v2064 = vsub.s32 %v2061, %v2063
    %v2065 = vrot.slane %v707, %v2064
    %v2067 = vunpack.c.l.s4 1983009808
    %v2068 = vunpack.c.0.s8 %v2067
    %v2069 = vlaneseq
    %v2070 = vshrl.u32 %v2069, 7
    %v2071 = vsub.s32 %v2068, %v2070
    %v2072 = vrot.slane %v912, %v2071
    %v2073 = vrot.slane %v1993, 1
    %v2074 = vrot.slane %v2065, 1
    %v2075 = vsel %vm1328, %v2073, %v2074
    %v2076 = vrot.slane %v2010, 1
    %v2077 = vrot.slane %v2072, 1
    %v2078 = vsel %vm1328, %v2076, %v2077
    %2079 = vrot.lane.b32.xlu0 %v1337, 84
    %v2080 = vpop.permute.xlu0 %2079
    %2081 = vrot.lane.b32.xlu0 %v1340, 84
    %v2082 = vpop.permute.xlu0 %2081
    %2083 = vrot.lane.b32.xlu0 %v1343, 84
    %v2084 = vpop.permute.xlu0 %2083
    %2085 = vrot.lane.b32.xlu0 %v1346, 84
    %v2086 = vpop.permute.xlu0 %2085
    %2087 = vrot.lane.b32.xlu0 %v1349, 84
    %v2088 = vpop.permute.xlu0 %2087
    %2089 = vrot.lane.b32.xlu0 %v1352, 84
    %v2090 = vpop.permute.xlu0 %2089
    %2091 = vrot.lane.b32.xlu0 %v1843, 84
    %v2092 = vpop.permute.xlu0 %2091
    %2093 = vrot.lane.b32.xlu0 %v2075, 84
    %v2094 = vpop.permute.xlu0 %2093
    %2095 = vrot.lane.b32.xlu0 %v1361, 84
    %v2096 = vpop.permute.xlu0 %2095
    %2097 = vrot.lane.b32.xlu0 %v1364, 84
    %v2098 = vpop.permute.xlu0 %2097
    %2099 = vrot.lane.b32.xlu0 %v1367, 84
    %v2100 = vpop.permute.xlu0 %2099
    %2101 = vrot.lane.b32.xlu0 %v1370, 84
    %v2102 = vpop.permute.xlu0 %2101
    %2103 = vrot.lane.b32.xlu0 %v1373, 84
    %v2104 = vpop.permute.xlu0 %2103
    %2105 = vrot.lane.b32.xlu0 %v1376, 84
    %v2106 = vpop.permute.xlu0 %2105
    %2107 = vrot.lane.b32.xlu0 %v1846, 84
    %v2108 = vpop.permute.xlu0 %2107
    %2109 = vrot.lane.b32.xlu0 %v2078, 84
    %v2110 = vpop.permute.xlu0 %2109
    %v2127 = vcombine.low %v689, %v691
    %v2128 = vcombine.low %v699, %v707
    %v2130 = vunpack.c.l.s4 1983009808
    %v2131 = vunpack.c.0.s8 %v2130
    %v2132 = vlaneseq
    %v2133 = vshrl.u32 %v2132, 7
    %v2134 = vsub.s32 %v2131, %v2133
    %v2135 = vrot.slane %v2127, %v2134
    %v2137 = vunpack.c.l.s4 1983009808
    %v2138 = vunpack.c.0.s8 %v2137
    %v2139 = vlaneseq
    %v2140 = vshrl.u32 %v2139, 7
    %v2141 = vsub.s32 %v2138, %v2140
    %v2142 = vrot.slane %v2128, %v2141
    %v2143 = vcombine.low %v2135, %v2142
    %v2144 = vcombine.low %v903, %v911
    %v2145 = vcombine.low %v910, %v912
    %v2147 = vunpack.c.l.s4 1983009808
    %v2148 = vunpack.c.0.s8 %v2147
    %v2149 = vlaneseq
    %v2150 = vshrl.u32 %v2149, 7
    %v2151 = vsub.s32 %v2148, %v2150
    %v2152 = vrot.slane %v2144, %v2151
    %v2154 = vunpack.c.l.s4 1983009808
    %v2155 = vunpack.c.0.s8 %v2154
    %v2156 = vlaneseq
    %v2157 = vshrl.u32 %v2156, 7
    %v2158 = vsub.s32 %v2155, %v2157
    %v2159 = vrot.slane %v2145, %v2158
    %v2160 = vcombine.low %v2152, %v2159
    %2161 = vrot.lane.b32.xlu0 %v1475, 96
    %v2162 = vpop.permute.xlu0 %2161
    %2163 = vrot.lane.b32.xlu0 %v1492, 96
    %v2164 = vpop.permute.xlu0 %2163
    %2165 = vrot.lane.b32.xlu0 %v1509, 96
    %v2166 = vpop.permute.xlu0 %2165
    %2167 = vrot.lane.b32.xlu0 %v1526, 96
    %v2168 = vpop.permute.xlu0 %2167
    %2169 = vrot.lane.b32.xlu0 %v1543, 96
    %v2170 = vpop.permute.xlu0 %2169
    %2171 = vrot.lane.b32.xlu0 %v1560, 96
    %v2172 = vpop.permute.xlu0 %2171
    %2173 = vrot.lane.b32.xlu0 %v1911, 96
    %v2174 = vpop.permute.xlu0 %2173
    %2175 = vrot.lane.b32.xlu0 %v2143, 96
    %v2176 = vpop.permute.xlu0 %2175
    %2177 = vrot.lane.b32.xlu0 %v1611, 96
    %v2178 = vpop.permute.xlu0 %2177
    %2179 = vrot.lane.b32.xlu0 %v1628, 96
    %v2180 = vpop.permute.xlu0 %2179
    %2181 = vrot.lane.b32.xlu0 %v1645, 96
    %v2182 = vpop.permute.xlu0 %2181
    %2183 = vrot.lane.b32.xlu0 %v1662, 96
    %v2184 = vpop.permute.xlu0 %2183
    %2185 = vrot.lane.b32.xlu0 %v1679, 96
    %v2186 = vpop.permute.xlu0 %2185
    %2187 = vrot.lane.b32.xlu0 %v1696, 96
    %v2188 = vpop.permute.xlu0 %2187
    %2189 = vrot.lane.b32.xlu0 %v1928, 96
    %v2190 = vpop.permute.xlu0 %2189
    %2191 = vrot.lane.b32.xlu0 %v2160, 96
    %v2192 = vpop.permute.xlu0 %2191
    %vm2209 = vcmask 97280
    %v2210 = vsel %vm2209, %v944, %v1378
    %v2211 = vsel %vm2209, %v961, %v1380
    %v2212 = vsel %vm2209, %v978, %v1382
    %v2213 = vsel %vm2209, %v995, %v1384
    %v2214 = vsel %vm2209, %v1012, %v1386
    %v2215 = vsel %vm2209, %v1029, %v1388
    %v2216 = vsel %vm2209, %v1046, %v1390
    %v2217 = vsel %vm2209, %v1063, %v1392
    %v2218 = vsel %vm2209, %v1080, %v1394
    %v2219 = vsel %vm2209, %v1097, %v1396
    %v2220 = vsel %vm2209, %v1114, %v1398
    %v2221 = vsel %vm2209, %v1131, %v1400
    %v2222 = vsel %vm2209, %v1148, %v1402
    %v2223 = vsel %vm2209, %v1165, %v1404
    %v2224 = vsel %vm2209, %v1182, %v1406
    %v2225 = vsel %vm2209, %v1199, %v1408
    %vm2226 = vcmask 195584
    %v2227 = vsel %vm2226, %v2210, %v1698
    %v2228 = vsel %vm2226, %v2211, %v1700
    %v2229 = vsel %vm2226, %v2212, %v1702
    %v2230 = vsel %vm2226, %v2213, %v1704
    %v2231 = vsel %vm2226, %v2214, %v1706
    %v2232 = vsel %vm2226, %v2215, %v1708
    %v2233 = vsel %vm2226, %v2216, %v1710
    %v2234 = vsel %vm2226, %v2217, %v1712
    %v2235 = vsel %vm2226, %v2218, %v1714
    %v2236 = vsel %vm2226, %v2219, %v1716
    %v2237 = vsel %vm2226, %v2220, %v1718
    %v2238 = vsel %vm2226, %v2221, %v1720
    %v2239 = vsel %vm2226, %v2222, %v1722
    %v2240 = vsel %vm2226, %v2223, %v1724
    %v2241 = vsel %vm2226, %v2224, %v1726
    %v2242 = vsel %vm2226, %v2225, %v1728
    %vm2243 = vcmask 293888
    %v2244 = vsel %vm2243, %v2227, %v1780
    %v2245 = vsel %vm2243, %v2228, %v1782
    %v2246 = vsel %vm2243, %v2229, %v1784
    %v2247 = vsel %vm2243, %v2230, %v1786
    %v2248 = vsel %vm2243, %v2231, %v1788
    %v2249 = vsel %vm2243, %v2232, %v1790
    %v2250 = vsel %vm2243, %v2233, %v1792
    %v2251 = vsel %vm2243, %v2234, %v1794
    %v2252 = vsel %vm2243, %v2235, %v1796
    %v2253 = vsel %vm2243, %v2236, %v1798
    %v2254 = vsel %vm2243, %v2237, %v1800
    %v2255 = vsel %vm2243, %v2238, %v1802
    %v2256 = vsel %vm2243, %v2239, %v1804
    %v2257 = vsel %vm2243, %v2240, %v1806
    %v2258 = vsel %vm2243, %v2241, %v1808
    %v2259 = vsel %vm2243, %v2242, %v1810
    %vm2260 = vcmask 392192
    %v2261 = vsel %vm2260, %v2244, %v1848
    %v2262 = vsel %vm2260, %v2245, %v1850
    %v2263 = vsel %vm2260, %v2246, %v1852
    %v2264 = vsel %vm2260, %v2247, %v1854
    %v2265 = vsel %vm2260, %v2248, %v1856
    %v2266 = vsel %vm2260, %v2249, %v1858
    %v2267 = vsel %vm2260, %v2250, %v1860
    %v2268 = vsel %vm2260, %v2251, %v1862
    %v2269 = vsel %vm2260, %v2252, %v1864
    %v2270 = vsel %vm2260, %v2253, %v1866
    %v2271 = vsel %vm2260, %v2254, %v1868
    %v2272 = vsel %vm2260, %v2255, %v1870
    %v2273 = vsel %vm2260, %v2256, %v1872
    %v2274 = vsel %vm2260, %v2257, %v1874
    %v2275 = vsel %vm2260, %v2258, %v1876
    %v2276 = vsel %vm2260, %v2259, %v1878
    %vm2277 = vcmask 490496
    %v2278 = vsel %vm2277, %v2261, %v1930
    %v2279 = vsel %vm2277, %v2262, %v1932
    %v2280 = vsel %vm2277, %v2263, %v1934
    %v2281 = vsel %vm2277, %v2264, %v1936
    %v2282 = vsel %vm2277, %v2265, %v1938
    %v2283 = vsel %vm2277, %v2266, %v1940
    %v2284 = vsel %vm2277, %v2267, %v1942
    %v2285 = vsel %vm2277, %v2268, %v1944
    %v2286 = vsel %vm2277, %v2269, %v1946
    %v2287 = vsel %vm2277, %v2270, %v1948
    %v2288 = vsel %vm2277, %v2271, %v1950
    %v2289 = vsel %vm2277, %v2272, %v1952
    %v2290 = vsel %vm2277, %v2273, %v1954
    %v2291 = vsel %vm2277, %v2274, %v1956
    %v2292 = vsel %vm2277, %v2275, %v1958
    %v2293 = vsel %vm2277, %v2276, %v1960
    %vm2294 = vcmask 588800
    %v2295 = vsel %vm2294, %v2278, %v2012
    %v2296 = vsel %vm2294, %v2279, %v2014
    %v2297 = vsel %vm2294, %v2280, %v2016
    %v2298 = vsel %vm2294, %v2281, %v2018
    %v2299 = vsel %vm2294, %v2282, %v2020
    %v2300 = vsel %vm2294, %v2283, %v2022
    %v2301 = vsel %vm2294, %v2284, %v2024
    %v2302 = vsel %vm2294, %v2285, %v2026
    %v2303 = vsel %vm2294, %v2286, %v2028
    %v2304 = vsel %vm2294, %v2287, %v2030
    %v2305 = vsel %vm2294, %v2288, %v2032
    %v2306 = vsel %vm2294, %v2289, %v2034
    %v2307 = vsel %vm2294, %v2290, %v2036
    %v2308 = vsel %vm2294, %v2291, %v2038
    %v2309 = vsel %vm2294, %v2292, %v2040
    %v2310 = vsel %vm2294, %v2293, %v2042
    %vm2311 = vcmask 687104
    %v2312 = vsel %vm2311, %v2295, %v2080
    %v2313 = vsel %vm2311, %v2296, %v2082
    %v2314 = vsel %vm2311, %v2297, %v2084
    %v2315 = vsel %vm2311, %v2298, %v2086
    %v2316 = vsel %vm2311, %v2299, %v2088
    %v2317 = vsel %vm2311, %v2300, %v2090
    %v2318 = vsel %vm2311, %v2301, %v2092
    %v2319 = vsel %vm2311, %v2302, %v2094
    %v2320 = vsel %vm2311, %v2303, %v2096
    %v2321 = vsel %vm2311, %v2304, %v2098
    %v2322 = vsel %vm2311, %v2305, %v2100
    %v2323 = vsel %vm2311, %v2306, %v2102
    %v2324 = vsel %vm2311, %v2307, %v2104
    %v2325 = vsel %vm2311, %v2308, %v2106
    %v2326 = vsel %vm2311, %v2309, %v2108
    %v2327 = vsel %vm2311, %v2310, %v2110
    %vm2328 = vcmask 785408
    %v2329 = vsel %vm2328, %v2312, %v2162
    %v2330 = vsel %vm2328, %v2313, %v2164
    %v2331 = vsel %vm2328, %v2314, %v2166
    %v2332 = vsel %vm2328, %v2315, %v2168
    %v2333 = vsel %vm2328, %v2316, %v2170
    %v2334 = vsel %vm2328, %v2317, %v2172
    %v2335 = vsel %vm2328, %v2318, %v2174
    %v2336 = vsel %vm2328, %v2319, %v2176
    %v2337 = vsel %vm2328, %v2320, %v2178
    %v2338 = vsel %vm2328, %v2321, %v2180
    %v2339 = vsel %vm2328, %v2322, %v2182
    %v2340 = vsel %vm2328, %v2323, %v2184
    %v2341 = vsel %vm2328, %v2324, %v2186
    %v2342 = vsel %vm2328, %v2325, %v2188
    %v2343 = vsel %vm2328, %v2326, %v2190
    %v2344 = vsel %vm2328, %v2327, %v2192
    %v2346 = vlaneseq
    %v2347 = vshrl.u32 %v2346, 7
    %v2348 = vsub.s32 0, %v2347
    %v2349 = vrot.slane %v927, %v2348
    %vm2351 = vcmask 883712
    %v2353 = vsel %vm2351, %v2329, 0
    %v2356 = vsel %vm2351, %v2330, 0
    %v2359 = vsel %vm2351, %v2331, 0
    %v2362 = vsel %vm2351, %v2332, 0
    %v2365 = vsel %vm2351, %v2333, 0
    %v2368 = vsel %vm2351, %v2334, 0
    %v2371 = vsel %vm2351, %v2335, 0
    %v2374 = vsel %vm2351, %v2336, 0
    %v2377 = vsel %vm2351, %v2337, 0
    %v2380 = vsel %vm2351, %v2338, 0
    %v2383 = vsel %vm2351, %v2339, 0
    %v2386 = vsel %vm2351, %v2340, 0
    %v2389 = vsel %vm2351, %v2341, 0
    %v2392 = vsel %vm2351, %v2342, 0
    %v2395 = vsel %vm2351, %v2343, 0
    %v2398 = vsel %vm2351, %v2344, 0
    %vm2400 = vcmask 1043456
    %v2402 = vsel %vm2400, %v926, 0
    %2404 = vmatprep.subr.mxu0 0.0
    %2405 = vmatpush1.msra.mxu0 %v913
    %2406 = vmatprep.subr.mxu0 0.0
    %2407 = vmatpush1.msra.mxu0 %v914
    %2408 = vmatprep.subr.mxu0 0.0
    %2409 = vmatpush1.msra.mxu0 %v915
    %2410 = vmatprep.subr.mxu0 0.0
    %2411 = vmatpush1.msra.mxu0 %v916
    %2412 = vmatprep.subr.mxu0 0.0
    %2413 = vmatpush1.msra.mxu0 %v917
    %2414 = vmatprep.subr.mxu0 0.0
    %2415 = vmatpush1.msra.mxu0 %v918
    %2416 = vmatprep.subr.mxu0 0.0
    %2417 = vmatpush1.msra.mxu0 %v919
    %2418 = vmatprep.subr.mxu0 0.0
    %2419 = vmatpush1.msra.mxu0 %v920
    %2420 = vmatprep.subr.mxu0 0.0
    %2421 = vmatpush1.msra.mxu0 %v921
    %2422 = vmatprep.subr.mxu0 0.0
    %2423 = vmatpush1.msra.mxu0 %v922
    %2424 = vmatprep.subr.mxu0 0.0
    %2425 = vmatpush1.msra.mxu0 %v923
    %2426 = vmatprep.subr.mxu0 0.0
    %2427 = vmatpush1.msra.mxu0 %v924
    %2428 = vmatprep.subr.mxu0 0.0
    %2429 = vmatpush1.msra.mxu0 %v925
    %2430 = vmatprep.subr.mxu0 0.0
    %2431 = vmatpush1.msra.mxu0 %v2402
    %2432 = vmatprep.subr.mxu0 0.0
    %2433 = vmatpush1.msra.mxu0 0.0
    %2434 = vmatprep.subr.mxu0 0.0
    %2435 = vmatpush1.msra.mxu0 0.0
    %2436 = vmatprep.subr.mxu0 0.0
    %2437 = vmatpush1.msra.mxu0 0.0
    %2438 = vmatprep.subr.mxu0 0.0
    %2439 = vmatpush1.msra.mxu0 0.0
    %2440 = vmatprep.subr.mxu0 0.0
    %2441 = vmatpush1.msra.mxu0 0.0
    %2442 = vmatprep.subr.mxu0 0.0
    %2443 = vmatpush1.msra.mxu0 0.0
    %2444 = vmatprep.subr.mxu0 0.0
    %2445 = vmatpush1.msra.mxu0 0.0
    %2446 = vmatprep.subr.mxu0 0.0
    %2447 = vmatpush1.msra.mxu0 0.0
    %2448 = vmatprep.subr.mxu0 0.0
    %2449 = vmatpush1.msra.mxu0 0.0
    %2450 = vmatprep.subr.mxu0 0.0
    %2451 = vmatpush1.msra.mxu0 0.0
    %2452 = vmatprep.subr.mxu0 0.0
    %2453 = vmatpush1.msra.mxu0 0.0
    %2454 = vmatprep.subr.mxu0 0.0
    %2455 = vmatpush1.msra.mxu0 0.0
    %2456 = vmatprep.subr.mxu0 0.0
    %2457 = vmatpush1.msra.mxu0 0.0
    %2458 = vmatprep.subr.mxu0 0.0
    %2459 = vmatpush1.msra.mxu0 0.0
    %2460 = vmatprep.subr.mxu0 0.0
    %2461 = vmatpush1.msra.mxu0 0.0
    %2462 = vmatprep.subr.mxu0 0.0
    %2463 = vmatpush1.msra.mxu0 0.0
    %2464 = vmatprep.subr.mxu0 0.0
    %2465 = vmatpush1.msra.mxu0 0.0
    %2466 = vmatprep.subr.mxu0 0.0
    %2467 = vmatpush1.msra.mxu0 0.0
    %2468 = vmatprep.mubr.f32.mxu0 0.0
    %2469 = vmatmul.mubr.f32.gmra.mrb[0].mxu0 %v2353
    %v2470 = vpop.f32.mrb[0].mxu0
    %v2471 = vadd.f32 %v2349, %v2470
    %v2472 = vpop.f32.mrb[0].mxu0
    %2473 = vmatprep.mubr.f32.mxu0 0.0
    %2474 = vmatmul.mubr.f32.gmra.mrb[0].mxu0 %v2356
    %v2475 = vpop.f32.mrb[0].mxu0
    %v2476 = vadd.f32 %v2349, %v2475
    %v2477 = vpop.f32.mrb[0].mxu0
    %2478 = vmatprep.mubr.f32.mxu0 0.0
    %2479 = vmatmul.mubr.f32.gmra.mrb[0].mxu0 %v2359
    %v2480 = vpop.f32.mrb[0].mxu0
    %v2481 = vadd.f32 %v2349, %v2480
    %v2482 = vpop.f32.mrb[0].mxu0
    %2483 = vmatprep.mubr.f32.mxu0 0.0
    %2484 = vmatmul.mubr.f32.gmra.mrb[0].mxu0 %v2362
    %v2485 = vpop.f32.mrb[0].mxu0
    %v2486 = vadd.f32 %v2349, %v2485
    %v2487 = vpop.f32.mrb[0].mxu0
    %2488 = vmatprep.mubr.f32.mxu0 0.0
    %2489 = vmatmul.mubr.f32.gmra.mrb[0].mxu0 %v2365
    %v2490 = vpop.f32.mrb[0].mxu0
    %v2491 = vadd.f32 %v2349, %v2490
    %v2492 = vpop.f32.mrb[0].mxu0
    %2493 = vmatprep.mubr.f32.mxu0 0.0
    %2494 = vmatmul.mubr.f32.gmra.mrb[0].mxu0 %v2368
    %v2495 = vpop.f32.mrb[0].mxu0
    %v2496 = vadd.f32 %v2349, %v2495
    %v2497 = vpop.f32.mrb[0].mxu0
    %2498 = vmatprep.mubr.f32.mxu0 0.0
    %2499 = vmatmul.mubr.f32.gmra.mrb[0].mxu0 %v2371
    %v2500 = vpop.f32.mrb[0].mxu0
    %v2501 = vadd.f32 %v2349, %v2500
    %v2502 = vpop.f32.mrb[0].mxu0
    %2503 = vmatprep.mubr.f32.mxu0 0.0
    %2504 = vmatmul.mubr.f32.gmra.mrb[0].mxu0 %v2374
    %v2505 = vpop.f32.mrb[0].mxu0
    %v2506 = vadd.f32 %v2349, %v2505
    %v2507 = vpop.f32.mrb[0].mxu0
    %2508 = vmatprep.mubr.f32.mxu0 0.0
    %2509 = vmatmul.mubr.f32.gmra.mrb[0].mxu0 %v2377
    %v2510 = vpop.f32.mrb[0].mxu0
    %v2511 = vadd.f32 %v2349, %v2510
    %v2512 = vpop.f32.mrb[0].mxu0
    %2513 = vmatprep.mubr.f32.mxu0 0.0
    %2514 = vmatmul.mubr.f32.gmra.mrb[0].mxu0 %v2380
    %v2515 = vpop.f32.mrb[0].mxu0
    %v2516 = vadd.f32 %v2349, %v2515
    %v2517 = vpop.f32.mrb[0].mxu0
    %2518 = vmatprep.mubr.f32.mxu0 0.0
    %2519 = vmatmul.mubr.f32.gmra.mrb[0].mxu0 %v2383
    %v2520 = vpop.f32.mrb[0].mxu0
    %v2521 = vadd.f32 %v2349, %v2520
    %v2522 = vpop.f32.mrb[0].mxu0
    %2523 = vmatprep.mubr.f32.mxu0 0.0
    %2524 = vmatmul.mubr.f32.gmra.mrb[0].mxu0 %v2386
    %v2525 = vpop.f32.mrb[0].mxu0
    %v2526 = vadd.f32 %v2349, %v2525
    %v2527 = vpop.f32.mrb[0].mxu0
    %2528 = vmatprep.mubr.f32.mxu0 0.0
    %2529 = vmatmul.mubr.f32.gmra.mrb[0].mxu0 %v2389
    %v2530 = vpop.f32.mrb[0].mxu0
    %v2531 = vadd.f32 %v2349, %v2530
    %v2532 = vpop.f32.mrb[0].mxu0
    %2533 = vmatprep.mubr.f32.mxu0 0.0
    %2534 = vmatmul.mubr.f32.gmra.mrb[0].mxu0 %v2392
    %v2535 = vpop.f32.mrb[0].mxu0
    %v2536 = vadd.f32 %v2349, %v2535
    %v2537 = vpop.f32.mrb[0].mxu0
    %2538 = vmatprep.mubr.f32.mxu0 0.0
    %2539 = vmatmul.mubr.f32.gmra.mrb[0].mxu0 %v2395
    %v2540 = vpop.f32.mrb[0].mxu0
    %v2541 = vadd.f32 %v2349, %v2540
    %v2542 = vpop.f32.mrb[0].mxu0
    %2543 = vmatprep.mubr.f32.mxu0 0.0
    %2544 = vmatmul.mubr.f32.gmra.mrb[0].mxu0 %v2398
    %v2545 = vpop.f32.mrb[0].mxu0
    %v2546 = vadd.f32 %v2349, %v2545
    %v2547 = vpop.f32.mrb[0].mxu0
    %2548 = vdwg.mxu0
    %v2549 = vmax.f32 %v2471, 0.0
    %v2550 = vmax.f32 %v2476, 0.0
    %v2551 = vmax.f32 %v2481, 0.0
    %v2552 = vmax.f32 %v2486, 0.0
    %v2553 = vmax.f32 %v2491, 0.0
    %v2554 = vmax.f32 %v2496, 0.0
    %v2555 = vmax.f32 %v2501, 0.0
    %v2556 = vmax.f32 %v2506, 0.0
    %v2557 = vmax.f32 %v2511, 0.0
    %v2558 = vmax.f32 %v2516, 0.0
    %v2559 = vmax.f32 %v2521, 0.0
    %v2560 = vmax.f32 %v2526, 0.0
    %v2561 = vmax.f32 %v2531, 0.0
    %v2562 = vmax.f32 %v2536, 0.0
    %v2563 = vmax.f32 %v2541, 0.0
    %v2564 = vmax.f32 %v2546, 0.0
    %v2565 = vld [vmem:[#allocation10] sm:$0xff]
    %v2566 = vld [vmem:[#allocation10 + $0x8] sm:$0xff]
    %v2567 = vld [vmem:[#allocation10 + $0x10] sm:$0xff]
    %v2568 = vld [vmem:[#allocation10 + $0x18] sm:$0xff]
    %v2569 = vld [vmem:[#allocation10 + $0x20] sm:$0xff]
    %v2570 = vld [vmem:[#allocation10 + $0x28] sm:$0xff]
    %v2571 = vld [vmem:[#allocation10 + $0x30] sm:$0xff]
    %v2572 = vld [vmem:[#allocation10 + $0x38] sm:$0xff]
    %v2573 = vld [vmem:[#allocation10 + $0x40] sm:$0xff]
    %v2574 = vld [vmem:[#allocation10 + $0x48] sm:$0xff]
    %v2575 = vld [vmem:[#allocation10 + $0x50] sm:$0xff]
    %v2576 = vld [vmem:[#allocation10 + $0x58] sm:$0xff]
    %v2577 = vld [vmem:[#allocation10 + $0x60] sm:$0xff]
    %v2578 = vld [vmem:[#allocation10 + $0x68] sm:$0xff]
    %v2579 = vld [vmem:[#allocation10 + $0x70] sm:$0xff]
    %v2580 = vld [vmem:[#allocation10 + $0x78] sm:$0xff]
    %v2581 = vld [vmem:[#allocation10 + $0x80] sm:$0xff]
    %v2582 = vld [vmem:[#allocation10 + $0x88] sm:$0xff]
    %v2583 = vld [vmem:[#allocation10 + $0x90] sm:$0xff]
    %v2584 = vld [vmem:[#allocation10 + $0x98] sm:$0xff]
    %v2585 = vld [vmem:[#allocation10 + $0xa0] sm:$0xff]
    %v2586 = vld [vmem:[#allocation10 + $0xa8] sm:$0xff]
    %v2587 = vld [vmem:[#allocation10 + $0xb0] sm:$0xff]
    %v2588 = vld [vmem:[#allocation10 + $0xb8] sm:$0xff]
    %v2589 = vld [vmem:[#allocation10 + $0xc0] sm:$0xff]
    %v2590 = vld [vmem:[#allocation10 + $0xc8] sm:$0xff]
    %v2591 = vld [vmem:[#allocation10 + $0xd0] sm:$0xff]
    %v2592 = vld [vmem:[#allocation11] sm:$0x1]
    %v2605 = vrot.slane %v2549, 1
    %v2606 = vrot.slane %v2550, 1
    %v2607 = vrot.slane %v2551, 1
    %v2608 = vrot.slane %v2552, 1
    %v2609 = vrot.slane %v2553, 1
    %v2610 = vrot.slane %v2554, 1
    %v2611 = vrot.slane %v2557, 1
    %v2612 = vrot.slane %v2558, 1
    %v2613 = vrot.slane %v2559, 1
    %v2614 = vrot.slane %v2560, 1
    %v2615 = vrot.slane %v2561, 1
    %v2616 = vrot.slane %v2562, 1
    %2617 = vrot.lane.b32.xlu0 %v2605, 24
    %v2618 = vpop.permute.xlu0 %2617
    %2619 = vrot.lane.b32.xlu0 %v2606, 24
    %v2620 = vpop.permute.xlu0 %2619
    %2621 = vrot.lane.b32.xlu0 %v2607, 24
    %v2622 = vpop.permute.xlu0 %2621
    %2623 = vrot.lane.b32.xlu0 %v2608, 24
    %v2624 = vpop.permute.xlu0 %2623
    %2625 = vrot.lane.b32.xlu0 %v2609, 24
    %v2626 = vpop.permute.xlu0 %2625
    %2627 = vrot.lane.b32.xlu0 %v2610, 24
    %v2628 = vpop.permute.xlu0 %2627
    %2629 = vrot.lane.b32.xlu0 %v2611, 24
    %v2630 = vpop.permute.xlu0 %2629
    %2631 = vrot.lane.b32.xlu0 %v2612, 24
    %v2632 = vpop.permute.xlu0 %2631
    %2633 = vrot.lane.b32.xlu0 %v2613, 24
    %v2634 = vpop.permute.xlu0 %2633
    %2635 = vrot.lane.b32.xlu0 %v2614, 24
    %v2636 = vpop.permute.xlu0 %2635
    %2637 = vrot.lane.b32.xlu0 %v2615, 24
    %v2638 = vpop.permute.xlu0 %2637
    %2639 = vrot.lane.b32.xlu0 %v2616, 24
    %v2640 = vpop.permute.xlu0 %2639
    %v2653 = vrot.slane %v2549, 2
    %v2654 = vrot.slane %v2550, 2
    %v2655 = vrot.slane %v2551, 2
    %v2656 = vrot.slane %v2552, 2
    %v2657 = vrot.slane %v2553, 2
    %v2658 = vrot.slane %v2554, 2
    %v2659 = vrot.slane %v2557, 2
    %v2660 = vrot.slane %v2558, 2
    %v2661 = vrot.slane %v2559, 2
    %v2662 = vrot.slane %v2560, 2
    %v2663 = vrot.slane %v2561, 2
    %v2664 = vrot.slane %v2562, 2
    %2665 = vrot.lane.b32.xlu0 %v2653, 48
    %v2666 = vpop.permute.xlu0 %2665
    %2667 = vrot.lane.b32.xlu0 %v2654, 48
    %v2668 = vpop.permute.xlu0 %2667
    %2669 = vrot.lane.b32.xlu0 %v2655, 48
    %v2670 = vpop.permute.xlu0 %2669
    %2671 = vrot.lane.b32.xlu0 %v2656, 48
    %v2672 = vpop.permute.xlu0 %2671
    %2673 = vrot.lane.b32.xlu0 %v2657, 48
    %v2674 = vpop.permute.xlu0 %2673
    %2675 = vrot.lane.b32.xlu0 %v2658, 48
    %v2676 = vpop.permute.xlu0 %2675
    %2677 = vrot.lane.b32.xlu0 %v2659, 48
    %v2678 = vpop.permute.xlu0 %2677
    %2679 = vrot.lane.b32.xlu0 %v2660, 48
    %v2680 = vpop.permute.xlu0 %2679
    %2681 = vrot.lane.b32.xlu0 %v2661, 48
    %v2682 = vpop.permute.xlu0 %2681
    %2683 = vrot.lane.b32.xlu0 %v2662, 48
    %v2684 = vpop.permute.xlu0 %2683
    %2685 = vrot.lane.b32.xlu0 %v2663, 48
    %v2686 = vpop.permute.xlu0 %2685
    %2687 = vrot.lane.b32.xlu0 %v2664, 48
    %v2688 = vpop.permute.xlu0 %2687
    %2703 = vrot.lane.b32.xlu0 %v2550, 72
    %v2704 = vpop.permute.xlu0 %2703
    %2705 = vrot.lane.b32.xlu0 %v2551, 72
    %v2706 = vpop.permute.xlu0 %2705
    %2707 = vrot.lane.b32.xlu0 %v2552, 72
    %v2708 = vpop.permute.xlu0 %2707
    %2709 = vrot.lane.b32.xlu0 %v2553, 72
    %v2710 = vpop.permute.xlu0 %2709
    %2711 = vrot.lane.b32.xlu0 %v2554, 72
    %v2712 = vpop.permute.xlu0 %2711
    %2713 = vrot.lane.b32.xlu0 %v2555, 72
    %v2714 = vpop.permute.xlu0 %2713
    %2715 = vrot.lane.b32.xlu0 %v2558, 72
    %v2716 = vpop.permute.xlu0 %2715
    %2717 = vrot.lane.b32.xlu0 %v2559, 72
    %v2718 = vpop.permute.xlu0 %2717
    %2719 = vrot.lane.b32.xlu0 %v2560, 72
    %v2720 = vpop.permute.xlu0 %2719
    %2721 = vrot.lane.b32.xlu0 %v2561, 72
    %v2722 = vpop.permute.xlu0 %2721
    %2723 = vrot.lane.b32.xlu0 %v2562, 72
    %v2724 = vpop.permute.xlu0 %2723
    %2725 = vrot.lane.b32.xlu0 %v2563, 72
    %v2726 = vpop.permute.xlu0 %2725
    %v2739 = vrot.slane %v2555, 1
    %v2740 = vrot.slane %v2563, 1
    %2741 = vrot.lane.b32.xlu0 %v2606, 96
    %v2742 = vpop.permute.xlu0 %2741
    %2743 = vrot.lane.b32.xlu0 %v2607, 96
    %v2744 = vpop.permute.xlu0 %2743
    %2745 = vrot.lane.b32.xlu0 %v2608, 96
    %v2746 = vpop.permute.xlu0 %2745
    %2747 = vrot.lane.b32.xlu0 %v2609, 96
    %v2748 = vpop.permute.xlu0 %2747
    %2749 = vrot.lane.b32.xlu0 %v2610, 96
    %v2750 = vpop.permute.xlu0 %2749
    %2751 = vrot.lane.b32.xlu0 %v2739, 96
    %v2752 = vpop.permute.xlu0 %2751
    %2753 = vrot.lane.b32.xlu0 %v2612, 96
    %v2754 = vpop.permute.xlu0 %2753
    %2755 = vrot.lane.b32.xlu0 %v2613, 96
    %v2756 = vpop.permute.xlu0 %2755
    %2757 = vrot.lane.b32.xlu0 %v2614, 96
    %v2758 = vpop.permute.xlu0 %2757
    %2759 = vrot.lane.b32.xlu0 %v2615, 96
    %v2760 = vpop.permute.xlu0 %2759
    %2761 = vrot.lane.b32.xlu0 %v2616, 96
    %v2762 = vpop.permute.xlu0 %2761
    %2763 = vrot.lane.b32.xlu0 %v2740, 96
    %v2764 = vpop.permute.xlu0 %2763
    %v2777 = vrot.slane %v2555, 2
    %v2778 = vrot.slane %v2563, 2
    %2779 = vrot.lane.b32.xlu0 %v2654, 120
    %v2780 = vpop.permute.xlu0 %2779
    %2781 = vrot.lane.b32.xlu0 %v2655, 120
    %v2782 = vpop.permute.xlu0 %2781
    %2783 = vrot.lane.b32.xlu0 %v2656, 120
    %v2784 = vpop.permute.xlu0 %2783
    %2785 = vrot.lane.b32.xlu0 %v2657, 120
    %v2786 = vpop.permute.xlu0 %2785
    %2787 = vrot.lane.b32.xlu0 %v2658, 120
    %v2788 = vpop.permute.xlu0 %2787
    %2789 = vrot.lane.b32.xlu0 %v2777, 120
    %v2790 = vpop.permute.xlu0 %2789
    %2791 = vrot.lane.b32.xlu0 %v2660, 120
    %v2792 = vpop.permute.xlu0 %2791
    %2793 = vrot.lane.b32.xlu0 %v2661, 120
    %v2794 = vpop.permute.xlu0 %2793
    %2795 = vrot.lane.b32.xlu0 %v2662, 120
    %v2796 = vpop.permute.xlu0 %2795
    %2797 = vrot.lane.b32.xlu0 %v2663, 120
    %v2798 = vpop.permute.xlu0 %2797
    %2799 = vrot.lane.b32.xlu0 %v2664, 120
    %v2800 = vpop.permute.xlu0 %2799
    %2801 = vrot.lane.b32.xlu0 %v2778, 120
    %v2802 = vpop.permute.xlu0 %2801
    %2817 = vrot.lane.b32.xlu0 %v2551, 16
    %v2818 = vpop.permute.xlu0 %2817
    %2819 = vrot.lane.b32.xlu0 %v2552, 16
    %v2820 = vpop.permute.xlu0 %2819
    %2821 = vrot.lane.b32.xlu0 %v2553, 16
    %v2822 = vpop.permute.xlu0 %2821
    %2823 = vrot.lane.b32.xlu0 %v2554, 16
    %v2824 = vpop.permute.xlu0 %2823
    %2825 = vrot.lane.b32.xlu0 %v2555, 16
    %v2826 = vpop.permute.xlu0 %2825
    %2827 = vrot.lane.b32.xlu0 %v2556, 16
    %v2828 = vpop.permute.xlu0 %2827
    %2829 = vrot.lane.b32.xlu0 %v2559, 16
    %v2830 = vpop.permute.xlu0 %2829
    %2831 = vrot.lane.b32.xlu0 %v2560, 16
    %v2832 = vpop.permute.xlu0 %2831
    %2833 = vrot.lane.b32.xlu0 %v2561, 16
    %v2834 = vpop.permute.xlu0 %2833
    %2835 = vrot.lane.b32.xlu0 %v2562, 16
    %v2836 = vpop.permute.xlu0 %2835
    %2837 = vrot.lane.b32.xlu0 %v2563, 16
    %v2838 = vpop.permute.xlu0 %2837
    %2839 = vrot.lane.b32.xlu0 %v2564, 16
    %v2840 = vpop.permute.xlu0 %2839
    %v2853 = vrot.slane %v2556, 1
    %v2854 = vrot.slane %v2564, 1
    %2855 = vrot.lane.b32.xlu0 %v2607, 40
    %v2856 = vpop.permute.xlu0 %2855
    %2857 = vrot.lane.b32.xlu0 %v2608, 40
    %v2858 = vpop.permute.xlu0 %2857
    %2859 = vrot.lane.b32.xlu0 %v2609, 40
    %v2860 = vpop.permute.xlu0 %2859
    %2861 = vrot.lane.b32.xlu0 %v2610, 40
    %v2862 = vpop.permute.xlu0 %2861
    %2863 = vrot.lane.b32.xlu0 %v2739, 40
    %v2864 = vpop.permute.xlu0 %2863
    %2865 = vrot.lane.b32.xlu0 %v2853, 40
    %v2866 = vpop.permute.xlu0 %2865
    %2867 = vrot.lane.b32.xlu0 %v2613, 40
    %v2868 = vpop.permute.xlu0 %2867
    %2869 = vrot.lane.b32.xlu0 %v2614, 40
    %v2870 = vpop.permute.xlu0 %2869
    %2871 = vrot.lane.b32.xlu0 %v2615, 40
    %v2872 = vpop.permute.xlu0 %2871
    %2873 = vrot.lane.b32.xlu0 %v2616, 40
    %v2874 = vpop.permute.xlu0 %2873
    %2875 = vrot.lane.b32.xlu0 %v2740, 40
    %v2876 = vpop.permute.xlu0 %2875
    %2877 = vrot.lane.b32.xlu0 %v2854, 40
    %v2878 = vpop.permute.xlu0 %2877
    %v2891 = vrot.slane %v2556, 2
    %v2892 = vrot.slane %v2564, 2
    %2893 = vrot.lane.b32.xlu0 %v2655, 64
    %v2894 = vpop.permute.xlu0 %2893
    %2895 = vrot.lane.b32.xlu0 %v2656, 64
    %v2896 = vpop.permute.xlu0 %2895
    %2897 = vrot.lane.b32.xlu0 %v2657, 64
    %v2898 = vpop.permute.xlu0 %2897
    %2899 = vrot.lane.b32.xlu0 %v2658, 64
    %v2900 = vpop.permute.xlu0 %2899
    %2901 = vrot.lane.b32.xlu0 %v2777, 64
    %v2902 = vpop.permute.xlu0 %2901
    %2903 = vrot.lane.b32.xlu0 %v2891, 64
    %v2904 = vpop.permute.xlu0 %2903
    %2905 = vrot.lane.b32.xlu0 %v2661, 64
    %v2906 = vpop.permute.xlu0 %2905
    %2907 = vrot.lane.b32.xlu0 %v2662, 64
    %v2908 = vpop.permute.xlu0 %2907
    %2909 = vrot.lane.b32.xlu0 %v2663, 64
    %v2910 = vpop.permute.xlu0 %2909
    %2911 = vrot.lane.b32.xlu0 %v2664, 64
    %v2912 = vpop.permute.xlu0 %2911
    %2913 = vrot.lane.b32.xlu0 %v2778, 64
    %v2914 = vpop.permute.xlu0 %2913
    %2915 = vrot.lane.b32.xlu0 %v2892, 64
    %v2916 = vpop.permute.xlu0 %2915
    %v2929 = vsel %vm2226, %v2549, %v2618
    %v2930 = vsel %vm2226, %v2550, %v2620
    %v2931 = vsel %vm2226, %v2551, %v2622
    %v2932 = vsel %vm2226, %v2552, %v2624
    %v2933 = vsel %vm2226, %v2553, %v2626
    %v2934 = vsel %vm2226, %v2554, %v2628
    %v2935 = vsel %vm2226, %v2557, %v2630
    %v2936 = vsel %vm2226, %v2558, %v2632
    %v2937 = vsel %vm2226, %v2559, %v2634
    %v2938 = vsel %vm2226, %v2560, %v2636
    %v2939 = vsel %vm2226, %v2561, %v2638
    %v2940 = vsel %vm2226, %v2562, %v2640
    %v2941 = vsel %vm2260, %v2929, %v2666
    %v2942 = vsel %vm2260, %v2930, %v2668
    %v2943 = vsel %vm2260, %v2931, %v2670
    %v2944 = vsel %vm2260, %v2932, %v2672
    %v2945 = vsel %vm2260, %v2933, %v2674
    %v2946 = vsel %vm2260, %v2934, %v2676
    %v2947 = vsel %vm2260, %v2935, %v2678
    %v2948 = vsel %vm2260, %v2936, %v2680
    %v2949 = vsel %vm2260, %v2937, %v2682
    %v2950 = vsel %vm2260, %v2938, %v2684
    %v2951 = vsel %vm2260, %v2939, %v2686
    %v2952 = vsel %vm2260, %v2940, %v2688
    %v2953 = vsel %vm2294, %v2941, %v2704
    %v2954 = vsel %vm2294, %v2942, %v2706
    %v2955 = vsel %vm2294, %v2943, %v2708
    %v2956 = vsel %vm2294, %v2944, %v2710
    %v2957 = vsel %vm2294, %v2945, %v2712
    %v2958 = vsel %vm2294, %v2946, %v2714
    %v2959 = vsel %vm2294, %v2947, %v2716
    %v2960 = vsel %vm2294, %v2948, %v2718
    %v2961 = vsel %vm2294, %v2949, %v2720
    %v2962 = vsel %vm2294, %v2950, %v2722
    %v2963 = vsel %vm2294, %v2951, %v2724
    %v2964 = vsel %vm2294, %v2952, %v2726
    %v2965 = vsel %vm2328, %v2953, %v2742
    %v2966 = vsel %vm2328, %v2954, %v2744
    %v2967 = vsel %vm2328, %v2955, %v2746
    %v2968 = vsel %vm2328, %v2956, %v2748
    %v2969 = vsel %vm2328, %v2957, %v2750
    %v2970 = vsel %vm2328, %v2958, %v2752
    %v2971 = vsel %vm2328, %v2959, %v2754
    %v2972 = vsel %vm2328, %v2960, %v2756
    %v2973 = vsel %vm2328, %v2961, %v2758
    %v2974 = vsel %vm2328, %v2962, %v2760
    %v2975 = vsel %vm2328, %v2963, %v2762
    %v2976 = vsel %vm2328, %v2964, %v2764
    %vm2977 = vcmask 982016
    %v2978 = vsel %vm2977, %v2965, %v2780
    %v2979 = vsel %vm2977, %v2966, %v2782
    %v2980 = vsel %vm2977, %v2967, %v2784
    %v2981 = vsel %vm2977, %v2968, %v2786
    %v2982 = vsel %vm2977, %v2969, %v2788
    %v2983 = vsel %vm2977, %v2970, %v2790
    %v2984 = vsel %vm2977, %v2971, %v2792
    %v2985 = vsel %vm2977, %v2972, %v2794
    %v2986 = vsel %vm2977, %v2973, %v2796
    %v2987 = vsel %vm2977, %v2974, %v2798
    %v2988 = vsel %vm2977, %v2975, %v2800
    %v2989 = vsel %vm2977, %v2976, %v2802
    %vm2990 = vcmask 130048
    %v2991 = vsel %vm2990, %v2780, %v2818
    %v2992 = vsel %vm2990, %v2782, %v2820
    %v2993 = vsel %vm2990, %v2784, %v2822
    %v2994 = vsel %vm2990, %v2786, %v2824
    %v2995 = vsel %vm2990, %v2788, %v2826
    %v2996 = vsel %vm2990, %v2790, %v2828
    %v2997 = vsel %vm2990, %v2792, %v2830
    %v2998 = vsel %vm2990, %v2794, %v2832
    %v2999 = vsel %vm2990, %v2796, %v2834
    %v3000 = vsel %vm2990, %v2798, %v2836
    %v3001 = vsel %vm2990, %v2800, %v2838
    %v3002 = vsel %vm2990, %v2802, %v2840
    %vm3003 = vcmask 326656
    %v3004 = vsel %vm3003, %v2991, %v2856
    %v3005 = vsel %vm3003, %v2992, %v2858
    %v3006 = vsel %vm3003, %v2993, %v2860
    %v3007 = vsel %vm3003, %v2994, %v2862
    %v3008 = vsel %vm3003, %v2995, %v2864
    %v3009 = vsel %vm3003, %v2996, %v2866
    %v3010 = vsel %vm3003, %v2997, %v2868
    %v3011 = vsel %vm3003, %v2998, %v2870
    %v3012 = vsel %vm3003, %v2999, %v2872
    %v3013 = vsel %vm3003, %v3000, %v2874
    %v3014 = vsel %vm3003, %v3001, %v2876
    %v3015 = vsel %vm3003, %v3002, %v2878
    %vm3016 = vcmask 523264
    %v3017 = vsel %vm3016, %v3004, %v2894
    %v3018 = vsel %vm3016, %v3005, %v2896
    %v3019 = vsel %vm3016, %v3006, %v2898
    %v3020 = vsel %vm3016, %v3007, %v2900
    %v3021 = vsel %vm3016, %v3008, %v2902
    %v3022 = vsel %vm3016, %v3009, %v2904
    %v3023 = vsel %vm3016, %v3010, %v2906
    %v3024 = vsel %vm3016, %v3011, %v2908
    %v3025 = vsel %vm3016, %v3012, %v2910
    %v3026 = vsel %vm3016, %v3013, %v2912
    %v3027 = vsel %vm3016, %v3014, %v2914
    %v3028 = vsel %vm3016, %v3015, %v2916
    %v3053 = vcombine.low %v2978, %v3017
    %v3054 = vcombine.high %v2978, %v3017
    %v3056 = vunpack.c.l.s4 1983009808
    %v3057 = vunpack.c.0.s8 %v3056
    %v3058 = vlaneseq
    %v3059 = vshrl.u32 %v3058, 7
    %v3060 = vsub.s32 %v3057, %v3059
    %v3061 = vrot.slane %v3053, %v3060
    %v3063 = vunpack.c.l.s4 1983009808
    %v3064 = vunpack.c.0.s8 %v3063
    %v3065 = vlaneseq
    %v3066 = vshrl.u32 %v3065, 7
    %v3067 = vsub.s32 %v3064, %v3066
    %v3068 = vrot.slane %v3054, %v3067
    %v3069 = vcombine.high %v3061, %v3061
    %v3070 = vcombine.low %v2979, %v3018
    %v3071 = vcombine.high %v2979, %v3018
    %v3073 = vunpack.c.l.s4 1983009808
    %v3074 = vunpack.c.0.s8 %v3073
    %v3075 = vlaneseq
    %v3076 = vshrl.u32 %v3075, 7
    %v3077 = vsub.s32 %v3074, %v3076
    %v3078 = vrot.slane %v3070, %v3077
    %v3080 = vunpack.c.l.s4 1983009808
    %v3081 = vunpack.c.0.s8 %v3080
    %v3082 = vlaneseq
    %v3083 = vshrl.u32 %v3082, 7
    %v3084 = vsub.s32 %v3081, %v3083
    %v3085 = vrot.slane %v3071, %v3084
    %v3086 = vcombine.high %v3078, %v3078
    %v3087 = vcombine.low %v2980, %v3019
    %v3088 = vcombine.high %v2980, %v3019
    %v3090 = vunpack.c.l.s4 1983009808
    %v3091 = vunpack.c.0.s8 %v3090
    %v3092 = vlaneseq
    %v3093 = vshrl.u32 %v3092, 7
    %v3094 = vsub.s32 %v3091, %v3093
    %v3095 = vrot.slane %v3087, %v3094
    %v3097 = vunpack.c.l.s4 1983009808
    %v3098 = vunpack.c.0.s8 %v3097
    %v3099 = vlaneseq
    %v3100 = vshrl.u32 %v3099, 7
    %v3101 = vsub.s32 %v3098, %v3100
    %v3102 = vrot.slane %v3088, %v3101
    %v3103 = vcombine.high %v3095, %v3095
    %v3104 = vcombine.low %v2981, %v3020
    %v3105 = vcombine.high %v2981, %v3020
    %v3107 = vunpack.c.l.s4 1983009808
    %v3108 = vunpack.c.0.s8 %v3107
    %v3109 = vlaneseq
    %v3110 = vshrl.u32 %v3109, 7
    %v3111 = vsub.s32 %v3108, %v3110
    %v3112 = vrot.slane %v3104, %v3111
    %v3114 = vunpack.c.l.s4 1983009808
    %v3115 = vunpack.c.0.s8 %v3114
    %v3116 = vlaneseq
    %v3117 = vshrl.u32 %v3116, 7
    %v3118 = vsub.s32 %v3115, %v3117
    %v3119 = vrot.slane %v3105, %v3118
    %v3120 = vcombine.high %v3112, %v3112
    %v3121 = vcombine.low %v2982, %v3021
    %v3122 = vcombine.high %v2982, %v3021
    %v3124 = vunpack.c.l.s4 1983009808
    %v3125 = vunpack.c.0.s8 %v3124
    %v3126 = vlaneseq
    %v3127 = vshrl.u32 %v3126, 7
    %v3128 = vsub.s32 %v3125, %v3127
    %v3129 = vrot.slane %v3121, %v3128
    %v3131 = vunpack.c.l.s4 1983009808
    %v3132 = vunpack.c.0.s8 %v3131
    %v3133 = vlaneseq
    %v3134 = vshrl.u32 %v3133, 7
    %v3135 = vsub.s32 %v3132, %v3134
    %v3136 = vrot.slane %v3122, %v3135
    %v3137 = vcombine.high %v3129, %v3129
    %v3138 = vcombine.low %v2983, %v3022
    %v3139 = vcombine.high %v2983, %v3022
    %v3141 = vunpack.c.l.s4 1983009808
    %v3142 = vunpack.c.0.s8 %v3141
    %v3143 = vlaneseq
    %v3144 = vshrl.u32 %v3143, 7
    %v3145 = vsub.s32 %v3142, %v3144
    %v3146 = vrot.slane %v3138, %v3145
    %v3148 = vunpack.c.l.s4 1983009808
    %v3149 = vunpack.c.0.s8 %v3148
    %v3150 = vlaneseq
    %v3151 = vshrl.u32 %v3150, 7
    %v3152 = vsub.s32 %v3149, %v3151
    %v3153 = vrot.slane %v3139, %v3152
    %v3154 = vcombine.high %v3146, %v3146
    %v3155 = vcombine.low %v2984, %v3023
    %v3156 = vcombine.high %v2984, %v3023
    %v3158 = vunpack.c.l.s4 1983009808
    %v3159 = vunpack.c.0.s8 %v3158
    %v3160 = vlaneseq
    %v3161 = vshrl.u32 %v3160, 7
    %v3162 = vsub.s32 %v3159, %v3161
    %v3163 = vrot.slane %v3155, %v3162
    %v3165 = vunpack.c.l.s4 1983009808
    %v3166 = vunpack.c.0.s8 %v3165
    %v3167 = vlaneseq
    %v3168 = vshrl.u32 %v3167, 7
    %v3169 = vsub.s32 %v3166, %v3168
    %v3170 = vrot.slane %v3156, %v3169
    %v3171 = vcombine.high %v3163, %v3163
    %v3172 = vcombine.low %v2985, %v3024
    %v3173 = vcombine.high %v2985, %v3024
    %v3175 = vunpack.c.l.s4 1983009808
    %v3176 = vunpack.c.0.s8 %v3175
    %v3177 = vlaneseq
    %v3178 = vshrl.u32 %v3177, 7
    %v3179 = vsub.s32 %v3176, %v3178
    %v3180 = vrot.slane %v3172, %v3179
    %v3182 = vunpack.c.l.s4 1983009808
    %v3183 = vunpack.c.0.s8 %v3182
    %v3184 = vlaneseq
    %v3185 = vshrl.u32 %v3184, 7
    %v3186 = vsub.s32 %v3183, %v3185
    %v3187 = vrot.slane %v3173, %v3186
    %v3188 = vcombine.high %v3180, %v3180
    %v3189 = vcombine.low %v2986, %v3025
    %v3190 = vcombine.high %v2986, %v3025
    %v3192 = vunpack.c.l.s4 1983009808
    %v3193 = vunpack.c.0.s8 %v3192
    %v3194 = vlaneseq
    %v3195 = vshrl.u32 %v3194, 7
    %v3196 = vsub.s32 %v3193, %v3195
    %v3197 = vrot.slane %v3189, %v3196
    %v3199 = vunpack.c.l.s4 1983009808
    %v3200 = vunpack.c.0.s8 %v3199
    %v3201 = vlaneseq
    %v3202 = vshrl.u32 %v3201, 7
    %v3203 = vsub.s32 %v3200, %v3202
    %v3204 = vrot.slane %v3190, %v3203
    %v3205 = vcombine.high %v3197, %v3197
    %v3206 = vcombine.low %v2987, %v3026
    %v3207 = vcombine.high %v2987, %v3026
    %v3209 = vunpack.c.l.s4 1983009808
    %v3210 = vunpack.c.0.s8 %v3209
    %v3211 = vlaneseq
    %v3212 = vshrl.u32 %v3211, 7
    %v3213 = vsub.s32 %v3210, %v3212
    %v3214 = vrot.slane %v3206, %v3213
    %v3216 = vunpack.c.l.s4 1983009808
    %v3217 = vunpack.c.0.s8 %v3216
    %v3218 = vlaneseq
    %v3219 = vshrl.u32 %v3218, 7
    %v3220 = vsub.s32 %v3217, %v3219
    %v3221 = vrot.slane %v3207, %v3220
    %v3222 = vcombine.high %v3214, %v3214
    %v3223 = vcombine.low %v2988, %v3027
    %v3224 = vcombine.high %v2988, %v3027
    %v3226 = vunpack.c.l.s4 1983009808
    %v3227 = vunpack.c.0.s8 %v3226
    %v3228 = vlaneseq
    %v3229 = vshrl.u32 %v3228, 7
    %v3230 = vsub.s32 %v3227, %v3229
    %v3231 = vrot.slane %v3223, %v3230
    %v3233 = vunpack.c.l.s4 1983009808
    %v3234 = vunpack.c.0.s8 %v3233
    %v3235 = vlaneseq
    %v3236 = vshrl.u32 %v3235, 7
    %v3237 = vsub.s32 %v3234, %v3236
    %v3238 = vrot.slane %v3224, %v3237
    %v3239 = vcombine.high %v3231, %v3231
    %v3240 = vcombine.low %v2989, %v3028
    %v3241 = vcombine.high %v2989, %v3028
    %v3243 = vunpack.c.l.s4 1983009808
    %v3244 = vunpack.c.0.s8 %v3243
    %v3245 = vlaneseq
    %v3246 = vshrl.u32 %v3245, 7
    %v3247 = vsub.s32 %v3244, %v3246
    %v3248 = vrot.slane %v3240, %v3247
    %v3250 = vunpack.c.l.s4 1983009808
    %v3251 = vunpack.c.0.s8 %v3250
    %v3252 = vlaneseq
    %v3253 = vshrl.u32 %v3252, 7
    %v3254 = vsub.s32 %v3251, %v3253
    %v3255 = vrot.slane %v3241, %v3254
    %v3256 = vcombine.high %v3248, %v3248
    %v3258 = vlaneseq
    %v3259 = vshrl.u32 %v3258, 7
    %v3260 = vsub.s32 0, %v3259
    %v3261 = vrot.slane %v2592, %v3260
    %v3263 = vcombine.low %v3061, %v3069
    %v3264 = vcombine.low %v3068, %v3078
    %v3266 = vunpack.c.l.s4 1983009808
    %v3267 = vunpack.c.0.s8 %v3266
    %v3268 = vlaneseq
    %v3269 = vshrl.u32 %v3268, 7
    %v3270 = vsub.s32 %v3267, %v3269
    %v3271 = vrot.slane %v3263, %v3270
    %v3273 = vunpack.c.l.s4 1983009808
    %v3274 = vunpack.c.0.s8 %v3273
    %v3275 = vlaneseq
    %v3276 = vshrl.u32 %v3275, 7
    %v3277 = vsub.s32 %v3274, %v3276
    %v3278 = vrot.slane %v3264, %v3277
    %v3279 = vcombine.low %v3271, %v3278
    %v3280 = vcombine.high %v3271, %v3278
    %v3281 = vcombine.low %v3086, %v3085
    %v3282 = vcombine.low %v3095, %v3103
    %v3284 = vunpack.c.l.s4 1983009808
    %v3285 = vunpack.c.0.s8 %v3284
    %v3286 = vlaneseq
    %v3287 = vshrl.u32 %v3286, 7
    %v3288 = vsub.s32 %v3285, %v3287
    %v3289 = vrot.slane %v3281, %v3288
    %v3291 = vunpack.c.l.s4 1983009808
    %v3292 = vunpack.c.0.s8 %v3291
    %v3293 = vlaneseq
    %v3294 = vshrl.u32 %v3293, 7
    %v3295 = vsub.s32 %v3292, %v3294
    %v3296 = vrot.slane %v3282, %v3295
    %v3297 = vcombine.low %v3289, %v3296
    %v3298 = vcombine.high %v3289, %v3296
    %v3299 = vcombine.low %v3102, %v3112
    %v3300 = vcombine.low %v3120, %v3119
    %v3302 = vunpack.c.l.s4 1983009808
    %v3303 = vunpack.c.0.s8 %v3302
    %v3304 = vlaneseq
    %v3305 = vshrl.u32 %v3304, 7
    %v3306 = vsub.s32 %v3303, %v3305
    %v3307 = vrot.slane %v3299, %v3306
    %v3309 = vunpack.c.l.s4 1983009808
    %v3310 = vunpack.c.0.s8 %v3309
    %v3311 = vlaneseq
    %v3312 = vshrl.u32 %v3311, 7
    %v3313 = vsub.s32 %v3310, %v3312
    %v3314 = vrot.slane %v3300, %v3313
    %v3315 = vcombine.low %v3307, %v3314
    %v3316 = vcombine.high %v3307, %v3314
    %v3317 = vcombine.low %v3129, %v3137
    %v3318 = vcombine.low %v3136, %v3146
    %v3320 = vunpack.c.l.s4 1983009808
    %v3321 = vunpack.c.0.s8 %v3320
    %v3322 = vlaneseq
    %v3323 = vshrl.u32 %v3322, 7
    %v3324 = vsub.s32 %v3321, %v3323
    %v3325 = vrot.slane %v3317, %v3324
    %v3327 = vunpack.c.l.s4 1983009808
    %v3328 = vunpack.c.0.s8 %v3327
    %v3329 = vlaneseq
    %v3330 = vshrl.u32 %v3329, 7
    %v3331 = vsub.s32 %v3328, %v3330
    %v3332 = vrot.slane %v3318, %v3331
    %v3333 = vcombine.low %v3325, %v3332
    %v3334 = vcombine.high %v3325, %v3332
    %v3335 = vcombine.low %v3154, %v3153
    %v3336 = vcombine.low %v3163, %v3171
    %v3338 = vunpack.c.l.s4 1983009808
    %v3339 = vunpack.c.0.s8 %v3338
    %v3340 = vlaneseq
    %v3341 = vshrl.u32 %v3340, 7
    %v3342 = vsub.s32 %v3339, %v3341
    %v3343 = vrot.slane %v3335, %v3342
    %v3345 = vunpack.c.l.s4 1983009808
    %v3346 = vunpack.c.0.s8 %v3345
    %v3347 = vlaneseq
    %v3348 = vshrl.u32 %v3347, 7
    %v3349 = vsub.s32 %v3346, %v3348
    %v3350 = vrot.slane %v3336, %v3349
    %v3351 = vcombine.low %v3343, %v3350
    %v3352 = vcombine.high %v3343, %v3350
    %v3353 = vcombine.low %v3170, %v3180
    %v3354 = vcombine.low %v3188, %v3187
    %v3356 = vunpack.c.l.s4 1983009808
    %v3357 = vunpack.c.0.s8 %v3356
    %v3358 = vlaneseq
    %v3359 = vshrl.u32 %v3358, 7
    %v3360 = vsub.s32 %v3357, %v3359
    %v3361 = vrot.slane %v3353, %v3360
    %v3363 = vunpack.c.l.s4 1983009808
    %v3364 = vunpack.c.0.s8 %v3363
    %v3365 = vlaneseq
    %v3366 = vshrl.u32 %v3365, 7
    %v3367 = vsub.s32 %v3364, %v3366
    %v3368 = vrot.slane %v3354, %v3367
    %v3369 = vcombine.low %v3361, %v3368
    %v3370 = vcombine.high %v3361, %v3368
    %v3371 = vcombine.low %v3197, %v3205
    %v3372 = vcombine.low %v3204, %v3214
    %v3374 = vunpack.c.l.s4 1983009808
    %v3375 = vunpack.c.0.s8 %v3374
    %v3376 = vlaneseq
    %v3377 = vshrl.u32 %v3376, 7
    %v3378 = vsub.s32 %v3375, %v3377
    %v3379 = vrot.slane %v3371, %v3378
    %v3381 = vunpack.c.l.s4 1983009808
    %v3382 = vunpack.c.0.s8 %v3381
    %v3383 = vlaneseq
    %v3384 = vshrl.u32 %v3383, 7
    %v3385 = vsub.s32 %v3382, %v3384
    %v3386 = vrot.slane %v3372, %v3385
    %v3387 = vcombine.low %v3379, %v3386
    %v3388 = vcombine.high %v3379, %v3386
    %v3389 = vcombine.low %v3222, %v3221
    %v3390 = vcombine.low %v3231, %v3239
    %v3392 = vunpack.c.l.s4 1983009808
    %v3393 = vunpack.c.0.s8 %v3392
    %v3394 = vlaneseq
    %v3395 = vshrl.u32 %v3394, 7
    %v3396 = vsub.s32 %v3393, %v3395
    %v3397 = vrot.slane %v3389, %v3396
    %v3399 = vunpack.c.l.s4 1983009808
    %v3400 = vunpack.c.0.s8 %v3399
    %v3401 = vlaneseq
    %v3402 = vshrl.u32 %v3401, 7
    %v3403 = vsub.s32 %v3400, %v3402
    %v3404 = vrot.slane %v3390, %v3403
    %v3405 = vcombine.low %v3397, %v3404
    %v3406 = vcombine.high %v3397, %v3404
    %v3407 = vcombine.low %v3238, %v3248
    %v3408 = vcombine.low %v3256, %v3255
    %v3410 = vunpack.c.l.s4 1983009808
    %v3411 = vunpack.c.0.s8 %v3410
    %v3412 = vlaneseq
    %v3413 = vshrl.u32 %v3412, 7
    %v3414 = vsub.s32 %v3411, %v3413
    %v3415 = vrot.slane %v3407, %v3414
    %v3417 = vunpack.c.l.s4 1983009808
    %v3418 = vunpack.c.0.s8 %v3417
    %v3419 = vlaneseq
    %v3420 = vshrl.u32 %v3419, 7
    %v3421 = vsub.s32 %v3418, %v3420
    %v3422 = vrot.slane %v3408, %v3421
    %v3423 = vcombine.low %v3415, %v3422
    %v3424 = vcombine.high %v3415, %v3422
    %vm3434 = vcmask 719872
    %v3435 = vsel %vm3434, %v3280, 0
    %v3437 = vsel %vm3434, %v3298, 0
    %v3439 = vsel %vm3434, %v3316, 0
    %v3441 = vsel %vm3434, %v3334, 0
    %v3443 = vsel %vm3434, %v3352, 0
    %v3445 = vsel %vm3434, %v3370, 0
    %v3447 = vsel %vm3434, %v3388, 0
    %v3449 = vsel %vm3434, %v3406, 0
    %v3451 = vsel %vm3434, %v3424, 0
    %3453 = vmatprep.subr.mxu0 0.0
    %3454 = vmatpush1.msra.mxu0 %v2565
    %3455 = vmatprep.subr.mxu0 0.0
    %3456 = vmatpush1.msra.mxu0 %v2566
    %3457 = vmatprep.subr.mxu0 0.0
    %3458 = vmatpush1.msra.mxu0 %v2567
    %3459 = vmatprep.subr.mxu0 0.0
    %3460 = vmatpush1.msra.mxu0 %v2568
    %3461 = vmatprep.subr.mxu0 0.0
    %3462 = vmatpush1.msra.mxu0 %v2569
    %3463 = vmatprep.subr.mxu0 0.0
    %3464 = vmatpush1.msra.mxu0 %v2570
    %3465 = vmatprep.subr.mxu0 0.0
    %3466 = vmatpush1.msra.mxu0 %v2571
    %3467 = vmatprep.subr.mxu0 0.0
    %3468 = vmatpush1.msra.mxu0 %v2572
    %3469 = vmatprep.subr.mxu0 0.0
    %3470 = vmatpush1.msra.mxu0 %v2573
    %3471 = vmatprep.subr.mxu0 0.0
    %3472 = vmatpush1.msra.mxu0 %v2574
    %3473 = vmatprep.subr.mxu0 0.0
    %3474 = vmatpush1.msra.mxu0 %v2575
    %3475 = vmatprep.subr.mxu0 0.0
    %3476 = vmatpush1.msra.mxu0 %v2576
    %3477 = vmatprep.subr.mxu0 0.0
    %3478 = vmatpush1.msra.mxu0 %v2577
    %3479 = vmatprep.subr.mxu0 0.0
    %3480 = vmatpush1.msra.mxu0 %v2578
    %3481 = vmatprep.subr.mxu0 0.0
    %3482 = vmatpush1.msra.mxu0 %v2579
    %3483 = vmatprep.subr.mxu0 0.0
    %3484 = vmatpush1.msra.mxu0 %v2580
    %3485 = vmatprep.subr.mxu0 0.0
    %3486 = vmatpush1.msra.mxu0 %v2581
    %3487 = vmatprep.subr.mxu0 0.0
    %3488 = vmatpush1.msra.mxu0 %v2582
    %3489 = vmatprep.subr.mxu0 0.0
    %3490 = vmatpush1.msra.mxu0 %v2583
    %3491 = vmatprep.subr.mxu0 0.0
    %3492 = vmatpush1.msra.mxu0 %v2584
    %3493 = vmatprep.subr.mxu0 0.0
    %3494 = vmatpush1.msra.mxu0 %v2585
    %3495 = vmatprep.subr.mxu0 0.0
    %3496 = vmatpush1.msra.mxu0 %v2586
    %3497 = vmatprep.subr.mxu0 0.0
    %3498 = vmatpush1.msra.mxu0 %v2587
    %3499 = vmatprep.subr.mxu0 0.0
    %3500 = vmatpush1.msra.mxu0 %v2588
    %3501 = vmatprep.subr.mxu0 0.0
    %3502 = vmatpush1.msra.mxu0 %v2589
    %3503 = vmatprep.subr.mxu0 0.0
    %3504 = vmatpush1.msra.mxu0 %v2590
    %3505 = vmatprep.subr.mxu0 0.0
    %3506 = vmatpush1.msra.mxu0 %v2591
    %3507 = vmatprep.subr.mxu0 0.0
    %3508 = vmatpush1.msra.mxu0 0.0
    %3509 = vmatprep.subr.mxu0 0.0
    %3510 = vmatpush1.msra.mxu0 0.0
    %3511 = vmatprep.subr.mxu0 0.0
    %3512 = vmatpush1.msra.mxu0 0.0
    %3513 = vmatprep.subr.mxu0 0.0
    %3514 = vmatpush1.msra.mxu0 0.0
    %3515 = vmatprep.subr.mxu0 0.0
    %3516 = vmatpush1.msra.mxu0 0.0
    %3517 = vmatprep.mubr.f32.mxu0 %v3435
    %3518 = vmatmul.mubr.f32.gmra.mrb[0].mxu0 %v3279
    %v3519 = vpop.f32.mrb[0].mxu0
    %v3520 = vadd.f32 %v3261, %v3519
    %v3521 = vpop.f32.mrb[0].mxu0
    %3522 = vmatprep.mubr.f32.mxu0 %v3437
    %3523 = vmatmul.mubr.f32.gmra.mrb[0].mxu0 %v3297
    %v3524 = vpop.f32.mrb[0].mxu0
    %v3525 = vadd.f32 %v3261, %v3524
    %v3526 = vpop.f32.mrb[0].mxu0
    %3527 = vmatprep.mubr.f32.mxu0 %v3439
    %3528 = vmatmul.mubr.f32.gmra.mrb[0].mxu0 %v3315
    %v3529 = vpop.f32.mrb[0].mxu0
    %v3530 = vadd.f32 %v3261, %v3529
    %v3531 = vpop.f32.mrb[0].mxu0
    %3532 = vmatprep.mubr.f32.mxu0 %v3441
    %3533 = vmatmul.mubr.f32.gmra.mrb[0].mxu0 %v3333
    %v3534 = vpop.f32.mrb[0].mxu0
    %v3535 = vadd.f32 %v3261, %v3534
    %v3536 = vpop.f32.mrb[0].mxu0
    %3537 = vmatprep.mubr.f32.mxu0 %v3443
    %3538 = vmatmul.mubr.f32.gmra.mrb[0].mxu0 %v3351
    %v3539 = vpop.f32.mrb[0].mxu0
    %v3540 = vadd.f32 %v3261, %v3539
    %v3541 = vpop.f32.mrb[0].mxu0
    %3542 = vmatprep.mubr.f32.mxu0 %v3445
    %3543 = vmatmul.mubr.f32.gmra.mrb[0].mxu0 %v3369
    %v3544 = vpop.f32.mrb[0].mxu0
    %v3545 = vadd.f32 %v3261, %v3544
    %v3546 = vpop.f32.mrb[0].mxu0
    %3547 = vmatprep.mubr.f32.mxu0 %v3447
    %3548 = vmatmul.mubr.f32.gmra.mrb[0].mxu0 %v3387
    %v3549 = vpop.f32.mrb[0].mxu0
    %v3550 = vadd.f32 %v3261, %v3549
    %v3551 = vpop.f32.mrb[0].mxu0
    %3552 = vmatprep.mubr.f32.mxu0 %v3449
    %3553 = vmatmul.mubr.f32.gmra.mrb[0].mxu0 %v3405
    %v3554 = vpop.f32.mrb[0].mxu0
    %v3555 = vadd.f32 %v3261, %v3554
    %v3556 = vpop.f32.mrb[0].mxu0
    %3557 = vmatprep.mubr.f32.mxu0 %v3451
    %3558 = vmatmul.mubr.f32.gmra.mrb[0].mxu0 %v3423
    %v3559 = vpop.f32.mrb[0].mxu0
    %v3560 = vadd.f32 %v3261, %v3559
    %v3561 = vpop.f32.mrb[0].mxu0
    %3562 = vdwg.mxu0
    %v3563 = vmax.f32 %v3520, 0.0
    %v3564 = vmax.f32 %v3525, 0.0
    %v3565 = vmax.f32 %v3530, 0.0
    %v3566 = vmax.f32 %v3535, 0.0
    %v3567 = vmax.f32 %v3540, 0.0
    %v3568 = vmax.f32 %v3545, 0.0
    %v3569 = vmax.f32 %v3550, 0.0
    %v3570 = vmax.f32 %v3555, 0.0
    %v3571 = vmax.f32 %v3560, 0.0
    %v3572 = vsel %vm244, %v3563, 0.0
    %v3573 = vrot.slane %v3567, 3
    %vm3574 = vcmask 1041409
    %v3575 = vsel %vm3574, %v3573, %v3572
    %v3576 = vrot.slane %v3563, 1
    %v3577 = vsel %vm244, %v3576, 0.0
    %v3578 = vrot.slane %v3567, 4
    %v3579 = vsel %vm3574, %v3578, %v3577
    %v3580 = vrot.slane %v3563, 2
    %v3581 = vsel %vm244, %v3580, 0.0
    %v3582 = vrot.slane %v3567, 5
    %v3583 = vsel %vm3574, %v3582, %v3581
    %v3584 = vrot.slane %v3563, 3
    %v3585 = vsel %vm244, %v3584, 0.0
    %v3586 = vrot.slane %v3567, 6
    %v3587 = vsel %vm3574, %v3586, %v3585
    %v3588 = vrot.slane %v3563, 4
    %v3589 = vsel %vm244, %v3588, 0.0
    %v3590 = vrot.slane %v3568, 7
    %v3591 = vsel %vm3574, %v3590, %v3589
    %v3592 = vrot.slane %v3563, 5
    %v3593 = vsel %vm244, %v3592, 0.0
    %v3594 = vsel %vm3574, %v3568, %v3593
    %v3595 = vrot.slane %v3563, 6
    %v3596 = vsel %vm244, %v3595, 0.0
    %v3597 = vrot.slane %v3568, 1
    %v3598 = vsel %vm3574, %v3597, %v3596
    %v3599 = vrot.slane %v3563, 7
    %v3600 = vsel %vm244, %v3599, 0.0
    %v3601 = vrot.slane %v3568, 2
    %v3602 = vsel %vm3574, %v3601, %v3600
    %v3603 = vsel %vm244, %v3564, 0.0
    %v3604 = vrot.slane %v3568, 3
    %v3605 = vsel %vm3574, %v3604, %v3603
    %v3606 = vrot.slane %v3564, 1
    %v3607 = vsel %vm244, %v3606, 0.0
    %v3608 = vrot.slane %v3568, 4
    %v3609 = vsel %vm3574, %v3608, %v3607
    %v3610 = vrot.slane %v3564, 2
    %v3611 = vsel %vm244, %v3610, 0.0
    %v3612 = vrot.slane %v3568, 5
    %v3613 = vsel %vm3574, %v3612, %v3611
    %v3614 = vrot.slane %v3564, 3
    %v3615 = vsel %vm244, %v3614, 0.0
    %v3616 = vrot.slane %v3568, 6
    %v3617 = vsel %vm3574, %v3616, %v3615
    %v3618 = vrot.slane %v3564, 4
    %v3619 = vsel %vm244, %v3618, 0.0
    %v3620 = vrot.slane %v3569, 7
    %v3621 = vsel %vm3574, %v3620, %v3619
    %v3622 = vrot.slane %v3564, 5
    %v3623 = vsel %vm244, %v3622, 0.0
    %v3624 = vsel %vm3574, %v3569, %v3623
    %v3625 = vrot.slane %v3564, 6
    %v3626 = vsel %vm244, %v3625, 0.0
    %v3627 = vrot.slane %v3569, 1
    %v3628 = vsel %vm3574, %v3627, %v3626
    %v3629 = vrot.slane %v3564, 7
    %v3630 = vsel %vm244, %v3629, 0.0
    %v3631 = vrot.slane %v3569, 2
    %v3632 = vsel %vm3574, %v3631, %v3630
    %v3633 = vsel %vm244, %v3565, 0.0
    %v3634 = vrot.slane %v3569, 3
    %v3635 = vsel %vm3574, %v3634, %v3633
    %v3636 = vrot.slane %v3565, 1
    %v3637 = vsel %vm244, %v3636, 0.0
    %v3638 = vrot.slane %v3569, 4
    %v3639 = vsel %vm3574, %v3638, %v3637
    %v3640 = vrot.slane %v3565, 2
    %v3641 = vsel %vm244, %v3640, 0.0
    %v3642 = vrot.slane %v3569, 5
    %v3643 = vsel %vm3574, %v3642, %v3641
    %v3644 = vrot.slane %v3565, 3
    %v3645 = vsel %vm244, %v3644, 0.0
    %v3646 = vrot.slane %v3569, 6
    %v3647 = vsel %vm3574, %v3646, %v3645
    %v3648 = vrot.slane %v3565, 4
    %v3649 = vsel %vm244, %v3648, 0.0
    %v3650 = vrot.slane %v3570, 7
    %v3651 = vsel %vm3574, %v3650, %v3649
    %v3652 = vrot.slane %v3565, 5
    %v3653 = vsel %vm244, %v3652, 0.0
    %v3654 = vsel %vm3574, %v3570, %v3653
    %v3655 = vrot.slane %v3565, 6
    %v3656 = vsel %vm244, %v3655, 0.0
    %v3657 = vrot.slane %v3570, 1
    %v3658 = vsel %vm3574, %v3657, %v3656
    %v3659 = vrot.slane %v3565, 7
    %v3660 = vsel %vm244, %v3659, 0.0
    %v3661 = vrot.slane %v3570, 2
    %v3662 = vsel %vm3574, %v3661, %v3660
    %v3663 = vsel %vm244, %v3566, 0.0
    %v3664 = vrot.slane %v3570, 3
    %v3665 = vsel %vm3574, %v3664, %v3663
    %v3666 = vrot.slane %v3566, 1
    %v3667 = vsel %vm244, %v3666, 0.0
    %v3668 = vrot.slane %v3570, 4
    %v3669 = vsel %vm3574, %v3668, %v3667
    %v3670 = vrot.slane %v3566, 2
    %v3671 = vsel %vm244, %v3670, 0.0
    %v3672 = vrot.slane %v3570, 5
    %v3673 = vsel %vm3574, %v3672, %v3671
    %v3674 = vrot.slane %v3566, 3
    %v3675 = vsel %vm244, %v3674, 0.0
    %v3676 = vrot.slane %v3570, 6
    %v3677 = vsel %vm3574, %v3676, %v3675
    %v3678 = vrot.slane %v3566, 4
    %v3679 = vsel %vm244, %v3678, 0.0
    %v3680 = vrot.slane %v3571, 7
    %v3681 = vsel %vm3574, %v3680, %v3679
    %v3682 = vrot.slane %v3566, 5
    %v3683 = vsel %vm244, %v3682, 0.0
    %v3684 = vsel %vm3574, %v3571, %v3683
    %v3685 = vrot.slane %v3566, 6
    %v3686 = vsel %vm244, %v3685, 0.0
    %v3687 = vrot.slane %v3571, 1
    %v3688 = vsel %vm3574, %v3687, %v3686
    %v3689 = vrot.slane %v3566, 7
    %v3690 = vsel %vm244, %v3689, 0.0
    %v3691 = vrot.slane %v3571, 2
    %v3692 = vsel %vm3574, %v3691, %v3690
    %v3693 = vsel %vm244, %v3567, 0.0
    %v3694 = vrot.slane %v3571, 3
    %v3695 = vsel %vm3574, %v3694, %v3693
    %v3696 = vrot.slane %v3567, 1
    %v3697 = vsel %vm244, %v3696, 0.0
    %v3698 = vrot.slane %v3571, 4
    %v3699 = vsel %vm3574, %v3698, %v3697
    %v3700 = vrot.slane %v3567, 2
    %v3701 = vsel %vm244, %v3700, 0.0
    %v3702 = vrot.slane %v3571, 5
    %v3703 = vsel %vm3574, %v3702, %v3701
    %v3704 = vsel %vm244, %v3573, 0.0
    %v3705 = vrot.slane %v3571, 6
    %v3706 = vsel %vm3574, %v3705, %v3704
    %v3707 = vld [vmem:[#allocation13] sm:$0xff]
    %v3708 = vld [vmem:[#allocation13 + $0x8] sm:$0xff]
    %v3709 = vld [vmem:[#allocation13 + $0x10] sm:$0xff]
    %v3710 = vld [vmem:[#allocation13 + $0x18] sm:$0xff]
    %v3711 = vld [vmem:[#allocation13 + $0x20] sm:$0xff]
    %v3712 = vld [vmem:[#allocation13 + $0x28] sm:$0xff]
    %v3713 = vld [vmem:[#allocation13 + $0x30] sm:$0xff]
    %v3714 = vld [vmem:[#allocation13 + $0x38] sm:$0xff]
    %v3715 = vld [vmem:[#allocation13 + $0x40] sm:$0xff]
    %v3716 = vld [vmem:[#allocation13 + $0x48] sm:$0xff]
    %v3717 = vld [vmem:[#allocation13 + $0x50] sm:$0xff]
    %v3718 = vld [vmem:[#allocation13 + $0x58] sm:$0xff]
    %v3719 = vld [vmem:[#allocation13 + $0x60] sm:$0xff]
    %v3720 = vld [vmem:[#allocation13 + $0x68] sm:$0xff]
    %v3721 = vld [vmem:[#allocation13 + $0x70] sm:$0xff]
    %v3722 = vld [vmem:[#allocation13 + $0x78] sm:$0xff]
    %v3723 = vld [vmem:[#allocation13 + $0x80] sm:$0xff]
    %v3724 = vld [vmem:[#allocation13 + $0x88] sm:$0xff]
    %v3725 = vld [vmem:[#allocation13 + $0x90] sm:$0xff]
    %v3726 = vld [vmem:[#allocation13 + $0x98] sm:$0xff]
    %v3727 = vld [vmem:[#allocation13 + $0xa0] sm:$0xff]
    %v3728 = vld [vmem:[#allocation13 + $0xa8] sm:$0xff]
    %v3729 = vld [vmem:[#allocation13 + $0xb0] sm:$0xff]
    %v3730 = vld [vmem:[#allocation13 + $0xb8] sm:$0xff]
    %v3731 = vld [vmem:[#allocation13 + $0xc0] sm:$0xff]
    %v3732 = vld [vmem:[#allocation13 + $0xc8] sm:$0xff]
    %v3733 = vld [vmem:[#allocation13 + $0xd0] sm:$0xff]
    %v3734 = vld [vmem:[#allocation13 + $0xd8] sm:$0xff]
    %v3735 = vld [vmem:[#allocation13 + $0xe0] sm:$0xff]
    %v3736 = vld [vmem:[#allocation13 + $0xe8] sm:$0xff]
    %v3737 = vld [vmem:[#allocation13 + $0xf0] sm:$0xff]
    %v3738 = vld [vmem:[#allocation13 + $0xf8] sm:$0xff]
    %v3739 = vld [vmem:[#allocation13 + $0x100] sm:$0xff]
    %v3740 = vld [vmem:[#allocation13 + $0x108] sm:$0xff]
    %v3741 = vld [vmem:[#allocation13 + $0x110] sm:$0xff]
    %v3742 = vld [vmem:[#allocation13 + $0x118] sm:$0xff]
    %v3743 = vld [vmem:[#allocation13 + $0x120] sm:$0xff]
    %v3744 = vld [vmem:[#allocation13 + $0x128] sm:$0xff]
    %v3745 = vld [vmem:[#allocation13 + $0x130] sm:$0xff]
    %v3746 = vld [vmem:[#allocation13 + $0x138] sm:$0xff]
    %v3747 = vld [vmem:[#allocation13 + $0x140] sm:$0xff]
    %v3748 = vld [vmem:[#allocation13 + $0x148] sm:$0xff]
    %v3749 = vld [vmem:[#allocation13 + $0x150] sm:$0xff]
    %v3750 = vld [vmem:[#allocation13 + $0x158] sm:$0xff]
    %v3751 = vld [vmem:[#allocation13 + $0x160] sm:$0xff]
    %v3752 = vld [vmem:[#allocation13 + $0x168] sm:$0xff]
    %v3753 = vld [vmem:[#allocation13 + $0x170] sm:$0xff]
    %v3754 = vld [vmem:[#allocation13 + $0x178] sm:$0xff]
    %v3755 = vld [vmem:[#allocation13 + $0x180] sm:$0xff]
    %v3756 = vld [vmem:[#allocation13 + $0x188] sm:$0xff]
    %v3757 = vld [vmem:[#allocation13 + $0x190] sm:$0xff]
    %v3758 = vld [vmem:[#allocation13 + $0x198] sm:$0xff]
    %v3759 = vld [vmem:[#allocation13 + $0x1a0] sm:$0xff]
    %v3760 = vld [vmem:[#allocation13 + $0x1a8] sm:$0xff]
    %v3761 = vld [vmem:[#allocation13 + $0x1b0] sm:$0xff]
    %v3762 = vld [vmem:[#allocation13 + $0x1b8] sm:$0xff]
    %v3763 = vld [vmem:[#allocation13 + $0x1c0] sm:$0xff]
    %v3764 = vld [vmem:[#allocation13 + $0x1c8] sm:$0xff]
    %v3765 = vld [vmem:[#allocation13 + $0x1d0] sm:$0xff]
    %v3766 = vld [vmem:[#allocation13 + $0x1d8] sm:$0xff]
    %v3767 = vld [vmem:[#allocation13 + $0x1e0] sm:$0xff]
    %v3768 = vld [vmem:[#allocation13 + $0x1e8] sm:$0xff]
    %v3769 = vld [vmem:[#allocation13 + $0x1f0] sm:$0xff]
    %v3770 = vld [vmem:[#allocation13 + $0x1f8] sm:$0xff]
    %v3771 = vld [vmem:[#allocation13 + $0x200] sm:$0xff]
    %v3772 = vld [vmem:[#allocation13 + $0x208] sm:$0xff]
    %v3773 = vld [vmem:[#allocation13 + $0x210] sm:$0xff]
    %v3774 = vld [vmem:[#allocation13 + $0x218] sm:$0xff]
    %v3775 = vld [vmem:[#allocation13 + $0x220] sm:$0xff]
    %v3776 = vld [vmem:[#allocation13 + $0x228] sm:$0xff]
    %v3777 = vld [vmem:[#allocation13 + $0x230] sm:$0xff]
    %v3778 = vld [vmem:[#allocation13 + $0x238] sm:$0xff]
    %v3779 = vld [vmem:[#allocation13 + $0x240] sm:$0xff]
    %v3780 = vld [vmem:[#allocation13 + $0x248] sm:$0xff]
    %v3781 = vld [vmem:[#allocation13 + $0x250] sm:$0xff]
    %v3782 = vld [vmem:[#allocation13 + $0x258] sm:$0xff]
    %v3783 = vld [vmem:[#allocation13 + $0x260] sm:$0xff]
    %v3784 = vld [vmem:[#allocation13 + $0x268] sm:$0xff]
    %v3785 = vld [vmem:[#allocation13 + $0x270] sm:$0xff]
    %v3786 = vld [vmem:[#allocation13 + $0x278] sm:$0xff]
    %v3787 = vld [vmem:[#allocation13 + $0x280] sm:$0xff]
    %v3788 = vld [vmem:[#allocation13 + $0x288] sm:$0xff]
    %v3789 = vld [vmem:[#allocation13 + $0x290] sm:$0xff]
    %v3790 = vld [vmem:[#allocation13 + $0x298] sm:$0xff]
    %v3791 = vld [vmem:[#allocation13 + $0x2a0] sm:$0xff]
    %v3792 = vld [vmem:[#allocation13 + $0x2a8] sm:$0xff]
    %v3793 = vld [vmem:[#allocation13 + $0x2b0] sm:$0xff]
    %v3794 = vld [vmem:[#allocation13 + $0x2b8] sm:$0xff]
    %v3795 = vld [vmem:[#allocation13 + $0x2c0] sm:$0xff]
    %v3796 = vld [vmem:[#allocation13 + $0x2c8] sm:$0xff]
    %v3797 = vld [vmem:[#allocation13 + $0x2d0] sm:$0xff]
    %v3798 = vld [vmem:[#allocation13 + $0x2d8] sm:$0xff]
    %v3799 = vld [vmem:[#allocation13 + $0x2e0] sm:$0xff]
    %v3800 = vld [vmem:[#allocation13 + $0x2e8] sm:$0xff]
    %v3801 = vld [vmem:[#allocation13 + $0x2f0] sm:$0xff]
    %v3802 = vld [vmem:[#allocation13 + $0x2f8] sm:$0xff]
    %v3803 = vld [vmem:[#allocation13 + $0x300] sm:$0xff]
    %v3804 = vld [vmem:[#allocation13 + $0x308] sm:$0xff]
    %v3805 = vld [vmem:[#allocation13 + $0x310] sm:$0xff]
    %v3806 = vld [vmem:[#allocation13 + $0x318] sm:$0xff]
    %v3807 = vld [vmem:[#allocation13 + $0x320] sm:$0xff]
    %v3808 = vld [vmem:[#allocation13 + $0x328] sm:$0xff]
    %v3809 = vld [vmem:[#allocation13 + $0x330] sm:$0xff]
    %v3810 = vld [vmem:[#allocation13 + $0x338] sm:$0xff]
    %v3811 = vld [vmem:[#allocation13 + $0x340] sm:$0xff]
    %v3812 = vld [vmem:[#allocation13 + $0x348] sm:$0xff]
    %v3813 = vld [vmem:[#allocation13 + $0x350] sm:$0xff]
    %v3814 = vld [vmem:[#allocation13 + $0x358] sm:$0xff]
    %v3815 = vld [vmem:[#allocation13 + $0x360] sm:$0xff]
    %v3816 = vld [vmem:[#allocation13 + $0x368] sm:$0xff]
    %v3817 = vld [vmem:[#allocation13 + $0x370] sm:$0xff]
    %v3818 = vld [vmem:[#allocation13 + $0x378] sm:$0xff]
    %v3819 = vld [vmem:[#allocation13 + $0x380] sm:$0xff]
    %v3820 = vld [vmem:[#allocation13 + $0x388] sm:$0xff]
    %v3821 = vld [vmem:[#allocation13 + $0x390] sm:$0xff]
    %v3822 = vld [vmem:[#allocation13 + $0x398] sm:$0xff]
    %v3823 = vld [vmem:[#allocation13 + $0x3a0] sm:$0xff]
    %v3824 = vld [vmem:[#allocation13 + $0x3a8] sm:$0xff]
    %v3825 = vld [vmem:[#allocation13 + $0x3b0] sm:$0xff]
    %v3826 = vld [vmem:[#allocation13 + $0x3b8] sm:$0xff]
    %v3827 = vld [vmem:[#allocation13 + $0x3c0] sm:$0xff]
    %v3828 = vld [vmem:[#allocation13 + $0x3c8] sm:$0xff]
    %v3829 = vld [vmem:[#allocation13 + $0x3d0] sm:$0xff]
    %v3830 = vld [vmem:[#allocation13 + $0x3d8] sm:$0xff]
    %v3831 = vld [vmem:[#allocation13 + $0x3e0] sm:$0xff]
    %v3832 = vld [vmem:[#allocation13 + $0x3e8] sm:$0xff]
    %v3833 = vld [vmem:[#allocation13 + $0x3f0] sm:$0xff]
    %v3834 = vld [vmem:[#allocation13 + $0x3f8] sm:$0xff]
    %v3835 = vld [vmem:[#allocation13 + $0x400] sm:$0xff]
    %v3836 = vld [vmem:[#allocation13 + $0x408] sm:$0xff]
    %v3837 = vld [vmem:[#allocation13 + $0x410] sm:$0xff]
    %v3838 = vld [vmem:[#allocation13 + $0x418] sm:$0xff]
    %v3839 = vld [vmem:[#allocation13 + $0x420] sm:$0xff]
    %v3840 = vld [vmem:[#allocation13 + $0x428] sm:$0xff]
    %v3841 = vld [vmem:[#allocation13 + $0x430] sm:$0xff]
    %v3842 = vld [vmem:[#allocation13 + $0x438] sm:$0xff]
    %v3843 = vld [vmem:[#allocation13 + $0x440] sm:$0xff]
    %v3844 = vld [vmem:[#allocation13 + $0x448] sm:$0xff]
    %v3845 = vld [vmem:[#allocation13 + $0x450] sm:$0xff]
    %v3846 = vld [vmem:[#allocation13 + $0x458] sm:$0xff]
    %v3847 = vld [vmem:[#allocation13 + $0x460] sm:$0xff]
    %v3848 = vld [vmem:[#allocation13 + $0x468] sm:$0xff]
    %v3849 = vld [vmem:[#allocation13 + $0x470] sm:$0xff]
    %v3850 = vld [vmem:[#allocation13 + $0x478] sm:$0xff]
    %v3851 = vld [vmem:[#allocation13 + $0x480] sm:$0xff]
    %v3852 = vld [vmem:[#allocation13 + $0x488] sm:$0xff]
    %v3853 = vld [vmem:[#allocation13 + $0x490] sm:$0xff]
    %v3854 = vld [vmem:[#allocation13 + $0x498] sm:$0xff]
    %v3855 = vld [vmem:[#allocation13 + $0x4a0] sm:$0xff]
    %v3856 = vld [vmem:[#allocation13 + $0x4a8] sm:$0xff]
    %v3857 = vld [vmem:[#allocation13 + $0x4b0] sm:$0xff]
    %v3858 = vld [vmem:[#allocation13 + $0x4b8] sm:$0xff]
    %v3859 = vld [vmem:[#allocation13 + $0x4c0] sm:$0xff]
    %v3860 = vld [vmem:[#allocation13 + $0x4c8] sm:$0xff]
    %v3861 = vld [vmem:[#allocation13 + $0x4d0] sm:$0xff]
    %v3862 = vld [vmem:[#allocation13 + $0x4d8] sm:$0xff]
    %v3863 = vld [vmem:[#allocation13 + $0x4e0] sm:$0xff]
    %v3864 = vld [vmem:[#allocation13 + $0x4e8] sm:$0xff]
    %v3865 = vld [vmem:[#allocation13 + $0x4f0] sm:$0xff]
    %v3866 = vld [vmem:[#allocation13 + $0x4f8] sm:$0xff]
    %v3867 = vld [vmem:[#allocation13 + $0x500] sm:$0xff]
    %v3868 = vld [vmem:[#allocation13 + $0x508] sm:$0xff]
    %v3869 = vld [vmem:[#allocation13 + $0x510] sm:$0xff]
    %v3870 = vld [vmem:[#allocation13 + $0x518] sm:$0xff]
    %v3871 = vld [vmem:[#allocation13 + $0x520] sm:$0xff]
    %v3872 = vld [vmem:[#allocation13 + $0x528] sm:$0xff]
    %v3873 = vld [vmem:[#allocation13 + $0x530] sm:$0xff]
    %v3874 = vld [vmem:[#allocation13 + $0x538] sm:$0xff]
    %v3875 = vld [vmem:[#allocation13 + $0x540] sm:$0xff]
    %v3876 = vld [vmem:[#allocation13 + $0x548] sm:$0xff]
    %v3877 = vld [vmem:[#allocation13 + $0x550] sm:$0xff]
    %v3878 = vld [vmem:[#allocation13 + $0x558] sm:$0xff]
    %v3879 = vld [vmem:[#allocation13 + $0x560] sm:$0xff]
    %v3880 = vld [vmem:[#allocation13 + $0x568] sm:$0xff]
    %v3881 = vld [vmem:[#allocation13 + $0x570] sm:$0xff]
    %v3882 = vld [vmem:[#allocation13 + $0x578] sm:$0xff]
    %v3883 = vld [vmem:[#allocation13 + $0x580] sm:$0xff]
    %v3884 = vld [vmem:[#allocation13 + $0x588] sm:$0xff]
    %v3885 = vld [vmem:[#allocation13 + $0x590] sm:$0xff]
    %v3886 = vld [vmem:[#allocation13 + $0x598] sm:$0xff]
    %v3887 = vld [vmem:[#allocation13 + $0x5a0] sm:$0xff]
    %v3888 = vld [vmem:[#allocation13 + $0x5a8] sm:$0xff]
    %v3889 = vld [vmem:[#allocation13 + $0x5b0] sm:$0xff]
    %v3890 = vld [vmem:[#allocation13 + $0x5b8] sm:$0xff]
    %v3891 = vld [vmem:[#allocation13 + $0x5c0] sm:$0xff]
    %v3892 = vld [vmem:[#allocation13 + $0x5c8] sm:$0xff]
    %v3893 = vld [vmem:[#allocation13 + $0x5d0] sm:$0xff]
    %v3894 = vld [vmem:[#allocation13 + $0x5d8] sm:$0xff]
    %v3895 = vld [vmem:[#allocation13 + $0x5e0] sm:$0xff]
    %v3896 = vld [vmem:[#allocation13 + $0x5e8] sm:$0xff]
    %v3897 = vld [vmem:[#allocation13 + $0x5f0] sm:$0xff]
    %v3898 = vld [vmem:[#allocation13 + $0x5f8] sm:$0xff]
    %v3899 = vld [vmem:[#allocation13 + $0x600] sm:$0xff]
    %v3900 = vld [vmem:[#allocation13 + $0x608] sm:$0xff]
    %v3901 = vld [vmem:[#allocation13 + $0x610] sm:$0xff]
    %v3902 = vld [vmem:[#allocation13 + $0x618] sm:$0xff]
    %v3903 = vld [vmem:[#allocation13 + $0x620] sm:$0xff]
    %v3904 = vld [vmem:[#allocation13 + $0x628] sm:$0xff]
    %v3905 = vld [vmem:[#allocation13 + $0x630] sm:$0xff]
    %v3906 = vld [vmem:[#allocation13 + $0x638] sm:$0xff]
    %v3907 = vld [vmem:[#allocation13 + $0x640] sm:$0xff]
    %v3908 = vld [vmem:[#allocation13 + $0x648] sm:$0xff]
    %v3909 = vld [vmem:[#allocation13 + $0x650] sm:$0xff]
    %v3910 = vld [vmem:[#allocation13 + $0x658] sm:$0xff]
    %v3911 = vld [vmem:[#allocation13 + $0x660] sm:$0xff]
    %v3912 = vld [vmem:[#allocation13 + $0x668] sm:$0xff]
    %v3913 = vld [vmem:[#allocation13 + $0x670] sm:$0xff]
    %v3914 = vld [vmem:[#allocation13 + $0x678] sm:$0xff]
    %v3915 = vld [vmem:[#allocation13 + $0x680] sm:$0xff]
    %v3916 = vld [vmem:[#allocation13 + $0x688] sm:$0xff]
    %v3917 = vld [vmem:[#allocation13 + $0x690] sm:$0xff]
    %v3918 = vld [vmem:[#allocation13 + $0x698] sm:$0xff]
    %v3919 = vld [vmem:[#allocation13 + $0x6a0] sm:$0xff]
    %v3920 = vld [vmem:[#allocation13 + $0x6a8] sm:$0xff]
    %v3921 = vld [vmem:[#allocation13 + $0x6b0] sm:$0xff]
    %v3922 = vld [vmem:[#allocation13 + $0x6b8] sm:$0xff]
    %v3923 = vld [vmem:[#allocation13 + $0x6c0] sm:$0xff]
    %v3924 = vld [vmem:[#allocation13 + $0x6c8] sm:$0xff]
    %v3925 = vld [vmem:[#allocation13 + $0x6d0] sm:$0xff]
    %v3926 = vld [vmem:[#allocation13 + $0x6d8] sm:$0xff]
    %v3927 = vld [vmem:[#allocation13 + $0x6e0] sm:$0xff]
    %v3928 = vld [vmem:[#allocation13 + $0x6e8] sm:$0xff]
    %v3929 = vld [vmem:[#allocation13 + $0x6f0] sm:$0xff]
    %v3930 = vld [vmem:[#allocation13 + $0x6f8] sm:$0xff]
    %v3931 = vld [vmem:[#allocation13 + $0x700] sm:$0xff]
    %v3932 = vld [vmem:[#allocation13 + $0x708] sm:$0xff]
    %v3933 = vld [vmem:[#allocation13 + $0x710] sm:$0xff]
    %v3934 = vld [vmem:[#allocation13 + $0x718] sm:$0xff]
    %v3935 = vld [vmem:[#allocation13 + $0x720] sm:$0xff]
    %v3936 = vld [vmem:[#allocation13 + $0x728] sm:$0xff]
    %v3937 = vld [vmem:[#allocation13 + $0x730] sm:$0xff]
    %v3938 = vld [vmem:[#allocation13 + $0x738] sm:$0xff]
    %v3939 = vld [vmem:[#allocation13 + $0x740] sm:$0xff]
    %v3940 = vld [vmem:[#allocation13 + $0x748] sm:$0xff]
    %v3941 = vld [vmem:[#allocation13 + $0x750] sm:$0xff]
    %v3942 = vld [vmem:[#allocation13 + $0x758] sm:$0xff]
    %v3943 = vld [vmem:[#allocation13 + $0x760] sm:$0xff]
    %v3944 = vld [vmem:[#allocation13 + $0x768] sm:$0xff]
    %v3945 = vld [vmem:[#allocation13 + $0x770] sm:$0xff]
    %v3946 = vld [vmem:[#allocation13 + $0x778] sm:$0xff]
    %v3947 = vld [vmem:[#allocation13 + $0x780] sm:$0xff]
    %v3948 = vld [vmem:[#allocation13 + $0x788] sm:$0xff]
    %v3949 = vld [vmem:[#allocation13 + $0x790] sm:$0xff]
    %v3950 = vld [vmem:[#allocation13 + $0x798] sm:$0xff]
    %v3951 = vld [vmem:[#allocation13 + $0x7a0] sm:$0xff]
    %v3952 = vld [vmem:[#allocation13 + $0x7a8] sm:$0xff]
    %v3953 = vld [vmem:[#allocation13 + $0x7b0] sm:$0xff]
    %v3954 = vld [vmem:[#allocation13 + $0x7b8] sm:$0xff]
    %v3955 = vld [vmem:[#allocation13 + $0x7c0] sm:$0xff]
    %v3956 = vld [vmem:[#allocation13 + $0x7c8] sm:$0xff]
    %v3957 = vld [vmem:[#allocation13 + $0x7d0] sm:$0xff]
    %v3958 = vld [vmem:[#allocation13 + $0x7d8] sm:$0xff]
    %v3959 = vld [vmem:[#allocation13 + $0x7e0] sm:$0xff]
    %v3960 = vld [vmem:[#allocation13 + $0x7e8] sm:$0xff]
    %v3961 = vld [vmem:[#allocation13 + $0x7f0] sm:$0xff]
    %v3962 = vld [vmem:[#allocation13 + $0x7f8] sm:$0xff]
    %v3963 = vld [vmem:[#allocation13 + $0x800] sm:$0xff]
    %v3964 = vld [vmem:[#allocation13 + $0x808] sm:$0xff]
    %v3965 = vld [vmem:[#allocation13 + $0x810] sm:$0xff]
    %v3966 = vld [vmem:[#allocation13 + $0x818] sm:$0xff]
    %v3967 = vld [vmem:[#allocation13 + $0x820] sm:$0xff]
    %v3968 = vld [vmem:[#allocation13 + $0x828] sm:$0xff]
    %v3969 = vld [vmem:[#allocation13 + $0x830] sm:$0xff]
    %v3970 = vld [vmem:[#allocation13 + $0x838] sm:$0xff]
    %v3971 = vld [vmem:[#allocation13 + $0x840] sm:$0xff]
    %v3972 = vld [vmem:[#allocation13 + $0x848] sm:$0xff]
    %v3973 = vld [vmem:[#allocation13 + $0x850] sm:$0xff]
    %v3974 = vld [vmem:[#allocation13 + $0x858] sm:$0xff]
    %v3975 = vld [vmem:[#allocation13 + $0x860] sm:$0xff]
    %v3976 = vld [vmem:[#allocation13 + $0x868] sm:$0xff]
    %v3977 = vld [vmem:[#allocation13 + $0x870] sm:$0xff]
    %v3978 = vld [vmem:[#allocation13 + $0x878] sm:$0xff]
    %v3979 = vld [vmem:[#allocation13 + $0x880] sm:$0xff]
    %v3980 = vld [vmem:[#allocation13 + $0x888] sm:$0xff]
    %v3981 = vld [vmem:[#allocation13 + $0x890] sm:$0xff]
    %v3982 = vld [vmem:[#allocation13 + $0x898] sm:$0xff]
    %v3983 = vld [vmem:[#allocation13 + $0x8a0] sm:$0xff]
    %v3984 = vld [vmem:[#allocation13 + $0x8a8] sm:$0xff]
    %v3985 = vld [vmem:[#allocation13 + $0x8b0] sm:$0xff]
    %v3986 = vld [vmem:[#allocation13 + $0x8b8] sm:$0xff]
    %v3987 = vld [vmem:[#allocation13 + $0x8c0] sm:$0xff]
    %v3988 = vld [vmem:[#allocation13 + $0x8c8] sm:$0xff]
    %v3989 = vld [vmem:[#allocation13 + $0x8d0] sm:$0xff]
    %v3990 = vld [vmem:[#allocation13 + $0x8d8] sm:$0xff]
    %v3991 = vld [vmem:[#allocation13 + $0x8e0] sm:$0xff]
    %v3992 = vld [vmem:[#allocation13 + $0x8e8] sm:$0xff]
    %v3993 = vld [vmem:[#allocation13 + $0x8f0] sm:$0xff]
    %v3994 = vld [vmem:[#allocation13 + $0x8f8] sm:$0xff]
    %v3995 = vld [vmem:[#allocation13 + $0x900] sm:$0xff]
    %v3996 = vld [vmem:[#allocation13 + $0x908] sm:$0xff]
    %v3997 = vld [vmem:[#allocation13 + $0x910] sm:$0xff]
    %v3998 = vld [vmem:[#allocation13 + $0x918] sm:$0xff]
    %v3999 = vld [vmem:[#allocation13 + $0x920] sm:$0xff]
    %v4000 = vld [vmem:[#allocation13 + $0x928] sm:$0xff]
    %v4001 = vld [vmem:[#allocation13 + $0x930] sm:$0xff]
    %v4002 = vld [vmem:[#allocation13 + $0x938] sm:$0xff]
    %v4003 = vld [vmem:[#allocation13 + $0x940] sm:$0xff]
    %v4004 = vld [vmem:[#allocation13 + $0x948] sm:$0xff]
    %v4005 = vld [vmem:[#allocation13 + $0x950] sm:$0xff]
    %v4006 = vld [vmem:[#allocation13 + $0x958] sm:$0xff]
    %v4007 = vld [vmem:[#allocation13 + $0x960] sm:$0xff]
    %v4008 = vld [vmem:[#allocation13 + $0x968] sm:$0xff]
    %v4009 = vld [vmem:[#allocation13 + $0x970] sm:$0xff]
    %v4010 = vld [vmem:[#allocation13 + $0x978] sm:$0xff]
    %v4011 = vld [vmem:[#allocation13 + $0x980] sm:$0xff]
    %v4012 = vld [vmem:[#allocation13 + $0x988] sm:$0xff]
    %v4013 = vld [vmem:[#allocation13 + $0x990] sm:$0xff]
    %v4014 = vld [vmem:[#allocation13 + $0x998] sm:$0xff]
    %v4015 = vld [vmem:[#allocation13 + $0x9a0] sm:$0xff]
    %v4016 = vld [vmem:[#allocation13 + $0x9a8] sm:$0xff]
    %v4017 = vld [vmem:[#allocation13 + $0x9b0] sm:$0xff]
    %v4018 = vld [vmem:[#allocation13 + $0x9b8] sm:$0xff]
    %v4019 = vld [vmem:[#allocation13 + $0x9c0] sm:$0xff]
    %v4020 = vld [vmem:[#allocation13 + $0x9c8] sm:$0xff]
    %v4021 = vld [vmem:[#allocation13 + $0x9d0] sm:$0xff]
    %v4022 = vld [vmem:[#allocation13 + $0x9d8] sm:$0xff]
    %v4023 = vld [vmem:[#allocation13 + $0x9e0] sm:$0xff]
    %v4024 = vld [vmem:[#allocation13 + $0x9e8] sm:$0xff]
    %v4025 = vld [vmem:[#allocation13 + $0x9f0] sm:$0xff]
    %v4026 = vld [vmem:[#allocation13 + $0x9f8] sm:$0xff]
    %v4027 = vld [vmem:[#allocation13 + $0xa00] sm:$0xff]
    %v4028 = vld [vmem:[#allocation13 + $0xa08] sm:$0xff]
    %v4029 = vld [vmem:[#allocation13 + $0xa10] sm:$0xff]
    %v4030 = vld [vmem:[#allocation13 + $0xa18] sm:$0xff]
    %v4031 = vld [vmem:[#allocation13 + $0xa20] sm:$0xff]
    %v4032 = vld [vmem:[#allocation13 + $0xa28] sm:$0xff]
    %v4033 = vld [vmem:[#allocation13 + $0xa30] sm:$0xff]
    %v4034 = vld [vmem:[#allocation13 + $0xa38] sm:$0xff]
    %v4035 = vld [vmem:[#allocation13 + $0xa40] sm:$0xff]
    %v4036 = vld [vmem:[#allocation13 + $0xa48] sm:$0xff]
    %v4037 = vld [vmem:[#allocation13 + $0xa50] sm:$0xff]
    %v4038 = vld [vmem:[#allocation13 + $0xa58] sm:$0xff]
    %v4039 = vld [vmem:[#allocation13 + $0xa60] sm:$0xff]
    %v4040 = vld [vmem:[#allocation13 + $0xa68] sm:$0xff]
    %v4041 = vld [vmem:[#allocation13 + $0xa70] sm:$0xff]
    %v4042 = vld [vmem:[#allocation13 + $0xa78] sm:$0xff]
    %v4043 = vld [vmem:[#allocation13 + $0xa80] sm:$0xff]
    %v4044 = vld [vmem:[#allocation13 + $0xa88] sm:$0xff]
    %v4045 = vld [vmem:[#allocation13 + $0xa90] sm:$0xff]
    %v4046 = vld [vmem:[#allocation13 + $0xa98] sm:$0xff]
    %v4047 = vld [vmem:[#allocation13 + $0xaa0] sm:$0xff]
    %v4048 = vld [vmem:[#allocation13 + $0xaa8] sm:$0xff]
    %v4049 = vld [vmem:[#allocation13 + $0xab0] sm:$0xff]
    %v4050 = vld [vmem:[#allocation13 + $0xab8] sm:$0xff]
    %v4051 = vld [vmem:[#allocation13 + $0xac0] sm:$0xff]
    %v4052 = vld [vmem:[#allocation13 + $0xac8] sm:$0xff]
    %v4053 = vld [vmem:[#allocation13 + $0xad0] sm:$0xff]
    %v4054 = vld [vmem:[#allocation13 + $0xad8] sm:$0xff]
    %v4055 = vld [vmem:[#allocation13 + $0xae0] sm:$0xff]
    %v4056 = vld [vmem:[#allocation13 + $0xae8] sm:$0xff]
    %v4057 = vld [vmem:[#allocation13 + $0xaf0] sm:$0xff]
    %v4058 = vld [vmem:[#allocation13 + $0xaf8] sm:$0xff]
    %v4059 = vld [vmem:[#allocation13 + $0xb00] sm:$0xff]
    %v4060 = vld [vmem:[#allocation13 + $0xb08] sm:$0xff]
    %v4061 = vld [vmem:[#allocation13 + $0xb10] sm:$0xff]
    %v4062 = vld [vmem:[#allocation13 + $0xb18] sm:$0xff]
    %v4063 = vld [vmem:[#allocation13 + $0xb20] sm:$0xff]
    %v4064 = vld [vmem:[#allocation13 + $0xb28] sm:$0xff]
    %v4065 = vld [vmem:[#allocation13 + $0xb30] sm:$0xff]
    %v4066 = vld [vmem:[#allocation13 + $0xb38] sm:$0xff]
    %v4067 = vld [vmem:[#allocation13 + $0xb40] sm:$0xff]
    %v4068 = vld [vmem:[#allocation13 + $0xb48] sm:$0xff]
    %v4069 = vld [vmem:[#allocation13 + $0xb50] sm:$0xff]
    %v4070 = vld [vmem:[#allocation13 + $0xb58] sm:$0xff]
    %v4071 = vld [vmem:[#allocation13 + $0xb60] sm:$0xff]
    %v4072 = vld [vmem:[#allocation13 + $0xb68] sm:$0xff]
    %v4073 = vld [vmem:[#allocation13 + $0xb70] sm:$0xff]
    %v4074 = vld [vmem:[#allocation13 + $0xb78] sm:$0xff]
    %v4075 = vld [vmem:[#allocation13 + $0xb80] sm:$0xff]
    %v4076 = vld [vmem:[#allocation13 + $0xb88] sm:$0xff]
    %v4077 = vld [vmem:[#allocation13 + $0xb90] sm:$0xff]
    %v4078 = vld [vmem:[#allocation13 + $0xb98] sm:$0xff]
    %v4079 = vld [vmem:[#allocation13 + $0xba0] sm:$0xff]
    %v4080 = vld [vmem:[#allocation13 + $0xba8] sm:$0xff]
    %v4081 = vld [vmem:[#allocation13 + $0xbb0] sm:$0xff]
    %v4082 = vld [vmem:[#allocation13 + $0xbb8] sm:$0xff]
    %v4083 = vld [vmem:[#allocation13 + $0xbc0] sm:$0xff]
    %v4084 = vld [vmem:[#allocation13 + $0xbc8] sm:$0xff]
    %v4085 = vld [vmem:[#allocation13 + $0xbd0] sm:$0xff]
    %v4086 = vld [vmem:[#allocation13 + $0xbd8] sm:$0xff]
    %v4087 = vld [vmem:[#allocation13 + $0xbe0] sm:$0xff]
    %v4088 = vld [vmem:[#allocation13 + $0xbe8] sm:$0xff]
    %v4089 = vld [vmem:[#allocation13 + $0xbf0] sm:$0xff]
    %v4090 = vld [vmem:[#allocation13 + $0xbf8] sm:$0xff]
    %v4091 = vld [vmem:[#allocation13 + $0xc00] sm:$0xff]
    %v4092 = vld [vmem:[#allocation13 + $0xc08] sm:$0xff]
    %v4093 = vld [vmem:[#allocation13 + $0xc10] sm:$0xff]
    %v4094 = vld [vmem:[#allocation13 + $0xc18] sm:$0xff]
    %v4095 = vld [vmem:[#allocation13 + $0xc20] sm:$0xff]
    %v4096 = vld [vmem:[#allocation13 + $0xc28] sm:$0xff]
    %v4097 = vld [vmem:[#allocation13 + $0xc30] sm:$0xff]
    %v4098 = vld [vmem:[#allocation13 + $0xc38] sm:$0xff]
    %v4099 = vld [vmem:[#allocation13 + $0xc40] sm:$0xff]
    %v4100 = vld [vmem:[#allocation13 + $0xc48] sm:$0xff]
    %v4101 = vld [vmem:[#allocation13 + $0xc50] sm:$0xff]
    %v4102 = vld [vmem:[#allocation13 + $0xc58] sm:$0xff]
    %v4103 = vld [vmem:[#allocation13 + $0xc60] sm:$0xff]
    %v4104 = vld [vmem:[#allocation13 + $0xc68] sm:$0xff]
    %v4105 = vld [vmem:[#allocation13 + $0xc70] sm:$0xff]
    %v4106 = vld [vmem:[#allocation13 + $0xc78] sm:$0xff]
    %v4107 = vld [vmem:[#allocation13 + $0xc80] sm:$0xff]
    %v4108 = vld [vmem:[#allocation13 + $0xc88] sm:$0xff]
    %v4109 = vld [vmem:[#allocation13 + $0xc90] sm:$0xff]
    %v4110 = vld [vmem:[#allocation13 + $0xc98] sm:$0xff]
    %v4111 = vld [vmem:[#allocation13 + $0xca0] sm:$0xff]
    %v4112 = vld [vmem:[#allocation13 + $0xca8] sm:$0xff]
    %v4113 = vld [vmem:[#allocation13 + $0xcb0] sm:$0xff]
    %v4114 = vld [vmem:[#allocation13 + $0xcb8] sm:$0xff]
    %v4115 = vld [vmem:[#allocation13 + $0xcc0] sm:$0xff]
    %v4116 = vld [vmem:[#allocation13 + $0xcc8] sm:$0xff]
    %v4117 = vld [vmem:[#allocation13 + $0xcd0] sm:$0xff]
    %v4118 = vld [vmem:[#allocation13 + $0xcd8] sm:$0xff]
    %v4119 = vld [vmem:[#allocation13 + $0xce0] sm:$0xff]
    %v4120 = vld [vmem:[#allocation13 + $0xce8] sm:$0xff]
    %v4121 = vld [vmem:[#allocation13 + $0xcf0] sm:$0xff]
    %v4122 = vld [vmem:[#allocation13 + $0xcf8] sm:$0xff]
    %v4123 = vld [vmem:[#allocation13 + $0xd00] sm:$0xff]
    %v4124 = vld [vmem:[#allocation13 + $0xd08] sm:$0xff]
    %v4125 = vld [vmem:[#allocation13 + $0xd10] sm:$0xff]
    %v4126 = vld [vmem:[#allocation13 + $0xd18] sm:$0xff]
    %v4127 = vld [vmem:[#allocation13 + $0xd20] sm:$0xff]
    %v4128 = vld [vmem:[#allocation13 + $0xd28] sm:$0xff]
    %v4129 = vld [vmem:[#allocation13 + $0xd30] sm:$0xff]
    %v4130 = vld [vmem:[#allocation13 + $0xd38] sm:$0xff]
    %v4131 = vld [vmem:[#allocation13 + $0xd40] sm:$0xff]
    %v4132 = vld [vmem:[#allocation13 + $0xd48] sm:$0xff]
    %v4133 = vld [vmem:[#allocation13 + $0xd50] sm:$0xff]
    %v4134 = vld [vmem:[#allocation13 + $0xd58] sm:$0xff]
    %v4135 = vld [vmem:[#allocation13 + $0xd60] sm:$0xff]
    %v4136 = vld [vmem:[#allocation13 + $0xd68] sm:$0xff]
    %v4137 = vld [vmem:[#allocation13 + $0xd70] sm:$0xff]
    %v4138 = vld [vmem:[#allocation13 + $0xd78] sm:$0xff]
    %v4139 = vld [vmem:[#allocation13 + $0xd80] sm:$0xff]
    %v4140 = vld [vmem:[#allocation13 + $0xd88] sm:$0xff]
    %v4141 = vld [vmem:[#allocation13 + $0xd90] sm:$0xff]
    %v4142 = vld [vmem:[#allocation13 + $0xd98] sm:$0xff]
    %v4143 = vld [vmem:[#allocation13 + $0xda0] sm:$0xff]
    %v4144 = vld [vmem:[#allocation13 + $0xda8] sm:$0xff]
    %v4145 = vld [vmem:[#allocation13 + $0xdb0] sm:$0xff]
    %v4146 = vld [vmem:[#allocation13 + $0xdb8] sm:$0xff]
    %v4147 = vld [vmem:[#allocation13 + $0xdc0] sm:$0xff]
    %v4148 = vld [vmem:[#allocation13 + $0xdc8] sm:$0xff]
    %v4149 = vld [vmem:[#allocation13 + $0xdd0] sm:$0xff]
    %v4150 = vld [vmem:[#allocation13 + $0xdd8] sm:$0xff]
    %v4151 = vld [vmem:[#allocation13 + $0xde0] sm:$0xff]
    %v4152 = vld [vmem:[#allocation13 + $0xde8] sm:$0xff]
    %v4153 = vld [vmem:[#allocation13 + $0xdf0] sm:$0xff]
    %v4154 = vld [vmem:[#allocation13 + $0xdf8] sm:$0xff]
    %v4155 = vld [vmem:[#allocation13 + $0xe00] sm:$0xff]
    %v4156 = vld [vmem:[#allocation13 + $0xe08] sm:$0xff]
    %v4157 = vld [vmem:[#allocation13 + $0xe10] sm:$0xff]
    %v4158 = vld [vmem:[#allocation13 + $0xe18] sm:$0xff]
    %v4159 = vld [vmem:[#allocation13 + $0xe20] sm:$0xff]
    %v4160 = vld [vmem:[#allocation13 + $0xe28] sm:$0xff]
    %v4161 = vld [vmem:[#allocation13 + $0xe30] sm:$0xff]
    %v4162 = vld [vmem:[#allocation13 + $0xe38] sm:$0xff]
    %v4163 = vld [vmem:[#allocation13 + $0xe40] sm:$0xff]
    %v4164 = vld [vmem:[#allocation13 + $0xe48] sm:$0xff]
    %v4165 = vld [vmem:[#allocation13 + $0xe50] sm:$0xff]
    %v4166 = vld [vmem:[#allocation13 + $0xe58] sm:$0xff]
    %v4167 = vld [vmem:[#allocation13 + $0xe60] sm:$0xff]
    %v4168 = vld [vmem:[#allocation13 + $0xe68] sm:$0xff]
    %v4169 = vld [vmem:[#allocation13 + $0xe70] sm:$0xff]
    %v4170 = vld [vmem:[#allocation13 + $0xe78] sm:$0xff]
    %v4171 = vld [vmem:[#allocation13 + $0xe80] sm:$0xff]
    %v4172 = vld [vmem:[#allocation13 + $0xe88] sm:$0xff]
    %v4173 = vld [vmem:[#allocation13 + $0xe90] sm:$0xff]
    %v4174 = vld [vmem:[#allocation13 + $0xe98] sm:$0xff]
    %v4175 = vld [vmem:[#allocation13 + $0xea0] sm:$0xff]
    %v4176 = vld [vmem:[#allocation13 + $0xea8] sm:$0xff]
    %v4177 = vld [vmem:[#allocation13 + $0xeb0] sm:$0xff]
    %v4178 = vld [vmem:[#allocation13 + $0xeb8] sm:$0xff]
    %v4179 = vld [vmem:[#allocation13 + $0xec0] sm:$0xff]
    %v4180 = vld [vmem:[#allocation13 + $0xec8] sm:$0xff]
    %v4181 = vld [vmem:[#allocation13 + $0xed0] sm:$0xff]
    %v4182 = vld [vmem:[#allocation13 + $0xed8] sm:$0xff]
    %v4183 = vld [vmem:[#allocation13 + $0xee0] sm:$0xff]
    %v4184 = vld [vmem:[#allocation13 + $0xee8] sm:$0xff]
    %v4185 = vld [vmem:[#allocation13 + $0xef0] sm:$0xff]
    %v4186 = vld [vmem:[#allocation13 + $0xef8] sm:$0xff]
    %v4187 = vld [vmem:[#allocation13 + $0xf00] sm:$0xff]
    %v4188 = vld [vmem:[#allocation13 + $0xf08] sm:$0xff]
    %v4189 = vld [vmem:[#allocation13 + $0xf10] sm:$0xff]
    %v4190 = vld [vmem:[#allocation13 + $0xf18] sm:$0xff]
    %v4191 = vld [vmem:[#allocation13 + $0xf20] sm:$0xff]
    %v4192 = vld [vmem:[#allocation13 + $0xf28] sm:$0xff]
    %v4193 = vld [vmem:[#allocation13 + $0xf30] sm:$0xff]
    %v4194 = vld [vmem:[#allocation13 + $0xf38] sm:$0xff]
    %v4195 = vld [vmem:[#allocation13 + $0xf40] sm:$0xff]
    %v4196 = vld [vmem:[#allocation13 + $0xf48] sm:$0xff]
    %v4197 = vld [vmem:[#allocation13 + $0xf50] sm:$0xff]
    %v4198 = vld [vmem:[#allocation13 + $0xf58] sm:$0xff]
    %v4199 = vld [vmem:[#allocation13 + $0xf60] sm:$0xff]
    %v4200 = vld [vmem:[#allocation13 + $0xf68] sm:$0xff]
    %v4201 = vld [vmem:[#allocation13 + $0xf70] sm:$0xff]
    %v4202 = vld [vmem:[#allocation13 + $0xf78] sm:$0xff]
    %v4203 = vld [vmem:[#allocation13 + $0xf80] sm:$0xff]
    %v4204 = vld [vmem:[#allocation13 + $0xf88] sm:$0xff]
    %v4205 = vld [vmem:[#allocation13 + $0xf90] sm:$0xff]
    %v4206 = vld [vmem:[#allocation13 + $0xf98] sm:$0xff]
    %v4207 = vld [vmem:[#allocation13 + $0xfa0] sm:$0xff]
    %v4208 = vld [vmem:[#allocation13 + $0xfa8] sm:$0xff]
    %v4209 = vld [vmem:[#allocation13 + $0xfb0] sm:$0xff]
    %v4210 = vld [vmem:[#allocation13 + $0xfb8] sm:$0xff]
    %v4211 = vld [vmem:[#allocation13 + $0xfc0] sm:$0xff]
    %v4212 = vld [vmem:[#allocation13 + $0xfc8] sm:$0xff]
    %v4213 = vld [vmem:[#allocation13 + $0xfd0] sm:$0xff]
    %v4214 = vld [vmem:[#allocation13 + $0xfd8] sm:$0xff]
    %v4215 = vld [vmem:[#allocation13 + $0xfe0] sm:$0xff]
    %v4216 = vld [vmem:[#allocation13 + $0xfe8] sm:$0xff]
    %v4217 = vld [vmem:[#allocation13 + $0xff0] sm:$0xff]
    %v4218 = vld [vmem:[#allocation13 + $0xff8] sm:$0xff]
    %v4219 = vld [vmem:[#allocation13 + $0x1000] sm:$0xff]
    %v4220 = vld [vmem:[#allocation13 + $0x1008] sm:$0xff]
    %v4221 = vld [vmem:[#allocation13 + $0x1010] sm:$0xff]
    %v4222 = vld [vmem:[#allocation13 + $0x1018] sm:$0xff]
    %v4223 = vld [vmem:[#allocation13 + $0x1020] sm:$0xff]
    %v4224 = vld [vmem:[#allocation13 + $0x1028] sm:$0xff]
    %v4225 = vld [vmem:[#allocation13 + $0x1030] sm:$0xff]
    %v4226 = vld [vmem:[#allocation13 + $0x1038] sm:$0xff]
    %v4227 = vld [vmem:[#allocation13 + $0x1040] sm:$0xff]
    %v4228 = vld [vmem:[#allocation13 + $0x1048] sm:$0xff]
    %v4229 = vld [vmem:[#allocation13 + $0x1050] sm:$0xff]
    %v4230 = vld [vmem:[#allocation13 + $0x1058] sm:$0xff]
    %v4231 = vld [vmem:[#allocation13 + $0x1060] sm:$0xff]
    %v4232 = vld [vmem:[#allocation13 + $0x1068] sm:$0xff]
    %v4233 = vld [vmem:[#allocation13 + $0x1070] sm:$0xff]
    %v4234 = vld [vmem:[#allocation13 + $0x1078] sm:$0xff]
    %v4235 = vld [vmem:[#allocation13 + $0x1080] sm:$0xff]
    %v4236 = vld [vmem:[#allocation13 + $0x1088] sm:$0xff]
    %v4237 = vld [vmem:[#allocation13 + $0x1090] sm:$0xff]
    %v4238 = vld [vmem:[#allocation13 + $0x1098] sm:$0xff]
    %v4239 = vld [vmem:[#allocation13 + $0x10a0] sm:$0xff]
    %v4240 = vld [vmem:[#allocation13 + $0x10a8] sm:$0xff]
    %v4241 = vld [vmem:[#allocation13 + $0x10b0] sm:$0xff]
    %v4242 = vld [vmem:[#allocation13 + $0x10b8] sm:$0xff]
    %v4243 = vld [vmem:[#allocation13 + $0x10c0] sm:$0xff]
    %v4244 = vld [vmem:[#allocation13 + $0x10c8] sm:$0xff]
    %v4245 = vld [vmem:[#allocation13 + $0x10d0] sm:$0xff]
    %v4246 = vld [vmem:[#allocation13 + $0x10d8] sm:$0xff]
    %v4247 = vld [vmem:[#allocation13 + $0x10e0] sm:$0xff]
    %v4248 = vld [vmem:[#allocation13 + $0x10e8] sm:$0xff]
    %v4249 = vld [vmem:[#allocation13 + $0x10f0] sm:$0xff]
    %v4250 = vld [vmem:[#allocation13 + $0x10f8] sm:$0xff]
    %v4251 = vld [vmem:[#allocation13 + $0x1100] sm:$0xff]
    %v4252 = vld [vmem:[#allocation13 + $0x1108] sm:$0xff]
    %v4253 = vld [vmem:[#allocation13 + $0x1110] sm:$0xff]
    %v4254 = vld [vmem:[#allocation13 + $0x1118] sm:$0xff]
    %v4255 = vld [vmem:[#allocation13 + $0x1120] sm:$0xff]
    %v4256 = vld [vmem:[#allocation13 + $0x1128] sm:$0xff]
    %v4257 = vld [vmem:[#allocation13 + $0x1130] sm:$0xff]
    %v4258 = vld [vmem:[#allocation13 + $0x1138] sm:$0xff]
    %v4259 = vld [vmem:[#allocation13 + $0x1140] sm:$0xff]
    %v4260 = vld [vmem:[#allocation13 + $0x1148] sm:$0xff]
    %v4261 = vld [vmem:[#allocation13 + $0x1150] sm:$0xff]
    %v4262 = vld [vmem:[#allocation13 + $0x1158] sm:$0xff]
    %v4263 = vld [vmem:[#allocation13 + $0x1160] sm:$0xff]
    %v4264 = vld [vmem:[#allocation13 + $0x1168] sm:$0xff]
    %v4265 = vld [vmem:[#allocation13 + $0x1170] sm:$0xff]
    %v4266 = vld [vmem:[#allocation13 + $0x1178] sm:$0xff]
    %v4267 = vld [vmem:[#allocation13 + $0x1180] sm:$0xff]
    %v4268 = vld [vmem:[#allocation13 + $0x1188] sm:$0xff]
    %v4269 = vld [vmem:[#allocation13 + $0x1190] sm:$0xff]
    %v4270 = vld [vmem:[#allocation13 + $0x1198] sm:$0xff]
    %v4271 = vld [vmem:[#allocation13 + $0x11a0] sm:$0xff]
    %v4272 = vld [vmem:[#allocation13 + $0x11a8] sm:$0xff]
    %v4273 = vld [vmem:[#allocation13 + $0x11b0] sm:$0xff]
    %v4274 = vld [vmem:[#allocation13 + $0x11b8] sm:$0xff]
    %v4275 = vld [vmem:[#allocation13 + $0x11c0] sm:$0xff]
    %v4276 = vld [vmem:[#allocation13 + $0x11c8] sm:$0xff]
    %v4277 = vld [vmem:[#allocation13 + $0x11d0] sm:$0xff]
    %v4278 = vld [vmem:[#allocation13 + $0x11d8] sm:$0xff]
    %v4279 = vld [vmem:[#allocation13 + $0x11e0] sm:$0xff]
    %v4280 = vld [vmem:[#allocation13 + $0x11e8] sm:$0xff]
    %v4281 = vld [vmem:[#allocation13 + $0x11f0] sm:$0xff]
    %v4282 = vld [vmem:[#allocation13 + $0x11f8] sm:$0xff]
    %v4283 = vld [vmem:[#allocation14] sm:$0x1]
    %v4285 = vlaneseq
    %v4286 = vshrl.u32 %v4285, 7
    %v4287 = vsub.s32 0, %v4286
    %v4288 = vrot.slane %v4283, %v4287
    %4290 = vmatprep.subr.mxu0 0.0
    %4291 = vmatpush1.msra.mxu0 %v3707
    %4292 = vmatprep.subr.mxu0 0.0
    %4293 = vmatpush1.msra.mxu0 %v3708
    %4294 = vmatprep.subr.mxu0 0.0
    %4295 = vmatpush1.msra.mxu0 %v3709
    %4296 = vmatprep.subr.mxu0 0.0
    %4297 = vmatpush1.msra.mxu0 %v3710
    %4298 = vmatprep.subr.mxu0 0.0
    %4299 = vmatpush1.msra.mxu0 %v3711
    %4300 = vmatprep.subr.mxu0 0.0
    %4301 = vmatpush1.msra.mxu0 %v3712
    %4302 = vmatprep.subr.mxu0 0.0
    %4303 = vmatpush1.msra.mxu0 %v3713
    %4304 = vmatprep.subr.mxu0 0.0
    %4305 = vmatpush1.msra.mxu0 %v3714
    %4306 = vmatprep.subr.mxu0 0.0
    %4307 = vmatpush1.msra.mxu0 %v3715
    %4308 = vmatprep.subr.mxu0 0.0
    %4309 = vmatpush1.msra.mxu0 %v3716
    %4310 = vmatprep.subr.mxu0 0.0
    %4311 = vmatpush1.msra.mxu0 %v3717
    %4312 = vmatprep.subr.mxu0 0.0
    %4313 = vmatpush1.msra.mxu0 %v3718
    %4314 = vmatprep.subr.mxu0 0.0
    %4315 = vmatpush1.msra.mxu0 %v3719
    %4316 = vmatprep.subr.mxu0 0.0
    %4317 = vmatpush1.msra.mxu0 %v3720
    %4318 = vmatprep.subr.mxu0 0.0
    %4319 = vmatpush1.msra.mxu0 %v3721
    %4320 = vmatprep.subr.mxu0 0.0
    %4321 = vmatpush1.msra.mxu0 %v3722
    %4322 = vmatprep.subr.mxu0 0.0
    %4323 = vmatpush1.msra.mxu0 %v3723
    %4324 = vmatprep.subr.mxu0 0.0
    %4325 = vmatpush1.msra.mxu0 %v3724
    %4326 = vmatprep.subr.mxu0 0.0
    %4327 = vmatpush1.msra.mxu0 %v3725
    %4328 = vmatprep.subr.mxu0 0.0
    %4329 = vmatpush1.msra.mxu0 %v3726
    %4330 = vmatprep.subr.mxu0 0.0
    %4331 = vmatpush1.msra.mxu0 %v3727
    %4332 = vmatprep.subr.mxu0 0.0
    %4333 = vmatpush1.msra.mxu0 %v3728
    %4334 = vmatprep.subr.mxu0 0.0
    %4335 = vmatpush1.msra.mxu0 %v3729
    %4336 = vmatprep.subr.mxu0 0.0
    %4337 = vmatpush1.msra.mxu0 %v3730
    %4338 = vmatprep.subr.mxu0 0.0
    %4339 = vmatpush1.msra.mxu0 %v3731
    %4340 = vmatprep.subr.mxu0 0.0
    %4341 = vmatpush1.msra.mxu0 %v3732
    %4342 = vmatprep.subr.mxu0 0.0
    %4343 = vmatpush1.msra.mxu0 %v3733
    %4344 = vmatprep.subr.mxu0 0.0
    %4345 = vmatpush1.msra.mxu0 %v3734
    %4346 = vmatprep.subr.mxu0 0.0
    %4347 = vmatpush1.msra.mxu0 %v3735
    %4348 = vmatprep.subr.mxu0 0.0
    %4349 = vmatpush1.msra.mxu0 %v3736
    %4350 = vmatprep.subr.mxu0 0.0
    %4351 = vmatpush1.msra.mxu0 %v3737
    %4352 = vmatprep.subr.mxu0 0.0
    %4353 = vmatpush1.msra.mxu0 %v3738
    %4354 = vmatprep.mubr.f32.mxu0 %v3579
    %4355 = vmatmul.mubr.f32.gmra.mrb[0].mxu0 %v3575
    %v4356 = vpop.f32.mrb[0].mxu0
    %v4357 = vadd.f32 %v4288, %v4356
    %v4358 = vpop.f32.mrb[0].mxu0
    %4359 = vdwg.mxu0
    %4360 = vmatprep.subr.mxu0 0.0
    %4361 = vmatpush1.msra.mxu0 %v3739
    %4362 = vmatprep.subr.mxu0 0.0
    %4363 = vmatpush1.msra.mxu0 %v3740
    %4364 = vmatprep.subr.mxu0 0.0
    %4365 = vmatpush1.msra.mxu0 %v3741
    %4366 = vmatprep.subr.mxu0 0.0
    %4367 = vmatpush1.msra.mxu0 %v3742
    %4368 = vmatprep.subr.mxu0 0.0
    %4369 = vmatpush1.msra.mxu0 %v3743
    %4370 = vmatprep.subr.mxu0 0.0
    %4371 = vmatpush1.msra.mxu0 %v3744
    %4372 = vmatprep.subr.mxu0 0.0
    %4373 = vmatpush1.msra.mxu0 %v3745
    %4374 = vmatprep.subr.mxu0 0.0
    %4375 = vmatpush1.msra.mxu0 %v3746
    %4376 = vmatprep.subr.mxu0 0.0
    %4377 = vmatpush1.msra.mxu0 %v3747
    %4378 = vmatprep.subr.mxu0 0.0
    %4379 = vmatpush1.msra.mxu0 %v3748
    %4380 = vmatprep.subr.mxu0 0.0
    %4381 = vmatpush1.msra.mxu0 %v3749
    %4382 = vmatprep.subr.mxu0 0.0
    %4383 = vmatpush1.msra.mxu0 %v3750
    %4384 = vmatprep.subr.mxu0 0.0
    %4385 = vmatpush1.msra.mxu0 %v3751
    %4386 = vmatprep.subr.mxu0 0.0
    %4387 = vmatpush1.msra.mxu0 %v3752
    %4388 = vmatprep.subr.mxu0 0.0
    %4389 = vmatpush1.msra.mxu0 %v3753
    %4390 = vmatprep.subr.mxu0 0.0
    %4391 = vmatpush1.msra.mxu0 %v3754
    %4392 = vmatprep.subr.mxu0 0.0
    %4393 = vmatpush1.msra.mxu0 %v3755
    %4394 = vmatprep.subr.mxu0 0.0
    %4395 = vmatpush1.msra.mxu0 %v3756
    %4396 = vmatprep.subr.mxu0 0.0
    %4397 = vmatpush1.msra.mxu0 %v3757
    %4398 = vmatprep.subr.mxu0 0.0
    %4399 = vmatpush1.msra.mxu0 %v3758
    %4400 = vmatprep.subr.mxu0 0.0
    %4401 = vmatpush1.msra.mxu0 %v3759
    %4402 = vmatprep.subr.mxu0 0.0
    %4403 = vmatpush1.msra.mxu0 %v3760
    %4404 = vmatprep.subr.mxu0 0.0
    %4405 = vmatpush1.msra.mxu0 %v3761
    %4406 = vmatprep.subr.mxu0 0.0
    %4407 = vmatpush1.msra.mxu0 %v3762
    %4408 = vmatprep.subr.mxu0 0.0
    %4409 = vmatpush1.msra.mxu0 %v3763
    %4410 = vmatprep.subr.mxu0 0.0
    %4411 = vmatpush1.msra.mxu0 %v3764
    %4412 = vmatprep.subr.mxu0 0.0
    %4413 = vmatpush1.msra.mxu0 %v3765
    %4414 = vmatprep.subr.mxu0 0.0
    %4415 = vmatpush1.msra.mxu0 %v3766
    %4416 = vmatprep.subr.mxu0 0.0
    %4417 = vmatpush1.msra.mxu0 %v3767
    %4418 = vmatprep.subr.mxu0 0.0
    %4419 = vmatpush1.msra.mxu0 %v3768
    %4420 = vmatprep.subr.mxu0 0.0
    %4421 = vmatpush1.msra.mxu0 %v3769
    %4422 = vmatprep.subr.mxu0 0.0
    %4423 = vmatpush1.msra.mxu0 %v3770
    %4424 = vmatprep.mubr.f32.mxu0 %v3587
    %4425 = vmatmul.mubr.f32.gmra.mrb[0].mxu0 %v3583
    %v4426 = vpop.f32.mrb[0].mxu0
    %v4427 = vadd.f32 %v4357, %v4426
    %v4428 = vpop.f32.mrb[0].mxu0
    %4429 = vdwg.mxu0
    %4430 = vmatprep.subr.mxu0 0.0
    %4431 = vmatpush1.msra.mxu0 %v3771
    %4432 = vmatprep.subr.mxu0 0.0
    %4433 = vmatpush1.msra.mxu0 %v3772
    %4434 = vmatprep.subr.mxu0 0.0
    %4435 = vmatpush1.msra.mxu0 %v3773
    %4436 = vmatprep.subr.mxu0 0.0
    %4437 = vmatpush1.msra.mxu0 %v3774
    %4438 = vmatprep.subr.mxu0 0.0
    %4439 = vmatpush1.msra.mxu0 %v3775
    %4440 = vmatprep.subr.mxu0 0.0
    %4441 = vmatpush1.msra.mxu0 %v3776
    %4442 = vmatprep.subr.mxu0 0.0
    %4443 = vmatpush1.msra.mxu0 %v3777
    %4444 = vmatprep.subr.mxu0 0.0
    %4445 = vmatpush1.msra.mxu0 %v3778
    %4446 = vmatprep.subr.mxu0 0.0
    %4447 = vmatpush1.msra.mxu0 %v3779
    %4448 = vmatprep.subr.mxu0 0.0
    %4449 = vmatpush1.msra.mxu0 %v3780
    %4450 = vmatprep.subr.mxu0 0.0
    %4451 = vmatpush1.msra.mxu0 %v3781
    %4452 = vmatprep.subr.mxu0 0.0
    %4453 = vmatpush1.msra.mxu0 %v3782
    %4454 = vmatprep.subr.mxu0 0.0
    %4455 = vmatpush1.msra.mxu0 %v3783
    %4456 = vmatprep.subr.mxu0 0.0
    %4457 = vmatpush1.msra.mxu0 %v3784
    %4458 = vmatprep.subr.mxu0 0.0
    %4459 = vmatpush1.msra.mxu0 %v3785
    %4460 = vmatprep.subr.mxu0 0.0
    %4461 = vmatpush1.msra.mxu0 %v3786
    %4462 = vmatprep.subr.mxu0 0.0
    %4463 = vmatpush1.msra.mxu0 %v3787
    %4464 = vmatprep.subr.mxu0 0.0
    %4465 = vmatpush1.msra.mxu0 %v3788
    %4466 = vmatprep.subr.mxu0 0.0
    %4467 = vmatpush1.msra.mxu0 %v3789
    %4468 = vmatprep.subr.mxu0 0.0
    %4469 = vmatpush1.msra.mxu0 %v3790
    %4470 = vmatprep.subr.mxu0 0.0
    %4471 = vmatpush1.msra.mxu0 %v3791
    %4472 = vmatprep.subr.mxu0 0.0
    %4473 = vmatpush1.msra.mxu0 %v3792
    %4474 = vmatprep.subr.mxu0 0.0
    %4475 = vmatpush1.msra.mxu0 %v3793
    %4476 = vmatprep.subr.mxu0 0.0
    %4477 = vmatpush1.msra.mxu0 %v3794
    %4478 = vmatprep.subr.mxu0 0.0
    %4479 = vmatpush1.msra.mxu0 %v3795
    %4480 = vmatprep.subr.mxu0 0.0
    %4481 = vmatpush1.msra.mxu0 %v3796
    %4482 = vmatprep.subr.mxu0 0.0
    %4483 = vmatpush1.msra.mxu0 %v3797
    %4484 = vmatprep.subr.mxu0 0.0
    %4485 = vmatpush1.msra.mxu0 %v3798
    %4486 = vmatprep.subr.mxu0 0.0
    %4487 = vmatpush1.msra.mxu0 %v3799
    %4488 = vmatprep.subr.mxu0 0.0
    %4489 = vmatpush1.msra.mxu0 %v3800
    %4490 = vmatprep.subr.mxu0 0.0
    %4491 = vmatpush1.msra.mxu0 %v3801
    %4492 = vmatprep.subr.mxu0 0.0
    %4493 = vmatpush1.msra.mxu0 %v3802
    %4494 = vmatprep.mubr.f32.mxu0 %v3594
    %4495 = vmatmul.mubr.f32.gmra.mrb[0].mxu0 %v3591
    %v4496 = vpop.f32.mrb[0].mxu0
    %v4497 = vadd.f32 %v4427, %v4496
    %v4498 = vpop.f32.mrb[0].mxu0
    %4499 = vdwg.mxu0
    %4500 = vmatprep.subr.mxu0 0.0
    %4501 = vmatpush1.msra.mxu0 %v3803
    %4502 = vmatprep.subr.mxu0 0.0
    %4503 = vmatpush1.msra.mxu0 %v3804
    %4504 = vmatprep.subr.mxu0 0.0
    %4505 = vmatpush1.msra.mxu0 %v3805
    %4506 = vmatprep.subr.mxu0 0.0
    %4507 = vmatpush1.msra.mxu0 %v3806
    %4508 = vmatprep.subr.mxu0 0.0
    %4509 = vmatpush1.msra.mxu0 %v3807
    %4510 = vmatprep.subr.mxu0 0.0
    %4511 = vmatpush1.msra.mxu0 %v3808
    %4512 = vmatprep.subr.mxu0 0.0
    %4513 = vmatpush1.msra.mxu0 %v3809
    %4514 = vmatprep.subr.mxu0 0.0
    %4515 = vmatpush1.msra.mxu0 %v3810
    %4516 = vmatprep.subr.mxu0 0.0
    %4517 = vmatpush1.msra.mxu0 %v3811
    %4518 = vmatprep.subr.mxu0 0.0
    %4519 = vmatpush1.msra.mxu0 %v3812
    %4520 = vmatprep.subr.mxu0 0.0
    %4521 = vmatpush1.msra.mxu0 %v3813
    %4522 = vmatprep.subr.mxu0 0.0
    %4523 = vmatpush1.msra.mxu0 %v3814
    %4524 = vmatprep.subr.mxu0 0.0
    %4525 = vmatpush1.msra.mxu0 %v3815
    %4526 = vmatprep.subr.mxu0 0.0
    %4527 = vmatpush1.msra.mxu0 %v3816
    %4528 = vmatprep.subr.mxu0 0.0
    %4529 = vmatpush1.msra.mxu0 %v3817
    %4530 = vmatprep.subr.mxu0 0.0
    %4531 = vmatpush1.msra.mxu0 %v3818
    %4532 = vmatprep.subr.mxu0 0.0
    %4533 = vmatpush1.msra.mxu0 %v3819
    %4534 = vmatprep.subr.mxu0 0.0
    %4535 = vmatpush1.msra.mxu0 %v3820
    %4536 = vmatprep.subr.mxu0 0.0
    %4537 = vmatpush1.msra.mxu0 %v3821
    %4538 = vmatprep.subr.mxu0 0.0
    %4539 = vmatpush1.msra.mxu0 %v3822
    %4540 = vmatprep.subr.mxu0 0.0
    %4541 = vmatpush1.msra.mxu0 %v3823
    %4542 = vmatprep.subr.mxu0 0.0
    %4543 = vmatpush1.msra.mxu0 %v3824
    %4544 = vmatprep.subr.mxu0 0.0
    %4545 = vmatpush1.msra.mxu0 %v3825
    %4546 = vmatprep.subr.mxu0 0.0
    %4547 = vmatpush1.msra.mxu0 %v3826
    %4548 = vmatprep.subr.mxu0 0.0
    %4549 = vmatpush1.msra.mxu0 %v3827
    %4550 = vmatprep.subr.mxu0 0.0
    %4551 = vmatpush1.msra.mxu0 %v3828
    %4552 = vmatprep.subr.mxu0 0.0
    %4553 = vmatpush1.msra.mxu0 %v3829
    %4554 = vmatprep.subr.mxu0 0.0
    %4555 = vmatpush1.msra.mxu0 %v3830
    %4556 = vmatprep.subr.mxu0 0.0
    %4557 = vmatpush1.msra.mxu0 %v3831
    %4558 = vmatprep.subr.mxu0 0.0
    %4559 = vmatpush1.msra.mxu0 %v3832
    %4560 = vmatprep.subr.mxu0 0.0
    %4561 = vmatpush1.msra.mxu0 %v3833
    %4562 = vmatprep.subr.mxu0 0.0
    %4563 = vmatpush1.msra.mxu0 %v3834
    %4564 = vmatprep.mubr.f32.mxu0 %v3602
    %4565 = vmatmul.mubr.f32.gmra.mrb[0].mxu0 %v3598
    %v4566 = vpop.f32.mrb[0].mxu0
    %v4567 = vadd.f32 %v4497, %v4566
    %v4568 = vpop.f32.mrb[0].mxu0
    %4569 = vdwg.mxu0
    %4570 = vmatprep.subr.mxu0 0.0
    %4571 = vmatpush1.msra.mxu0 %v3835
    %4572 = vmatprep.subr.mxu0 0.0
    %4573 = vmatpush1.msra.mxu0 %v3836
    %4574 = vmatprep.subr.mxu0 0.0
    %4575 = vmatpush1.msra.mxu0 %v3837
    %4576 = vmatprep.subr.mxu0 0.0
    %4577 = vmatpush1.msra.mxu0 %v3838
    %4578 = vmatprep.subr.mxu0 0.0
    %4579 = vmatpush1.msra.mxu0 %v3839
    %4580 = vmatprep.subr.mxu0 0.0
    %4581 = vmatpush1.msra.mxu0 %v3840
    %4582 = vmatprep.subr.mxu0 0.0
    %4583 = vmatpush1.msra.mxu0 %v3841
    %4584 = vmatprep.subr.mxu0 0.0
    %4585 = vmatpush1.msra.mxu0 %v3842
    %4586 = vmatprep.subr.mxu0 0.0
    %4587 = vmatpush1.msra.mxu0 %v3843
    %4588 = vmatprep.subr.mxu0 0.0
    %4589 = vmatpush1.msra.mxu0 %v3844
    %4590 = vmatprep.subr.mxu0 0.0
    %4591 = vmatpush1.msra.mxu0 %v3845
    %4592 = vmatprep.subr.mxu0 0.0
    %4593 = vmatpush1.msra.mxu0 %v3846
    %4594 = vmatprep.subr.mxu0 0.0
    %4595 = vmatpush1.msra.mxu0 %v3847
    %4596 = vmatprep.subr.mxu0 0.0
    %4597 = vmatpush1.msra.mxu0 %v3848
    %4598 = vmatprep.subr.mxu0 0.0
    %4599 = vmatpush1.msra.mxu0 %v3849
    %4600 = vmatprep.subr.mxu0 0.0
    %4601 = vmatpush1.msra.mxu0 %v3850
    %4602 = vmatprep.subr.mxu0 0.0
    %4603 = vmatpush1.msra.mxu0 %v3851
    %4604 = vmatprep.subr.mxu0 0.0
    %4605 = vmatpush1.msra.mxu0 %v3852
    %4606 = vmatprep.subr.mxu0 0.0
    %4607 = vmatpush1.msra.mxu0 %v3853
    %4608 = vmatprep.subr.mxu0 0.0
    %4609 = vmatpush1.msra.mxu0 %v3854
    %4610 = vmatprep.subr.mxu0 0.0
    %4611 = vmatpush1.msra.mxu0 %v3855
    %4612 = vmatprep.subr.mxu0 0.0
    %4613 = vmatpush1.msra.mxu0 %v3856
    %4614 = vmatprep.subr.mxu0 0.0
    %4615 = vmatpush1.msra.mxu0 %v3857
    %4616 = vmatprep.subr.mxu0 0.0
    %4617 = vmatpush1.msra.mxu0 %v3858
    %4618 = vmatprep.subr.mxu0 0.0
    %4619 = vmatpush1.msra.mxu0 %v3859
    %4620 = vmatprep.subr.mxu0 0.0
    %4621 = vmatpush1.msra.mxu0 %v3860
    %4622 = vmatprep.subr.mxu0 0.0
    %4623 = vmatpush1.msra.mxu0 %v3861
    %4624 = vmatprep.subr.mxu0 0.0
    %4625 = vmatpush1.msra.mxu0 %v3862
    %4626 = vmatprep.subr.mxu0 0.0
    %4627 = vmatpush1.msra.mxu0 %v3863
    %4628 = vmatprep.subr.mxu0 0.0
    %4629 = vmatpush1.msra.mxu0 %v3864
    %4630 = vmatprep.subr.mxu0 0.0
    %4631 = vmatpush1.msra.mxu0 %v3865
    %4632 = vmatprep.subr.mxu0 0.0
    %4633 = vmatpush1.msra.mxu0 %v3866
    %4634 = vmatprep.mubr.f32.mxu0 %v3609
    %4635 = vmatmul.mubr.f32.gmra.mrb[0].mxu0 %v3605
    %v4636 = vpop.f32.mrb[0].mxu0
    %v4637 = vadd.f32 %v4567, %v4636
    %v4638 = vpop.f32.mrb[0].mxu0
    %4639 = vdwg.mxu0
    %4640 = vmatprep.subr.mxu0 0.0
    %4641 = vmatpush1.msra.mxu0 %v3867
    %4642 = vmatprep.subr.mxu0 0.0
    %4643 = vmatpush1.msra.mxu0 %v3868
    %4644 = vmatprep.subr.mxu0 0.0
    %4645 = vmatpush1.msra.mxu0 %v3869
    %4646 = vmatprep.subr.mxu0 0.0
    %4647 = vmatpush1.msra.mxu0 %v3870
    %4648 = vmatprep.subr.mxu0 0.0
    %4649 = vmatpush1.msra.mxu0 %v3871
    %4650 = vmatprep.subr.mxu0 0.0
    %4651 = vmatpush1.msra.mxu0 %v3872
    %4652 = vmatprep.subr.mxu0 0.0
    %4653 = vmatpush1.msra.mxu0 %v3873
    %4654 = vmatprep.subr.mxu0 0.0
    %4655 = vmatpush1.msra.mxu0 %v3874
    %4656 = vmatprep.subr.mxu0 0.0
    %4657 = vmatpush1.msra.mxu0 %v3875
    %4658 = vmatprep.subr.mxu0 0.0
    %4659 = vmatpush1.msra.mxu0 %v3876
    %4660 = vmatprep.subr.mxu0 0.0
    %4661 = vmatpush1.msra.mxu0 %v3877
    %4662 = vmatprep.subr.mxu0 0.0
    %4663 = vmatpush1.msra.mxu0 %v3878
    %4664 = vmatprep.subr.mxu0 0.0
    %4665 = vmatpush1.msra.mxu0 %v3879
    %4666 = vmatprep.subr.mxu0 0.0
    %4667 = vmatpush1.msra.mxu0 %v3880
    %4668 = vmatprep.subr.mxu0 0.0
    %4669 = vmatpush1.msra.mxu0 %v3881
    %4670 = vmatprep.subr.mxu0 0.0
    %4671 = vmatpush1.msra.mxu0 %v3882
    %4672 = vmatprep.subr.mxu0 0.0
    %4673 = vmatpush1.msra.mxu0 %v3883
    %4674 = vmatprep.subr.mxu0 0.0
    %4675 = vmatpush1.msra.mxu0 %v3884
    %4676 = vmatprep.subr.mxu0 0.0
    %4677 = vmatpush1.msra.mxu0 %v3885
    %4678 = vmatprep.subr.mxu0 0.0
    %4679 = vmatpush1.msra.mxu0 %v3886
    %4680 = vmatprep.subr.mxu0 0.0
    %4681 = vmatpush1.msra.mxu0 %v3887
    %4682 = vmatprep.subr.mxu0 0.0
    %4683 = vmatpush1.msra.mxu0 %v3888
    %4684 = vmatprep.subr.mxu0 0.0
    %4685 = vmatpush1.msra.mxu0 %v3889
    %4686 = vmatprep.subr.mxu0 0.0
    %4687 = vmatpush1.msra.mxu0 %v3890
    %4688 = vmatprep.subr.mxu0 0.0
    %4689 = vmatpush1.msra.mxu0 %v3891
    %4690 = vmatprep.subr.mxu0 0.0
    %4691 = vmatpush1.msra.mxu0 %v3892
    %4692 = vmatprep.subr.mxu0 0.0
    %4693 = vmatpush1.msra.mxu0 %v3893
    %4694 = vmatprep.subr.mxu0 0.0
    %4695 = vmatpush1.msra.mxu0 %v3894
    %4696 = vmatprep.subr.mxu0 0.0
    %4697 = vmatpush1.msra.mxu0 %v3895
    %4698 = vmatprep.subr.mxu0 0.0
    %4699 = vmatpush1.msra.mxu0 %v3896
    %4700 = vmatprep.subr.mxu0 0.0
    %4701 = vmatpush1.msra.mxu0 %v3897
    %4702 = vmatprep.subr.mxu0 0.0
    %4703 = vmatpush1.msra.mxu0 %v3898
    %4704 = vmatprep.mubr.f32.mxu0 %v3617
    %4705 = vmatmul.mubr.f32.gmra.mrb[0].mxu0 %v3613
    %v4706 = vpop.f32.mrb[0].mxu0
    %v4707 = vadd.f32 %v4637, %v4706
    %v4708 = vpop.f32.mrb[0].mxu0
    %4709 = vdwg.mxu0
    %4710 = vmatprep.subr.mxu0 0.0
    %4711 = vmatpush1.msra.mxu0 %v3899
    %4712 = vmatprep.subr.mxu0 0.0
    %4713 = vmatpush1.msra.mxu0 %v3900
    %4714 = vmatprep.subr.mxu0 0.0
    %4715 = vmatpush1.msra.mxu0 %v3901
    %4716 = vmatprep.subr.mxu0 0.0
    %4717 = vmatpush1.msra.mxu0 %v3902
    %4718 = vmatprep.subr.mxu0 0.0
    %4719 = vmatpush1.msra.mxu0 %v3903
    %4720 = vmatprep.subr.mxu0 0.0
    %4721 = vmatpush1.msra.mxu0 %v3904
    %4722 = vmatprep.subr.mxu0 0.0
    %4723 = vmatpush1.msra.mxu0 %v3905
    %4724 = vmatprep.subr.mxu0 0.0
    %4725 = vmatpush1.msra.mxu0 %v3906
    %4726 = vmatprep.subr.mxu0 0.0
    %4727 = vmatpush1.msra.mxu0 %v3907
    %4728 = vmatprep.subr.mxu0 0.0
    %4729 = vmatpush1.msra.mxu0 %v3908
    %4730 = vmatprep.subr.mxu0 0.0
    %4731 = vmatpush1.msra.mxu0 %v3909
    %4732 = vmatprep.subr.mxu0 0.0
    %4733 = vmatpush1.msra.mxu0 %v3910
    %4734 = vmatprep.subr.mxu0 0.0
    %4735 = vmatpush1.msra.mxu0 %v3911
    %4736 = vmatprep.subr.mxu0 0.0
    %4737 = vmatpush1.msra.mxu0 %v3912
    %4738 = vmatprep.subr.mxu0 0.0
    %4739 = vmatpush1.msra.mxu0 %v3913
    %4740 = vmatprep.subr.mxu0 0.0
    %4741 = vmatpush1.msra.mxu0 %v3914
    %4742 = vmatprep.subr.mxu0 0.0
    %4743 = vmatpush1.msra.mxu0 %v3915
    %4744 = vmatprep.subr.mxu0 0.0
    %4745 = vmatpush1.msra.mxu0 %v3916
    %4746 = vmatprep.subr.mxu0 0.0
    %4747 = vmatpush1.msra.mxu0 %v3917
    %4748 = vmatprep.subr.mxu0 0.0
    %4749 = vmatpush1.msra.mxu0 %v3918
    %4750 = vmatprep.subr.mxu0 0.0
    %4751 = vmatpush1.msra.mxu0 %v3919
    %4752 = vmatprep.subr.mxu0 0.0
    %4753 = vmatpush1.msra.mxu0 %v3920
    %4754 = vmatprep.subr.mxu0 0.0
    %4755 = vmatpush1.msra.mxu0 %v3921
    %4756 = vmatprep.subr.mxu0 0.0
    %4757 = vmatpush1.msra.mxu0 %v3922
    %4758 = vmatprep.subr.mxu0 0.0
    %4759 = vmatpush1.msra.mxu0 %v3923
    %4760 = vmatprep.subr.mxu0 0.0
    %4761 = vmatpush1.msra.mxu0 %v3924
    %4762 = vmatprep.subr.mxu0 0.0
    %4763 = vmatpush1.msra.mxu0 %v3925
    %4764 = vmatprep.subr.mxu0 0.0
    %4765 = vmatpush1.msra.mxu0 %v3926
    %4766 = vmatprep.subr.mxu0 0.0
    %4767 = vmatpush1.msra.mxu0 %v3927
    %4768 = vmatprep.subr.mxu0 0.0
    %4769 = vmatpush1.msra.mxu0 %v3928
    %4770 = vmatprep.subr.mxu0 0.0
    %4771 = vmatpush1.msra.mxu0 %v3929
    %4772 = vmatprep.subr.mxu0 0.0
    %4773 = vmatpush1.msra.mxu0 %v3930
    %4774 = vmatprep.mubr.f32.mxu0 %v3624
    %4775 = vmatmul.mubr.f32.gmra.mrb[0].mxu0 %v3621
    %v4776 = vpop.f32.mrb[0].mxu0
    %v4777 = vadd.f32 %v4707, %v4776
    %v4778 = vpop.f32.mrb[0].mxu0
    %4779 = vdwg.mxu0
    %4780 = vmatprep.subr.mxu0 0.0
    %4781 = vmatpush1.msra.mxu0 %v3931
    %4782 = vmatprep.subr.mxu0 0.0
    %4783 = vmatpush1.msra.mxu0 %v3932
    %4784 = vmatprep.subr.mxu0 0.0
    %4785 = vmatpush1.msra.mxu0 %v3933
    %4786 = vmatprep.subr.mxu0 0.0
    %4787 = vmatpush1.msra.mxu0 %v3934
    %4788 = vmatprep.subr.mxu0 0.0
    %4789 = vmatpush1.msra.mxu0 %v3935
    %4790 = vmatprep.subr.mxu0 0.0
    %4791 = vmatpush1.msra.mxu0 %v3936
    %4792 = vmatprep.subr.mxu0 0.0
    %4793 = vmatpush1.msra.mxu0 %v3937
    %4794 = vmatprep.subr.mxu0 0.0
    %4795 = vmatpush1.msra.mxu0 %v3938
    %4796 = vmatprep.subr.mxu0 0.0
    %4797 = vmatpush1.msra.mxu0 %v3939
    %4798 = vmatprep.subr.mxu0 0.0
    %4799 = vmatpush1.msra.mxu0 %v3940
    %4800 = vmatprep.subr.mxu0 0.0
    %4801 = vmatpush1.msra.mxu0 %v3941
    %4802 = vmatprep.subr.mxu0 0.0
    %4803 = vmatpush1.msra.mxu0 %v3942
    %4804 = vmatprep.subr.mxu0 0.0
    %4805 = vmatpush1.msra.mxu0 %v3943
    %4806 = vmatprep.subr.mxu0 0.0
    %4807 = vmatpush1.msra.mxu0 %v3944
    %4808 = vmatprep.subr.mxu0 0.0
    %4809 = vmatpush1.msra.mxu0 %v3945
    %4810 = vmatprep.subr.mxu0 0.0
    %4811 = vmatpush1.msra.mxu0 %v3946
    %4812 = vmatprep.subr.mxu0 0.0
    %4813 = vmatpush1.msra.mxu0 %v3947
    %4814 = vmatprep.subr.mxu0 0.0
    %4815 = vmatpush1.msra.mxu0 %v3948
    %4816 = vmatprep.subr.mxu0 0.0
    %4817 = vmatpush1.msra.mxu0 %v3949
    %4818 = vmatprep.subr.mxu0 0.0
    %4819 = vmatpush1.msra.mxu0 %v3950
    %4820 = vmatprep.subr.mxu0 0.0
    %4821 = vmatpush1.msra.mxu0 %v3951
    %4822 = vmatprep.subr.mxu0 0.0
    %4823 = vmatpush1.msra.mxu0 %v3952
    %4824 = vmatprep.subr.mxu0 0.0
    %4825 = vmatpush1.msra.mxu0 %v3953
    %4826 = vmatprep.subr.mxu0 0.0
    %4827 = vmatpush1.msra.mxu0 %v3954
    %4828 = vmatprep.subr.mxu0 0.0
    %4829 = vmatpush1.msra.mxu0 %v3955
    %4830 = vmatprep.subr.mxu0 0.0
    %4831 = vmatpush1.msra.mxu0 %v3956
    %4832 = vmatprep.subr.mxu0 0.0
    %4833 = vmatpush1.msra.mxu0 %v3957
    %4834 = vmatprep.subr.mxu0 0.0
    %4835 = vmatpush1.msra.mxu0 %v3958
    %4836 = vmatprep.subr.mxu0 0.0
    %4837 = vmatpush1.msra.mxu0 %v3959
    %4838 = vmatprep.subr.mxu0 0.0
    %4839 = vmatpush1.msra.mxu0 %v3960
    %4840 = vmatprep.subr.mxu0 0.0
    %4841 = vmatpush1.msra.mxu0 %v3961
    %4842 = vmatprep.subr.mxu0 0.0
    %4843 = vmatpush1.msra.mxu0 %v3962
    %4844 = vmatprep.mubr.f32.mxu0 %v3632
    %4845 = vmatmul.mubr.f32.gmra.mrb[0].mxu0 %v3628
    %v4846 = vpop.f32.mrb[0].mxu0
    %v4847 = vadd.f32 %v4777, %v4846
    %v4848 = vpop.f32.mrb[0].mxu0
    %4849 = vdwg.mxu0
    %4850 = vmatprep.subr.mxu0 0.0
    %4851 = vmatpush1.msra.mxu0 %v3963
    %4852 = vmatprep.subr.mxu0 0.0
    %4853 = vmatpush1.msra.mxu0 %v3964
    %4854 = vmatprep.subr.mxu0 0.0
    %4855 = vmatpush1.msra.mxu0 %v3965
    %4856 = vmatprep.subr.mxu0 0.0
    %4857 = vmatpush1.msra.mxu0 %v3966
    %4858 = vmatprep.subr.mxu0 0.0
    %4859 = vmatpush1.msra.mxu0 %v3967
    %4860 = vmatprep.subr.mxu0 0.0
    %4861 = vmatpush1.msra.mxu0 %v3968
    %4862 = vmatprep.subr.mxu0 0.0
    %4863 = vmatpush1.msra.mxu0 %v3969
    %4864 = vmatprep.subr.mxu0 0.0
    %4865 = vmatpush1.msra.mxu0 %v3970
    %4866 = vmatprep.subr.mxu0 0.0
    %4867 = vmatpush1.msra.mxu0 %v3971
    %4868 = vmatprep.subr.mxu0 0.0
    %4869 = vmatpush1.msra.mxu0 %v3972
    %4870 = vmatprep.subr.mxu0 0.0
    %4871 = vmatpush1.msra.mxu0 %v3973
    %4872 = vmatprep.subr.mxu0 0.0
    %4873 = vmatpush1.msra.mxu0 %v3974
    %4874 = vmatprep.subr.mxu0 0.0
    %4875 = vmatpush1.msra.mxu0 %v3975
    %4876 = vmatprep.subr.mxu0 0.0
    %4877 = vmatpush1.msra.mxu0 %v3976
    %4878 = vmatprep.subr.mxu0 0.0
    %4879 = vmatpush1.msra.mxu0 %v3977
    %4880 = vmatprep.subr.mxu0 0.0
    %4881 = vmatpush1.msra.mxu0 %v3978
    %4882 = vmatprep.subr.mxu0 0.0
    %4883 = vmatpush1.msra.mxu0 %v3979
    %4884 = vmatprep.subr.mxu0 0.0
    %4885 = vmatpush1.msra.mxu0 %v3980
    %4886 = vmatprep.subr.mxu0 0.0
    %4887 = vmatpush1.msra.mxu0 %v3981
    %4888 = vmatprep.subr.mxu0 0.0
    %4889 = vmatpush1.msra.mxu0 %v3982
    %4890 = vmatprep.subr.mxu0 0.0
    %4891 = vmatpush1.msra.mxu0 %v3983
    %4892 = vmatprep.subr.mxu0 0.0
    %4893 = vmatpush1.msra.mxu0 %v3984
    %4894 = vmatprep.subr.mxu0 0.0
    %4895 = vmatpush1.msra.mxu0 %v3985
    %4896 = vmatprep.subr.mxu0 0.0
    %4897 = vmatpush1.msra.mxu0 %v3986
    %4898 = vmatprep.subr.mxu0 0.0
    %4899 = vmatpush1.msra.mxu0 %v3987
    %4900 = vmatprep.subr.mxu0 0.0
    %4901 = vmatpush1.msra.mxu0 %v3988
    %4902 = vmatprep.subr.mxu0 0.0
    %4903 = vmatpush1.msra.mxu0 %v3989
    %4904 = vmatprep.subr.mxu0 0.0
    %4905 = vmatpush1.msra.mxu0 %v3990
    %4906 = vmatprep.subr.mxu0 0.0
    %4907 = vmatpush1.msra.mxu0 %v3991
    %4908 = vmatprep.subr.mxu0 0.0
    %4909 = vmatpush1.msra.mxu0 %v3992
    %4910 = vmatprep.subr.mxu0 0.0
    %4911 = vmatpush1.msra.mxu0 %v3993
    %4912 = vmatprep.subr.mxu0 0.0
    %4913 = vmatpush1.msra.mxu0 %v3994
    %4914 = vmatprep.mubr.f32.mxu0 %v3639
    %4915 = vmatmul.mubr.f32.gmra.mrb[0].mxu0 %v3635
    %v4916 = vpop.f32.mrb[0].mxu0
    %v4917 = vadd.f32 %v4847, %v4916
    %v4918 = vpop.f32.mrb[0].mxu0
    %4919 = vdwg.mxu0
    %4920 = vmatprep.subr.mxu0 0.0
    %4921 = vmatpush1.msra.mxu0 %v3995
    %4922 = vmatprep.subr.mxu0 0.0
    %4923 = vmatpush1.msra.mxu0 %v3996
    %4924 = vmatprep.subr.mxu0 0.0
    %4925 = vmatpush1.msra.mxu0 %v3997
    %4926 = vmatprep.subr.mxu0 0.0
    %4927 = vmatpush1.msra.mxu0 %v3998
    %4928 = vmatprep.subr.mxu0 0.0
    %4929 = vmatpush1.msra.mxu0 %v3999
    %4930 = vmatprep.subr.mxu0 0.0
    %4931 = vmatpush1.msra.mxu0 %v4000
    %4932 = vmatprep.subr.mxu0 0.0
    %4933 = vmatpush1.msra.mxu0 %v4001
    %4934 = vmatprep.subr.mxu0 0.0
    %4935 = vmatpush1.msra.mxu0 %v4002
    %4936 = vmatprep.subr.mxu0 0.0
    %4937 = vmatpush1.msra.mxu0 %v4003
    %4938 = vmatprep.subr.mxu0 0.0
    %4939 = vmatpush1.msra.mxu0 %v4004
    %4940 = vmatprep.subr.mxu0 0.0
    %4941 = vmatpush1.msra.mxu0 %v4005
    %4942 = vmatprep.subr.mxu0 0.0
    %4943 = vmatpush1.msra.mxu0 %v4006
    %4944 = vmatprep.subr.mxu0 0.0
    %4945 = vmatpush1.msra.mxu0 %v4007
    %4946 = vmatprep.subr.mxu0 0.0
    %4947 = vmatpush1.msra.mxu0 %v4008
    %4948 = vmatprep.subr.mxu0 0.0
    %4949 = vmatpush1.msra.mxu0 %v4009
    %4950 = vmatprep.subr.mxu0 0.0
    %4951 = vmatpush1.msra.mxu0 %v4010
    %4952 = vmatprep.subr.mxu0 0.0
    %4953 = vmatpush1.msra.mxu0 %v4011
    %4954 = vmatprep.subr.mxu0 0.0
    %4955 = vmatpush1.msra.mxu0 %v4012
    %4956 = vmatprep.subr.mxu0 0.0
    %4957 = vmatpush1.msra.mxu0 %v4013
    %4958 = vmatprep.subr.mxu0 0.0
    %4959 = vmatpush1.msra.mxu0 %v4014
    %4960 = vmatprep.subr.mxu0 0.0
    %4961 = vmatpush1.msra.mxu0 %v4015
    %4962 = vmatprep.subr.mxu0 0.0
    %4963 = vmatpush1.msra.mxu0 %v4016
    %4964 = vmatprep.subr.mxu0 0.0
    %4965 = vmatpush1.msra.mxu0 %v4017
    %4966 = vmatprep.subr.mxu0 0.0
    %4967 = vmatpush1.msra.mxu0 %v4018
    %4968 = vmatprep.subr.mxu0 0.0
    %4969 = vmatpush1.msra.mxu0 %v4019
    %4970 = vmatprep.subr.mxu0 0.0
    %4971 = vmatpush1.msra.mxu0 %v4020
    %4972 = vmatprep.subr.mxu0 0.0
    %4973 = vmatpush1.msra.mxu0 %v4021
    %4974 = vmatprep.subr.mxu0 0.0
    %4975 = vmatpush1.msra.mxu0 %v4022
    %4976 = vmatprep.subr.mxu0 0.0
    %4977 = vmatpush1.msra.mxu0 %v4023
    %4978 = vmatprep.subr.mxu0 0.0
    %4979 = vmatpush1.msra.mxu0 %v4024
    %4980 = vmatprep.subr.mxu0 0.0
    %4981 = vmatpush1.msra.mxu0 %v4025
    %4982 = vmatprep.subr.mxu0 0.0
    %4983 = vmatpush1.msra.mxu0 %v4026
    %4984 = vmatprep.mubr.f32.mxu0 %v3647
    %4985 = vmatmul.mubr.f32.gmra.mrb[0].mxu0 %v3643
    %v4986 = vpop.f32.mrb[0].mxu0
    %v4987 = vadd.f32 %v4917, %v4986
    %v4988 = vpop.f32.mrb[0].mxu0
    %4989 = vdwg.mxu0
    %4990 = vmatprep.subr.mxu0 0.0
    %4991 = vmatpush1.msra.mxu0 %v4027
    %4992 = vmatprep.subr.mxu0 0.0
    %4993 = vmatpush1.msra.mxu0 %v4028
    %4994 = vmatprep.subr.mxu0 0.0
    %4995 = vmatpush1.msra.mxu0 %v4029
    %4996 = vmatprep.subr.mxu0 0.0
    %4997 = vmatpush1.msra.mxu0 %v4030
    %4998 = vmatprep.subr.mxu0 0.0
    %4999 = vmatpush1.msra.mxu0 %v4031
    %5000 = vmatprep.subr.mxu0 0.0
    %5001 = vmatpush1.msra.mxu0 %v4032
    %5002 = vmatprep.subr.mxu0 0.0
    %5003 = vmatpush1.msra.mxu0 %v4033
    %5004 = vmatprep.subr.mxu0 0.0
    %5005 = vmatpush1.msra.mxu0 %v4034
    %5006 = vmatprep.subr.mxu0 0.0
    %5007 = vmatpush1.msra.mxu0 %v4035
    %5008 = vmatprep.subr.mxu0 0.0
    %5009 = vmatpush1.msra.mxu0 %v4036
    %5010 = vmatprep.subr.mxu0 0.0
    %5011 = vmatpush1.msra.mxu0 %v4037
    %5012 = vmatprep.subr.mxu0 0.0
    %5013 = vmatpush1.msra.mxu0 %v4038
    %5014 = vmatprep.subr.mxu0 0.0
    %5015 = vmatpush1.msra.mxu0 %v4039
    %5016 = vmatprep.subr.mxu0 0.0
    %5017 = vmatpush1.msra.mxu0 %v4040
    %5018 = vmatprep.subr.mxu0 0.0
    %5019 = vmatpush1.msra.mxu0 %v4041
    %5020 = vmatprep.subr.mxu0 0.0
    %5021 = vmatpush1.msra.mxu0 %v4042
    %5022 = vmatprep.subr.mxu0 0.0
    %5023 = vmatpush1.msra.mxu0 %v4043
    %5024 = vmatprep.subr.mxu0 0.0
    %5025 = vmatpush1.msra.mxu0 %v4044
    %5026 = vmatprep.subr.mxu0 0.0
    %5027 = vmatpush1.msra.mxu0 %v4045
    %5028 = vmatprep.subr.mxu0 0.0
    %5029 = vmatpush1.msra.mxu0 %v4046
    %5030 = vmatprep.subr.mxu0 0.0
    %5031 = vmatpush1.msra.mxu0 %v4047
    %5032 = vmatprep.subr.mxu0 0.0
    %5033 = vmatpush1.msra.mxu0 %v4048
    %5034 = vmatprep.subr.mxu0 0.0
    %5035 = vmatpush1.msra.mxu0 %v4049
    %5036 = vmatprep.subr.mxu0 0.0
    %5037 = vmatpush1.msra.mxu0 %v4050
    %5038 = vmatprep.subr.mxu0 0.0
    %5039 = vmatpush1.msra.mxu0 %v4051
    %5040 = vmatprep.subr.mxu0 0.0
    %5041 = vmatpush1.msra.mxu0 %v4052
    %5042 = vmatprep.subr.mxu0 0.0
    %5043 = vmatpush1.msra.mxu0 %v4053
    %5044 = vmatprep.subr.mxu0 0.0
    %5045 = vmatpush1.msra.mxu0 %v4054
    %5046 = vmatprep.subr.mxu0 0.0
    %5047 = vmatpush1.msra.mxu0 %v4055
    %5048 = vmatprep.subr.mxu0 0.0
    %5049 = vmatpush1.msra.mxu0 %v4056
    %5050 = vmatprep.subr.mxu0 0.0
    %5051 = vmatpush1.msra.mxu0 %v4057
    %5052 = vmatprep.subr.mxu0 0.0
    %5053 = vmatpush1.msra.mxu0 %v4058
    %5054 = vmatprep.mubr.f32.mxu0 %v3654
    %5055 = vmatmul.mubr.f32.gmra.mrb[0].mxu0 %v3651
    %v5056 = vpop.f32.mrb[0].mxu0
    %v5057 = vadd.f32 %v4987, %v5056
    %v5058 = vpop.f32.mrb[0].mxu0
    %5059 = vdwg.mxu0
    %5060 = vmatprep.subr.mxu0 0.0
    %5061 = vmatpush1.msra.mxu0 %v4059
    %5062 = vmatprep.subr.mxu0 0.0
    %5063 = vmatpush1.msra.mxu0 %v4060
    %5064 = vmatprep.subr.mxu0 0.0
    %5065 = vmatpush1.msra.mxu0 %v4061
    %5066 = vmatprep.subr.mxu0 0.0
    %5067 = vmatpush1.msra.mxu0 %v4062
    %5068 = vmatprep.subr.mxu0 0.0
    %5069 = vmatpush1.msra.mxu0 %v4063
    %5070 = vmatprep.subr.mxu0 0.0
    %5071 = vmatpush1.msra.mxu0 %v4064
    %5072 = vmatprep.subr.mxu0 0.0
    %5073 = vmatpush1.msra.mxu0 %v4065
    %5074 = vmatprep.subr.mxu0 0.0
    %5075 = vmatpush1.msra.mxu0 %v4066
    %5076 = vmatprep.subr.mxu0 0.0
    %5077 = vmatpush1.msra.mxu0 %v4067
    %5078 = vmatprep.subr.mxu0 0.0
    %5079 = vmatpush1.msra.mxu0 %v4068
    %5080 = vmatprep.subr.mxu0 0.0
    %5081 = vmatpush1.msra.mxu0 %v4069
    %5082 = vmatprep.subr.mxu0 0.0
    %5083 = vmatpush1.msra.mxu0 %v4070
    %5084 = vmatprep.subr.mxu0 0.0
    %5085 = vmatpush1.msra.mxu0 %v4071
    %5086 = vmatprep.subr.mxu0 0.0
    %5087 = vmatpush1.msra.mxu0 %v4072
    %5088 = vmatprep.subr.mxu0 0.0
    %5089 = vmatpush1.msra.mxu0 %v4073
    %5090 = vmatprep.subr.mxu0 0.0
    %5091 = vmatpush1.msra.mxu0 %v4074
    %5092 = vmatprep.subr.mxu0 0.0
    %5093 = vmatpush1.msra.mxu0 %v4075
    %5094 = vmatprep.subr.mxu0 0.0
    %5095 = vmatpush1.msra.mxu0 %v4076
    %5096 = vmatprep.subr.mxu0 0.0
    %5097 = vmatpush1.msra.mxu0 %v4077
    %5098 = vmatprep.subr.mxu0 0.0
    %5099 = vmatpush1.msra.mxu0 %v4078
    %5100 = vmatprep.subr.mxu0 0.0
    %5101 = vmatpush1.msra.mxu0 %v4079
    %5102 = vmatprep.subr.mxu0 0.0
    %5103 = vmatpush1.msra.mxu0 %v4080
    %5104 = vmatprep.subr.mxu0 0.0
    %5105 = vmatpush1.msra.mxu0 %v4081
    %5106 = vmatprep.subr.mxu0 0.0
    %5107 = vmatpush1.msra.mxu0 %v4082
    %5108 = vmatprep.subr.mxu0 0.0
    %5109 = vmatpush1.msra.mxu0 %v4083
    %5110 = vmatprep.subr.mxu0 0.0
    %5111 = vmatpush1.msra.mxu0 %v4084
    %5112 = vmatprep.subr.mxu0 0.0
    %5113 = vmatpush1.msra.mxu0 %v4085
    %5114 = vmatprep.subr.mxu0 0.0
    %5115 = vmatpush1.msra.mxu0 %v4086
    %5116 = vmatprep.subr.mxu0 0.0
    %5117 = vmatpush1.msra.mxu0 %v4087
    %5118 = vmatprep.subr.mxu0 0.0
    %5119 = vmatpush1.msra.mxu0 %v4088
    %5120 = vmatprep.subr.mxu0 0.0
    %5121 = vmatpush1.msra.mxu0 %v4089
    %5122 = vmatprep.subr.mxu0 0.0
    %5123 = vmatpush1.msra.mxu0 %v4090
    %5124 = vmatprep.mubr.f32.mxu0 %v3662
    %5125 = vmatmul.mubr.f32.gmra.mrb[0].mxu0 %v3658
    %v5126 = vpop.f32.mrb[0].mxu0
    %v5127 = vadd.f32 %v5057, %v5126
    %v5128 = vpop.f32.mrb[0].mxu0
    %5129 = vdwg.mxu0
    %5130 = vmatprep.subr.mxu0 0.0
    %5131 = vmatpush1.msra.mxu0 %v4091
    %5132 = vmatprep.subr.mxu0 0.0
    %5133 = vmatpush1.msra.mxu0 %v4092
    %5134 = vmatprep.subr.mxu0 0.0
    %5135 = vmatpush1.msra.mxu0 %v4093
    %5136 = vmatprep.subr.mxu0 0.0
    %5137 = vmatpush1.msra.mxu0 %v4094
    %5138 = vmatprep.subr.mxu0 0.0
    %5139 = vmatpush1.msra.mxu0 %v4095
    %5140 = vmatprep.subr.mxu0 0.0
    %5141 = vmatpush1.msra.mxu0 %v4096
    %5142 = vmatprep.subr.mxu0 0.0
    %5143 = vmatpush1.msra.mxu0 %v4097
    %5144 = vmatprep.subr.mxu0 0.0
    %5145 = vmatpush1.msra.mxu0 %v4098
    %5146 = vmatprep.subr.mxu0 0.0
    %5147 = vmatpush1.msra.mxu0 %v4099
    %5148 = vmatprep.subr.mxu0 0.0
    %5149 = vmatpush1.msra.mxu0 %v4100
    %5150 = vmatprep.subr.mxu0 0.0
    %5151 = vmatpush1.msra.mxu0 %v4101
    %5152 = vmatprep.subr.mxu0 0.0
    %5153 = vmatpush1.msra.mxu0 %v4102
    %5154 = vmatprep.subr.mxu0 0.0
    %5155 = vmatpush1.msra.mxu0 %v4103
    %5156 = vmatprep.subr.mxu0 0.0
    %5157 = vmatpush1.msra.mxu0 %v4104
    %5158 = vmatprep.subr.mxu0 0.0
    %5159 = vmatpush1.msra.mxu0 %v4105
    %5160 = vmatprep.subr.mxu0 0.0
    %5161 = vmatpush1.msra.mxu0 %v4106
    %5162 = vmatprep.subr.mxu0 0.0
    %5163 = vmatpush1.msra.mxu0 %v4107
    %5164 = vmatprep.subr.mxu0 0.0
    %5165 = vmatpush1.msra.mxu0 %v4108
    %5166 = vmatprep.subr.mxu0 0.0
    %5167 = vmatpush1.msra.mxu0 %v4109
    %5168 = vmatprep.subr.mxu0 0.0
    %5169 = vmatpush1.msra.mxu0 %v4110
    %5170 = vmatprep.subr.mxu0 0.0
    %5171 = vmatpush1.msra.mxu0 %v4111
    %5172 = vmatprep.subr.mxu0 0.0
    %5173 = vmatpush1.msra.mxu0 %v4112
    %5174 = vmatprep.subr.mxu0 0.0
    %5175 = vmatpush1.msra.mxu0 %v4113
    %5176 = vmatprep.subr.mxu0 0.0
    %5177 = vmatpush1.msra.mxu0 %v4114
    %5178 = vmatprep.subr.mxu0 0.0
    %5179 = vmatpush1.msra.mxu0 %v4115
    %5180 = vmatprep.subr.mxu0 0.0
    %5181 = vmatpush1.msra.mxu0 %v4116
    %5182 = vmatprep.subr.mxu0 0.0
    %5183 = vmatpush1.msra.mxu0 %v4117
    %5184 = vmatprep.subr.mxu0 0.0
    %5185 = vmatpush1.msra.mxu0 %v4118
    %5186 = vmatprep.subr.mxu0 0.0
    %5187 = vmatpush1.msra.mxu0 %v4119
    %5188 = vmatprep.subr.mxu0 0.0
    %5189 = vmatpush1.msra.mxu0 %v4120
    %5190 = vmatprep.subr.mxu0 0.0
    %5191 = vmatpush1.msra.mxu0 %v4121
    %5192 = vmatprep.subr.mxu0 0.0
    %5193 = vmatpush1.msra.mxu0 %v4122
    %5194 = vmatprep.mubr.f32.mxu0 %v3669
    %5195 = vmatmul.mubr.f32.gmra.mrb[0].mxu0 %v3665
    %v5196 = vpop.f32.mrb[0].mxu0
    %v5197 = vadd.f32 %v5127, %v5196
    %v5198 = vpop.f32.mrb[0].mxu0
    %5199 = vdwg.mxu0
    %5200 = vmatprep.subr.mxu0 0.0
    %5201 = vmatpush1.msra.mxu0 %v4123
    %5202 = vmatprep.subr.mxu0 0.0
    %5203 = vmatpush1.msra.mxu0 %v4124
    %5204 = vmatprep.subr.mxu0 0.0
    %5205 = vmatpush1.msra.mxu0 %v4125
    %5206 = vmatprep.subr.mxu0 0.0
    %5207 = vmatpush1.msra.mxu0 %v4126
    %5208 = vmatprep.subr.mxu0 0.0
    %5209 = vmatpush1.msra.mxu0 %v4127
    %5210 = vmatprep.subr.mxu0 0.0
    %5211 = vmatpush1.msra.mxu0 %v4128
    %5212 = vmatprep.subr.mxu0 0.0
    %5213 = vmatpush1.msra.mxu0 %v4129
    %5214 = vmatprep.subr.mxu0 0.0
    %5215 = vmatpush1.msra.mxu0 %v4130
    %5216 = vmatprep.subr.mxu0 0.0
    %5217 = vmatpush1.msra.mxu0 %v4131
    %5218 = vmatprep.subr.mxu0 0.0
    %5219 = vmatpush1.msra.mxu0 %v4132
    %5220 = vmatprep.subr.mxu0 0.0
    %5221 = vmatpush1.msra.mxu0 %v4133
    %5222 = vmatprep.subr.mxu0 0.0
    %5223 = vmatpush1.msra.mxu0 %v4134
    %5224 = vmatprep.subr.mxu0 0.0
    %5225 = vmatpush1.msra.mxu0 %v4135
    %5226 = vmatprep.subr.mxu0 0.0
    %5227 = vmatpush1.msra.mxu0 %v4136
    %5228 = vmatprep.subr.mxu0 0.0
    %5229 = vmatpush1.msra.mxu0 %v4137
    %5230 = vmatprep.subr.mxu0 0.0
    %5231 = vmatpush1.msra.mxu0 %v4138
    %5232 = vmatprep.subr.mxu0 0.0
    %5233 = vmatpush1.msra.mxu0 %v4139
    %5234 = vmatprep.subr.mxu0 0.0
    %5235 = vmatpush1.msra.mxu0 %v4140
    %5236 = vmatprep.subr.mxu0 0.0
    %5237 = vmatpush1.msra.mxu0 %v4141
    %5238 = vmatprep.subr.mxu0 0.0
    %5239 = vmatpush1.msra.mxu0 %v4142
    %5240 = vmatprep.subr.mxu0 0.0
    %5241 = vmatpush1.msra.mxu0 %v4143
    %5242 = vmatprep.subr.mxu0 0.0
    %5243 = vmatpush1.msra.mxu0 %v4144
    %5244 = vmatprep.subr.mxu0 0.0
    %5245 = vmatpush1.msra.mxu0 %v4145
    %5246 = vmatprep.subr.mxu0 0.0
    %5247 = vmatpush1.msra.mxu0 %v4146
    %5248 = vmatprep.subr.mxu0 0.0
    %5249 = vmatpush1.msra.mxu0 %v4147
    %5250 = vmatprep.subr.mxu0 0.0
    %5251 = vmatpush1.msra.mxu0 %v4148
    %5252 = vmatprep.subr.mxu0 0.0
    %5253 = vmatpush1.msra.mxu0 %v4149
    %5254 = vmatprep.subr.mxu0 0.0
    %5255 = vmatpush1.msra.mxu0 %v4150
    %5256 = vmatprep.subr.mxu0 0.0
    %5257 = vmatpush1.msra.mxu0 %v4151
    %5258 = vmatprep.subr.mxu0 0.0
    %5259 = vmatpush1.msra.mxu0 %v4152
    %5260 = vmatprep.subr.mxu0 0.0
    %5261 = vmatpush1.msra.mxu0 %v4153
    %5262 = vmatprep.subr.mxu0 0.0
    %5263 = vmatpush1.msra.mxu0 %v4154
    %5264 = vmatprep.mubr.f32.mxu0 %v3677
    %5265 = vmatmul.mubr.f32.gmra.mrb[0].mxu0 %v3673
    %v5266 = vpop.f32.mrb[0].mxu0
    %v5267 = vadd.f32 %v5197, %v5266
    %v5268 = vpop.f32.mrb[0].mxu0
    %5269 = vdwg.mxu0
    %5270 = vmatprep.subr.mxu0 0.0
    %5271 = vmatpush1.msra.mxu0 %v4155
    %5272 = vmatprep.subr.mxu0 0.0
    %5273 = vmatpush1.msra.mxu0 %v4156
    %5274 = vmatprep.subr.mxu0 0.0
    %5275 = vmatpush1.msra.mxu0 %v4157
    %5276 = vmatprep.subr.mxu0 0.0
    %5277 = vmatpush1.msra.mxu0 %v4158
    %5278 = vmatprep.subr.mxu0 0.0
    %5279 = vmatpush1.msra.mxu0 %v4159
    %5280 = vmatprep.subr.mxu0 0.0
    %5281 = vmatpush1.msra.mxu0 %v4160
    %5282 = vmatprep.subr.mxu0 0.0
    %5283 = vmatpush1.msra.mxu0 %v4161
    %5284 = vmatprep.subr.mxu0 0.0
    %5285 = vmatpush1.msra.mxu0 %v4162
    %5286 = vmatprep.subr.mxu0 0.0
    %5287 = vmatpush1.msra.mxu0 %v4163
    %5288 = vmatprep.subr.mxu0 0.0
    %5289 = vmatpush1.msra.mxu0 %v4164
    %5290 = vmatprep.subr.mxu0 0.0
    %5291 = vmatpush1.msra.mxu0 %v4165
    %5292 = vmatprep.subr.mxu0 0.0
    %5293 = vmatpush1.msra.mxu0 %v4166
    %5294 = vmatprep.subr.mxu0 0.0
    %5295 = vmatpush1.msra.mxu0 %v4167
    %5296 = vmatprep.subr.mxu0 0.0
    %5297 = vmatpush1.msra.mxu0 %v4168
    %5298 = vmatprep.subr.mxu0 0.0
    %5299 = vmatpush1.msra.mxu0 %v4169
    %5300 = vmatprep.subr.mxu0 0.0
    %5301 = vmatpush1.msra.mxu0 %v4170
    %5302 = vmatprep.subr.mxu0 0.0
    %5303 = vmatpush1.msra.mxu0 %v4171
    %5304 = vmatprep.subr.mxu0 0.0
    %5305 = vmatpush1.msra.mxu0 %v4172
    %5306 = vmatprep.subr.mxu0 0.0
    %5307 = vmatpush1.msra.mxu0 %v4173
    %5308 = vmatprep.subr.mxu0 0.0
    %5309 = vmatpush1.msra.mxu0 %v4174
    %5310 = vmatprep.subr.mxu0 0.0
    %5311 = vmatpush1.msra.mxu0 %v4175
    %5312 = vmatprep.subr.mxu0 0.0
    %5313 = vmatpush1.msra.mxu0 %v4176
    %5314 = vmatprep.subr.mxu0 0.0
    %5315 = vmatpush1.msra.mxu0 %v4177
    %5316 = vmatprep.subr.mxu0 0.0
    %5317 = vmatpush1.msra.mxu0 %v4178
    %5318 = vmatprep.subr.mxu0 0.0
    %5319 = vmatpush1.msra.mxu0 %v4179
    %5320 = vmatprep.subr.mxu0 0.0
    %5321 = vmatpush1.msra.mxu0 %v4180
    %5322 = vmatprep.subr.mxu0 0.0
    %5323 = vmatpush1.msra.mxu0 %v4181
    %5324 = vmatprep.subr.mxu0 0.0
    %5325 = vmatpush1.msra.mxu0 %v4182
    %5326 = vmatprep.subr.mxu0 0.0
    %5327 = vmatpush1.msra.mxu0 %v4183
    %5328 = vmatprep.subr.mxu0 0.0
    %5329 = vmatpush1.msra.mxu0 %v4184
    %5330 = vmatprep.subr.mxu0 0.0
    %5331 = vmatpush1.msra.mxu0 %v4185
    %5332 = vmatprep.subr.mxu0 0.0
    %5333 = vmatpush1.msra.mxu0 %v4186
    %5334 = vmatprep.mubr.f32.mxu0 %v3684
    %5335 = vmatmul.mubr.f32.gmra.mrb[0].mxu0 %v3681
    %v5336 = vpop.f32.mrb[0].mxu0
    %v5337 = vadd.f32 %v5267, %v5336
    %v5338 = vpop.f32.mrb[0].mxu0
    %5339 = vdwg.mxu0
    %5340 = vmatprep.subr.mxu0 0.0
    %5341 = vmatpush1.msra.mxu0 %v4187
    %5342 = vmatprep.subr.mxu0 0.0
    %5343 = vmatpush1.msra.mxu0 %v4188
    %5344 = vmatprep.subr.mxu0 0.0
    %5345 = vmatpush1.msra.mxu0 %v4189
    %5346 = vmatprep.subr.mxu0 0.0
    %5347 = vmatpush1.msra.mxu0 %v4190
    %5348 = vmatprep.subr.mxu0 0.0
    %5349 = vmatpush1.msra.mxu0 %v4191
    %5350 = vmatprep.subr.mxu0 0.0
    %5351 = vmatpush1.msra.mxu0 %v4192
    %5352 = vmatprep.subr.mxu0 0.0
    %5353 = vmatpush1.msra.mxu0 %v4193
    %5354 = vmatprep.subr.mxu0 0.0
    %5355 = vmatpush1.msra.mxu0 %v4194
    %5356 = vmatprep.subr.mxu0 0.0
    %5357 = vmatpush1.msra.mxu0 %v4195
    %5358 = vmatprep.subr.mxu0 0.0
    %5359 = vmatpush1.msra.mxu0 %v4196
    %5360 = vmatprep.subr.mxu0 0.0
    %5361 = vmatpush1.msra.mxu0 %v4197
    %5362 = vmatprep.subr.mxu0 0.0
    %5363 = vmatpush1.msra.mxu0 %v4198
    %5364 = vmatprep.subr.mxu0 0.0
    %5365 = vmatpush1.msra.mxu0 %v4199
    %5366 = vmatprep.subr.mxu0 0.0
    %5367 = vmatpush1.msra.mxu0 %v4200
    %5368 = vmatprep.subr.mxu0 0.0
    %5369 = vmatpush1.msra.mxu0 %v4201
    %5370 = vmatprep.subr.mxu0 0.0
    %5371 = vmatpush1.msra.mxu0 %v4202
    %5372 = vmatprep.subr.mxu0 0.0
    %5373 = vmatpush1.msra.mxu0 %v4203
    %5374 = vmatprep.subr.mxu0 0.0
    %5375 = vmatpush1.msra.mxu0 %v4204
    %5376 = vmatprep.subr.mxu0 0.0
    %5377 = vmatpush1.msra.mxu0 %v4205
    %5378 = vmatprep.subr.mxu0 0.0
    %5379 = vmatpush1.msra.mxu0 %v4206
    %5380 = vmatprep.subr.mxu0 0.0
    %5381 = vmatpush1.msra.mxu0 %v4207
    %5382 = vmatprep.subr.mxu0 0.0
    %5383 = vmatpush1.msra.mxu0 %v4208
    %5384 = vmatprep.subr.mxu0 0.0
    %5385 = vmatpush1.msra.mxu0 %v4209
    %5386 = vmatprep.subr.mxu0 0.0
    %5387 = vmatpush1.msra.mxu0 %v4210
    %5388 = vmatprep.subr.mxu0 0.0
    %5389 = vmatpush1.msra.mxu0 %v4211
    %5390 = vmatprep.subr.mxu0 0.0
    %5391 = vmatpush1.msra.mxu0 %v4212
    %5392 = vmatprep.subr.mxu0 0.0
    %5393 = vmatpush1.msra.mxu0 %v4213
    %5394 = vmatprep.subr.mxu0 0.0
    %5395 = vmatpush1.msra.mxu0 %v4214
    %5396 = vmatprep.subr.mxu0 0.0
    %5397 = vmatpush1.msra.mxu0 %v4215
    %5398 = vmatprep.subr.mxu0 0.0
    %5399 = vmatpush1.msra.mxu0 %v4216
    %5400 = vmatprep.subr.mxu0 0.0
    %5401 = vmatpush1.msra.mxu0 %v4217
    %5402 = vmatprep.subr.mxu0 0.0
    %5403 = vmatpush1.msra.mxu0 %v4218
    %5404 = vmatprep.mubr.f32.mxu0 %v3692
    %5405 = vmatmul.mubr.f32.gmra.mrb[0].mxu0 %v3688
    %v5406 = vpop.f32.mrb[0].mxu0
    %v5407 = vadd.f32 %v5337, %v5406
    %v5408 = vpop.f32.mrb[0].mxu0
    %5409 = vdwg.mxu0
    %5410 = vmatprep.subr.mxu0 0.0
    %5411 = vmatpush1.msra.mxu0 %v4219
    %5412 = vmatprep.subr.mxu0 0.0
    %5413 = vmatpush1.msra.mxu0 %v4220
    %5414 = vmatprep.subr.mxu0 0.0
    %5415 = vmatpush1.msra.mxu0 %v4221
    %5416 = vmatprep.subr.mxu0 0.0
    %5417 = vmatpush1.msra.mxu0 %v4222
    %5418 = vmatprep.subr.mxu0 0.0
    %5419 = vmatpush1.msra.mxu0 %v4223
    %5420 = vmatprep.subr.mxu0 0.0
    %5421 = vmatpush1.msra.mxu0 %v4224
    %5422 = vmatprep.subr.mxu0 0.0
    %5423 = vmatpush1.msra.mxu0 %v4225
    %5424 = vmatprep.subr.mxu0 0.0
    %5425 = vmatpush1.msra.mxu0 %v4226
    %5426 = vmatprep.subr.mxu0 0.0
    %5427 = vmatpush1.msra.mxu0 %v4227
    %5428 = vmatprep.subr.mxu0 0.0
    %5429 = vmatpush1.msra.mxu0 %v4228
    %5430 = vmatprep.subr.mxu0 0.0
    %5431 = vmatpush1.msra.mxu0 %v4229
    %5432 = vmatprep.subr.mxu0 0.0
    %5433 = vmatpush1.msra.mxu0 %v4230
    %5434 = vmatprep.subr.mxu0 0.0
    %5435 = vmatpush1.msra.mxu0 %v4231
    %5436 = vmatprep.subr.mxu0 0.0
    %5437 = vmatpush1.msra.mxu0 %v4232
    %5438 = vmatprep.subr.mxu0 0.0
    %5439 = vmatpush1.msra.mxu0 %v4233
    %5440 = vmatprep.subr.mxu0 0.0
    %5441 = vmatpush1.msra.mxu0 %v4234
    %5442 = vmatprep.subr.mxu0 0.0
    %5443 = vmatpush1.msra.mxu0 %v4235
    %5444 = vmatprep.subr.mxu0 0.0
    %5445 = vmatpush1.msra.mxu0 %v4236
    %5446 = vmatprep.subr.mxu0 0.0
    %5447 = vmatpush1.msra.mxu0 %v4237
    %5448 = vmatprep.subr.mxu0 0.0
    %5449 = vmatpush1.msra.mxu0 %v4238
    %5450 = vmatprep.subr.mxu0 0.0
    %5451 = vmatpush1.msra.mxu0 %v4239
    %5452 = vmatprep.subr.mxu0 0.0
    %5453 = vmatpush1.msra.mxu0 %v4240
    %5454 = vmatprep.subr.mxu0 0.0
    %5455 = vmatpush1.msra.mxu0 %v4241
    %5456 = vmatprep.subr.mxu0 0.0
    %5457 = vmatpush1.msra.mxu0 %v4242
    %5458 = vmatprep.subr.mxu0 0.0
    %5459 = vmatpush1.msra.mxu0 %v4243
    %5460 = vmatprep.subr.mxu0 0.0
    %5461 = vmatpush1.msra.mxu0 %v4244
    %5462 = vmatprep.subr.mxu0 0.0
    %5463 = vmatpush1.msra.mxu0 %v4245
    %5464 = vmatprep.subr.mxu0 0.0
    %5465 = vmatpush1.msra.mxu0 %v4246
    %5466 = vmatprep.subr.mxu0 0.0
    %5467 = vmatpush1.msra.mxu0 %v4247
    %5468 = vmatprep.subr.mxu0 0.0
    %5469 = vmatpush1.msra.mxu0 %v4248
    %5470 = vmatprep.subr.mxu0 0.0
    %5471 = vmatpush1.msra.mxu0 %v4249
    %5472 = vmatprep.subr.mxu0 0.0
    %5473 = vmatpush1.msra.mxu0 %v4250
    %5474 = vmatprep.mubr.f32.mxu0 %v3699
    %5475 = vmatmul.mubr.f32.gmra.mrb[0].mxu0 %v3695
    %v5476 = vpop.f32.mrb[0].mxu0
    %v5477 = vadd.f32 %v5407, %v5476
    %v5478 = vpop.f32.mrb[0].mxu0
    %5479 = vdwg.mxu0
    %5480 = vmatprep.subr.mxu0 0.0
    %5481 = vmatpush1.msra.mxu0 %v4251
    %5482 = vmatprep.subr.mxu0 0.0
    %5483 = vmatpush1.msra.mxu0 %v4252
    %5484 = vmatprep.subr.mxu0 0.0
    %5485 = vmatpush1.msra.mxu0 %v4253
    %5486 = vmatprep.subr.mxu0 0.0
    %5487 = vmatpush1.msra.mxu0 %v4254
    %5488 = vmatprep.subr.mxu0 0.0
    %5489 = vmatpush1.msra.mxu0 %v4255
    %5490 = vmatprep.subr.mxu0 0.0
    %5491 = vmatpush1.msra.mxu0 %v4256
    %5492 = vmatprep.subr.mxu0 0.0
    %5493 = vmatpush1.msra.mxu0 %v4257
    %5494 = vmatprep.subr.mxu0 0.0
    %5495 = vmatpush1.msra.mxu0 %v4258
    %5496 = vmatprep.subr.mxu0 0.0
    %5497 = vmatpush1.msra.mxu0 %v4259
    %5498 = vmatprep.subr.mxu0 0.0
    %5499 = vmatpush1.msra.mxu0 %v4260
    %5500 = vmatprep.subr.mxu0 0.0
    %5501 = vmatpush1.msra.mxu0 %v4261
    %5502 = vmatprep.subr.mxu0 0.0
    %5503 = vmatpush1.msra.mxu0 %v4262
    %5504 = vmatprep.subr.mxu0 0.0
    %5505 = vmatpush1.msra.mxu0 %v4263
    %5506 = vmatprep.subr.mxu0 0.0
    %5507 = vmatpush1.msra.mxu0 %v4264
    %5508 = vmatprep.subr.mxu0 0.0
    %5509 = vmatpush1.msra.mxu0 %v4265
    %5510 = vmatprep.subr.mxu0 0.0
    %5511 = vmatpush1.msra.mxu0 %v4266
    %5512 = vmatprep.subr.mxu0 0.0
    %5513 = vmatpush1.msra.mxu0 %v4267
    %5514 = vmatprep.subr.mxu0 0.0
    %5515 = vmatpush1.msra.mxu0 %v4268
    %5516 = vmatprep.subr.mxu0 0.0
    %5517 = vmatpush1.msra.mxu0 %v4269
    %5518 = vmatprep.subr.mxu0 0.0
    %5519 = vmatpush1.msra.mxu0 %v4270
    %5520 = vmatprep.subr.mxu0 0.0
    %5521 = vmatpush1.msra.mxu0 %v4271
    %5522 = vmatprep.subr.mxu0 0.0
    %5523 = vmatpush1.msra.mxu0 %v4272
    %5524 = vmatprep.subr.mxu0 0.0
    %5525 = vmatpush1.msra.mxu0 %v4273
    %5526 = vmatprep.subr.mxu0 0.0
    %5527 = vmatpush1.msra.mxu0 %v4274
    %5528 = vmatprep.subr.mxu0 0.0
    %5529 = vmatpush1.msra.mxu0 %v4275
    %5530 = vmatprep.subr.mxu0 0.0
    %5531 = vmatpush1.msra.mxu0 %v4276
    %5532 = vmatprep.subr.mxu0 0.0
    %5533 = vmatpush1.msra.mxu0 %v4277
    %5534 = vmatprep.subr.mxu0 0.0
    %5535 = vmatpush1.msra.mxu0 %v4278
    %5536 = vmatprep.subr.mxu0 0.0
    %5537 = vmatpush1.msra.mxu0 %v4279
    %5538 = vmatprep.subr.mxu0 0.0
    %5539 = vmatpush1.msra.mxu0 %v4280
    %5540 = vmatprep.subr.mxu0 0.0
    %5541 = vmatpush1.msra.mxu0 %v4281
    %5542 = vmatprep.subr.mxu0 0.0
    %5543 = vmatpush1.msra.mxu0 %v4282
    %5544 = vmatprep.mubr.f32.mxu0 %v3706
    %5545 = vmatmul.mubr.f32.gmra.mrb[0].mxu0 %v3703
    %v5546 = vpop.f32.mrb[0].mxu0
    %v5547 = vadd.f32 %v5477, %v5546
    %v5548 = vpop.f32.mrb[0].mxu0
    %5549 = vdwg.mxu0
    %5550 = vst [vmem:[#allocation16] sm:$0x3] %v5547
    // Predicated region
    $region70: #{tpu_custom_call.1} parent=1 // pred_check
      _
    $region71: #{tpu_custom_call.1} parent=1 // pred_check_branch
      %5552 = sbr.rel (0) target = $region73
    $region72: #{tpu_custom_call.1} parent=1 // pred_region
      %s5554 = ssub.s32 32, 32
      %5555 = vsyncadd [#allocation4], %s5554
      %s5557 = sshll.u32 [#allocation16], 4
      %s5558 = int_to_ptr.vmem [resolvable:$true] %s5557
      %5560 = dma.vmem_to_hbm [thread:$0]  %s5558, 32, %s9, [#allocation4]
    $region73: #{tpu_custom_call.1} parent=1 // pred_fallthru
      _
    // Predicated region
    $region74: #{tpu_custom_call.1} parent=1 // pred_check
      _
    $region75: #{tpu_custom_call.1} parent=1 // pred_check_branch
      %5562 = sbr.rel (0) target = $region77
    $region76: #{tpu_custom_call.1} parent=1 // pred_region
      %5563 = dma.done [#allocation4], 32
    $region77: #{tpu_custom_call.1} parent=1 // pred_fallthru
      _
    %5564 = vsyncpa [#allocation3], 1
    %5565 = vsyncpa [#allocation6], 1
    %5566 = vsyncpa [#allocation9], 1
    %5567 = vsyncpa [#allocation12], 1
    %5568 = vsyncpa [#allocation15], 1
    %5569 = vsyncpa [#allocation4], 1

</llo_original>
